<compile_context>
chip_gen: v5e
topology: v5e:2x2
jax: 0.10.0
libtpu: 0.0.40
codegen_flags: <defaults>
</compile_context>

<pallas_src>
import jax
import jax.numpy as jnp
from jax import lax
from jax.experimental import pallas as pl
from jax.experimental.pallas import tpu as pltpu

# ----------------------------- hyper-params ---------------------------------
B = 2            # batch
C = 4            # in_channels
IMG = 16         # img_size
P = 4            # patch_size
D = 32           # num_hiddens (== q_size == k_size == v_size == inputs == normalized_shape)
HEADS = 4
DEPTH = 2
FFN_HIDDEN = 64  # hiddens (expansion=2)
NUM_CLASSES = 10
# TODO(synk): `expansion` arg is redundant with `hiddens`; dropout is eval-mode identity.

CPP = C * P * P                     # 64, flattened patch length
N_PATCH = (IMG // P) * (IMG // P)   # 16
SEQ = N_PATCH + 1                   # +1 CLS token
DH = D // HEADS                     # 8
LN_EPS = 1e-5


# ------------------------------ fused kernel ---------------------------------
def _make_vit_kernel(tb):
    """Build the fused kernel for a block of `tb` batch elements per grid step."""

    def kernel(xp_ref, pw_ref, add_ref,
               wqkv_ref, bqkv_ref, wo_ref, bo_ref, ln1_ref,
               w1_ref, b1_ref, w2_ref, b2_ref, ln2_ref,
               hln_ref, hw_ref, hb_ref, out_ref, obuf_ref):
        f32 = jnp.float32
        bf16 = jnp.bfloat16

        def ln(v, gb):  # gb: (2, D) = [gamma; beta]; LayerNorm over last dim, f32 VPU math
            mu = jnp.mean(v, axis=-1, keepdims=True)
            var = jnp.mean((v - mu) ** 2, axis=-1, keepdims=True)
            return (v - mu) * lax.rsqrt(var + LN_EPS) * gb[0:1, :] + gb[1:2, :]

        # Patch embedding for the whole (tb*SEQ) slab in one matmul.
        # add_ref already holds (cls + pos[0]) on CLS rows and
        # (patch_bias + pos[1:]) on patch rows, tiled per batch element;
        # the CLS rows of xp are zero, so one matmul + add gives all tokens.
        x = jnp.dot(xp_ref[0], pw_ref[...],
                    preferred_element_type=f32) + add_ref[...]       # (tb*SEQ, D) f32

        scale = 1.0 / jnp.sqrt(jnp.float32(DH))
        for d in range(DEPTH):
            xb = x.astype(bf16)
            # ---- fused QKV projection over the full slab ----
            qkv = jnp.dot(xb, wqkv_ref[d],
                          preferred_element_type=f32) + bqkv_ref[d]  # (tb*SEQ, 3D)
            # ---- multi-head attention (per batch element; scores never mix rows) ----
            for b in range(tb):
                r0 = b * SEQ
                q_b = qkv[r0:r0 + SEQ, 0:D].astype(bf16)
                k_b = qkv[r0:r0 + SEQ, D:2 * D]
                v_b = qkv[r0:r0 + SEQ, 2 * D:3 * D].astype(bf16)
                kt = k_b.T.astype(bf16)             # ONE transpose per (layer, batch)
                for h in range(HEADS):
                    qh = q_b[:, h * DH:(h + 1) * DH]            # (SEQ, DH)
                    kth = kt[h * DH:(h + 1) * DH, :]            # (DH, SEQ) aligned sublane slice
                    s = jnp.dot(qh, kth, preferred_element_type=f32) * scale
                    s = s - jnp.max(s, axis=-1, keepdims=True)
                    p = jnp.exp(s)
                    p = p * pl.reciprocal(jnp.sum(p, axis=-1, keepdims=True),
                                          approx=True)
                    oh = jnp.dot(p.astype(bf16), v_b[:, h * DH:(h + 1) * DH],
                                 preferred_element_type=f32)    # (SEQ, DH) f32
                    # head merge: write into the DH-wide lane window of the scratch
                    obuf_ref[r0:r0 + SEQ, h * DH:(h + 1) * DH] = oh
            # single O-projection over the assembled (tb*SEQ, D) head outputs
            attn = jnp.dot(obuf_ref[...].astype(bf16), wo_ref[d],
                           preferred_element_type=f32) + bo_ref[d]
            # ---- AddNorm 1 ----
            y = ln(x + attn, ln1_ref[d])
            # ---- FFN (Linear -> ReLU -> Linear) ----
            hmid = jnp.maximum(
                jnp.dot(y.astype(bf16), w1_ref[d],
                        preferred_element_type=f32) + b1_ref[d], 0.0)
            ffn = jnp.dot(hmid.astype(bf16), w2_ref[d],
                          preferred_element_type=f32) + b2_ref[d]
            # ---- AddNorm 2 ----
            x = ln(y + ffn, ln2_ref[d])

        # ---- classification head: per-batch mean pool -> LayerNorm -> Linear ----
        means = [jnp.mean(x[b * SEQ:(b + 1) * SEQ, :], axis=0, keepdims=True)
                 for b in range(tb)]
        mvec = jnp.concatenate(means, axis=0)                       # (tb, D)
        mvec = ln(mvec, hln_ref[...])
        logits = jnp.dot(mvec.astype(bf16), hw_ref[...],
                         preferred_element_type=f32) + hb_ref[...]  # (tb, NUM_CLASSES)
        out_ref[0] = logits.astype(out_ref.dtype)                   # one store per block

    return kernel


def _const_spec(shape):
    """BlockSpec for a weight identical at every grid step (stays VMEM-resident)."""
    zero = (0,) * len(shape)
    return pl.BlockSpec(shape, lambda g, _z=zero: _z)


def _pick_batch_tile(batch):
    """Batch elements per grid step: full fold on v5e/v6e (1 TC), 2-way split on v7x."""
    try:
        kind = jax.devices()[0].device_kind.lower()
    except Exception:
        kind = ""
    if "v7" in kind and batch % 2 == 0:
        return max(batch // 2, 1)   # feed both TensorCores via a "parallel" grid axis
    return batch


# ------------------------------ parameter init -------------------------------
def init_params(key):
    ks = iter(jax.random.split(key, 64))
    w = lambda shape, s=0.02: jax.random.normal(next(ks), shape, jnp.float32) * s
    zeros = lambda shape: jnp.zeros(shape, jnp.float32)
    ones = lambda shape: jnp.ones(shape, jnp.float32)

    params = {
        # Conv2d(C, D, k=P, stride=P) expressed as (C*P*P, D) matmul weight.
        "patch_w": w((CPP, D)),
        "patch_b": zeros((D,)),
        "cls": w((1, 1, D)),
        "pos": w((SEQ, D)),
        "head_ln_g": ones((D,)),
        "head_ln_b": zeros((D,)),
        "head_w": w((D, NUM_CLASSES)),
        "head_b": zeros((NUM_CLASSES,)),
        "blocks": [],
    }
    for _ in range(DEPTH):
        params["blocks"].append({
            "wq": w((D, D)), "bq": zeros((D,)),
            "wk": w((D, D)), "bk": zeros((D,)),
            "wv": w((D, D)), "bv": zeros((D,)),
            "wo": w((D, D)), "bo": zeros((D,)),
            "ln1_g": ones((D,)), "ln1_b": zeros((D,)),
            "w1": w((D, FFN_HIDDEN)), "b1": zeros((FFN_HIDDEN,)),
            "w2": w((FFN_HIDDEN, D)), "b2": zeros((D,)),
            "ln2_g": ones((D,)), "ln2_b": zeros((D,)),
        })
    return params


def pack_params(p):
    """Pack per-block weights into DEPTH-stacked arrays; MXU weights -> bf16."""
    blocks = p["blocks"]
    stack = lambda f: jnp.stack([f(b) for b in blocks], axis=0)
    bf16 = jnp.bfloat16
    return {
        "patch_w": p["patch_w"].astype(bf16),
        # row 0 = cls + pos[0]; rows 1.. = patch_bias + pos[1:]   (kept f32)
        "add_full": jnp.concatenate(
            [p["cls"].reshape(1, D) + p["pos"][0:1],
             p["patch_b"][None, :] + p["pos"][1:]], axis=0),          # (SEQ, D)
        "wqkv": stack(lambda b: jnp.concatenate([b["wq"], b["wk"], b["wv"]],
                                                axis=1)).astype(bf16),
        "bqkv": stack(lambda b: jnp.concatenate([b["bq"], b["bk"], b["bv"]])[None, :]),
        "wo":   stack(lambda b: b["wo"]).astype(bf16),
        "bo":   stack(lambda b: b["bo"][None, :]),
        "ln1":  stack(lambda b: jnp.stack([b["ln1_g"], b["ln1_b"]], axis=0)),
        "w1":   stack(lambda b: b["w1"]).astype(bf16),
        "b1":   stack(lambda b: b["b1"][None, :]),
        "w2":   stack(lambda b: b["w2"]).astype(bf16),
        "b2":   stack(lambda b: b["b2"][None, :]),
        "ln2":  stack(lambda b: jnp.stack([b["ln2_g"], b["ln2_b"]], axis=0)),
        "hln":  jnp.stack([p["head_ln_g"], p["head_ln_b"]], axis=0),
        "hw":   p["head_w"].astype(bf16),
        "hb":   p["head_b"][None, :],
    }


# ------------------------------ forward pass ---------------------------------
@jax.jit
def vit_forward(x, pp):
    bb = x.shape[0]
    tb = _pick_batch_tile(bb)          # batch elements per grid step (Python int)
    g = bb // tb
    m_rows = tb * SEQ

    # NCHW -> (B, N_PATCH, C*P*P) patch vectors (channel-major, matching the
    # PyTorch Conv2d weight flatten order).  Pure layout glue; all compute is
    # inside the single fused Pallas kernel below.
    xp = x.reshape(bb, C, IMG // P, P, IMG // P, P)
    xp = xp.transpose(0, 2, 4, 1, 3, 5).reshape(bb, N_PATCH, CPP)
    # Prepend a zero row per batch element so the CLS token falls out of the
    # same matmul, then fold `tb` batch elements per grid step and cast the
    # MXU-bound activations to bf16 (halves the input DMA too).
    xp_aug = jnp.concatenate(
        [jnp.zeros((bb, 1, CPP), xp.dtype), xp], axis=1)              # (B, SEQ, CPP)
    xp_aug = xp_aug.reshape(g, m_rows, CPP).astype(jnp.bfloat16)
    add_tiled = jnp.tile(pp["add_full"], (tb, 1))                     # (tb*SEQ, D) f32

    out = pl.pallas_call(
        _make_vit_kernel(tb),
        out_shape=jax.ShapeDtypeStruct((g, tb, NUM_CLASSES), jnp.float32),
        grid=(g,),
        in_specs=[
            pl.BlockSpec((1, m_rows, CPP), lambda i: (i, 0, 0)),
            _const_spec((CPP, D)),
            _const_spec((m_rows, D)),
            _const_spec((DEPTH, D, 3 * D)),
            _const_spec((DEPTH, 1, 3 * D)),
            _const_spec((DEPTH, D, D)),
            _const_spec((DEPTH, 1, D)),
            _const_spec((DEPTH, 2, D)),
            _const_spec((DEPTH, D, FFN_HIDDEN)),
            _const_spec((DEPTH, 1, FFN_HIDDEN)),
            _const_spec((DEPTH, FFN_HIDDEN, D)),
            _const_spec((DEPTH, 1, D)),
            _const_spec((DEPTH, 2, D)),
            _const_spec((2, D)),
            _const_spec((D, NUM_CLASSES)),
            _const_spec((1, NUM_CLASSES)),
        ],
        out_specs=pl.BlockSpec((1, tb, NUM_CLASSES), lambda i: (i, 0, 0)),
        scratch_shapes=[pltpu.VMEM((m_rows, D), jnp.float32)],   # head-merge buffer
        compiler_params=pltpu.CompilerParams(
            dimension_semantics=("parallel",)),
    )(xp_aug, pp["patch_w"], add_tiled,
      pp["wqkv"], pp["bqkv"], pp["wo"], pp["bo"], pp["ln1"],
      pp["w1"], pp["b1"], pp["w2"], pp["b2"], pp["ln2"],
      pp["hln"], pp["hw"], pp["hb"])
    return out.reshape(bb, NUM_CLASSES)


# ----------------------------------- main ------------------------------------
if __name__ == "__main__":
    key = jax.random.PRNGKey(0)
    k_x, k_p = jax.random.split(key)
    x = jax.random.normal(k_x, (B, C, IMG, IMG), jnp.float32)   # NCHW like PyTorch
    params = pack_params(init_params(k_p))

    out = vit_forward(x, params)
    out = jax.block_until_ready(out)
    assert out.shape == (B, NUM_CLASSES), out.shape
    assert jnp.all(jnp.isfinite(out))
    print("KERNEL_OK")
</pallas_src>

<mosaic_0001>
module attributes {stable_mosaic.version = 11 : i64} {
  func.func @kernel(%arg0: i32, %arg1: memref<1x34x64xbf16, #tpu.memory_space<vmem>>, %arg2: memref<64x32xbf16, #tpu.memory_space<vmem>>, %arg3: memref<34x32xf32, #tpu.memory_space<vmem>>, %arg4: memref<2x32x96xbf16, #tpu.memory_space<vmem>>, %arg5: memref<2x1x96xf32, #tpu.memory_space<vmem>>, %arg6: memref<2x32x32xbf16, #tpu.memory_space<vmem>>, %arg7: memref<2x1x32xf32, #tpu.memory_space<vmem>>, %arg8: memref<2x2x32xf32, #tpu.memory_space<vmem>>, %arg9: memref<2x32x64xbf16, #tpu.memory_space<vmem>>, %arg10: memref<2x1x64xf32, #tpu.memory_space<vmem>>, %arg11: memref<2x64x32xbf16, #tpu.memory_space<vmem>>, %arg12: memref<2x1x32xf32, #tpu.memory_space<vmem>>, %arg13: memref<2x2x32xf32, #tpu.memory_space<vmem>>, %arg14: memref<2x32xf32, #tpu.memory_space<vmem>>, %arg15: memref<32x10xbf16, #tpu.memory_space<vmem>>, %arg16: memref<1x10xf32, #tpu.memory_space<vmem>>, %arg17: memref<1x2x10xf32, #tpu.memory_space<vmem>>, %arg18: memref<34x32xf32, #tpu.memory_space<vmem>>) attributes {dimension_semantics = [#tpu.dimension_semantics<parallel>], iteration_bounds = array<i64: 1>, scalar_prefetch = 0 : i64, scratch_operands = 1 : i64, tpu.core_type = #tpu.core_type<tc>, window_params = [{transform_indices = @transform_0, window_bounds = array<i64: 1, 34, 64>}, {pipeline_mode = #tpu.pipeline_mode<synchronous>, transform_indices = @transform_1, window_bounds = array<i64: 64, 32>}, {pipeline_mode = #tpu.pipeline_mode<synchronous>, transform_indices = @transform_2, window_bounds = array<i64: 34, 32>}, {pipeline_mode = #tpu.pipeline_mode<synchronous>, transform_indices = @transform_3, window_bounds = array<i64: 2, 32, 96>}, {pipeline_mode = #tpu.pipeline_mode<synchronous>, transform_indices = @transform_4, window_bounds = array<i64: 2, 1, 96>}, {pipeline_mode = #tpu.pipeline_mode<synchronous>, transform_indices = @transform_5, window_bounds = array<i64: 2, 32, 32>}, {pipeline_mode = #tpu.pipeline_mode<synchronous>, transform_indices = @transform_6, window_bounds = array<i64: 2, 1, 32>}, {pipeline_mode = #tpu.pipeline_mode<synchronous>, transform_indices = @transform_7, window_bounds = array<i64: 2, 2, 32>}, {pipeline_mode = #tpu.pipeline_mode<synchronous>, transform_indices = @transform_8, window_bounds = array<i64: 2, 32, 64>}, {pipeline_mode = #tpu.pipeline_mode<synchronous>, transform_indices = @transform_9, window_bounds = array<i64: 2, 1, 64>}, {pipeline_mode = #tpu.pipeline_mode<synchronous>, transform_indices = @transform_10, window_bounds = array<i64: 2, 64, 32>}, {pipeline_mode = #tpu.pipeline_mode<synchronous>, transform_indices = @transform_11, window_bounds = array<i64: 2, 1, 32>}, {pipeline_mode = #tpu.pipeline_mode<synchronous>, transform_indices = @transform_12, window_bounds = array<i64: 2, 2, 32>}, {pipeline_mode = #tpu.pipeline_mode<synchronous>, transform_indices = @transform_13, window_bounds = array<i64: 2, 32>}, {pipeline_mode = #tpu.pipeline_mode<synchronous>, transform_indices = @transform_14, window_bounds = array<i64: 32, 10>}, {pipeline_mode = #tpu.pipeline_mode<synchronous>, transform_indices = @transform_15, window_bounds = array<i64: 1, 10>}, {transform_indices = @transform_16, window_bounds = array<i64: 1, 2, 10>}]} {
    %c0 = arith.constant 0 : index
    %c0_0 = arith.constant 0 : index
    %c0_1 = arith.constant 0 : index
    %0 = vector.load %arg1[%c0, %c0_0, %c0_1] : memref<1x34x64xbf16, #tpu.memory_space<vmem>>, vector<1x34x64xbf16>
    %1 = vector.shape_cast %0 : vector<1x34x64xbf16> to vector<34x64xbf16>
    %c0_2 = arith.constant 0 : index
    %c0_3 = arith.constant 0 : index
    %2 = vector.load %arg2[%c0_2, %c0_3] : memref<64x32xbf16, #tpu.memory_space<vmem>>, vector<64x32xbf16>
    %cst = arith.constant dense<0.000000e+00> : vector<34x32xf32>
    %3 = tpu.matmul %1, %2, %cst {dimension_numbers = #tpu.dot_dimension_numbers<[1], [0], [0], [1], [0, 0, 1, 1], [], []>} : vector<34x64xbf16>, vector<64x32xbf16>, vector<34x32xf32> -> vector<34x32xf32>
    %c0_4 = arith.constant 0 : index
    %c0_5 = arith.constant 0 : index
    %4 = vector.load %arg3[%c0_4, %c0_5] : memref<34x32xf32, #tpu.memory_space<vmem>>, vector<34x32xf32>
    %5 = arith.addf %3, %4 : vector<34x32xf32>
    %cst_6 = arith.constant 8.000000e+00 : f32
    %6 = math.sqrt %cst_6 : f32
    %cst_7 = arith.constant 1.000000e+00 : f32
    %7 = arith.divf %cst_7, %6 : f32
    %8 = arith.truncf %5 : vector<34x32xf32> to vector<34x32xbf16>
    %c0_8 = arith.constant 0 : index
    %c0_9 = arith.constant 0 : index
    %c0_10 = arith.constant 0 : index
    %9 = vector.load %arg4[%c0_8, %c0_9, %c0_10] : memref<2x32x96xbf16, #tpu.memory_space<vmem>>, vector<1x32x96xbf16>
    %10 = vector.shape_cast %9 : vector<1x32x96xbf16> to vector<32x96xbf16>
    %cst_11 = arith.constant dense<0.000000e+00> : vector<34x96xf32>
    %11 = tpu.matmul %8, %10, %cst_11 {dimension_numbers = #tpu.dot_dimension_numbers<[1], [0], [0], [1], [0, 0, 1, 1], [], []>} : vector<34x32xbf16>, vector<32x96xbf16>, vector<34x96xf32> -> vector<34x96xf32>
    %c0_12 = arith.constant 0 : index
    %c0_13 = arith.constant 0 : index
    %c0_14 = arith.constant 0 : index
    %12 = vector.load %arg5[%c0_12, %c0_13, %c0_14] : memref<2x1x96xf32, #tpu.memory_space<vmem>>, vector<1x1x96xf32>
    %13 = vector.shape_cast %12 : vector<1x1x96xf32> to vector<1x96xf32>
    %14 = vector.broadcast %13 : vector<1x96xf32> to vector<34x96xf32>
    %15 = arith.addf %11, %14 : vector<34x96xf32>
    %16 = vector.extract_strided_slice %15 {offsets = [0, 0], sizes = [17, 32], strides = [1, 1]} : vector<34x96xf32> to vector<17x32xf32>
    %17 = arith.truncf %16 : vector<17x32xf32> to vector<17x32xbf16>
    %18 = vector.extract_strided_slice %15 {offsets = [0, 32], sizes = [17, 32], strides = [1, 1]} : vector<34x96xf32> to vector<17x32xf32>
    %19 = vector.extract_strided_slice %15 {offsets = [0, 64], sizes = [17, 32], strides = [1, 1]} : vector<34x96xf32> to vector<17x32xf32>
    %20 = arith.truncf %19 : vector<17x32xf32> to vector<17x32xbf16>
    %21 = tpu.transpose %18, [1, 0] : vector<17x32xf32> -> vector<32x17xf32>
    %22 = arith.truncf %21 : vector<32x17xf32> to vector<32x17xbf16>
    %23 = vector.extract_strided_slice %17 {offsets = [0, 0], sizes = [17, 8], strides = [1, 1]} : vector<17x32xbf16> to vector<17x8xbf16>
    %24 = vector.extract_strided_slice %22 {offsets = [0, 0], sizes = [8, 17], strides = [1, 1]} : vector<32x17xbf16> to vector<8x17xbf16>
    %cst_15 = arith.constant dense<0.000000e+00> : vector<17x17xf32>
    %25 = tpu.matmul %23, %24, %cst_15 {dimension_numbers = #tpu.dot_dimension_numbers<[1], [0], [0], [1], [0, 0, 1, 1], [], []>} : vector<17x8xbf16>, vector<8x17xbf16>, vector<17x17xf32> -> vector<17x17xf32>
    %26 = vector.broadcast %7 : f32 to vector<17x17xf32>
    %27 = arith.mulf %25, %26 : vector<17x17xf32>
    %cst_16 = arith.constant dense<0xFF800000> : vector<17xf32>
    %28 = vector.multi_reduction <maximumf>, %27, %cst_16 [1] : vector<17x17xf32> to vector<17xf32>
    %29 = vector.shape_cast %28 : vector<17xf32> to vector<17x1xf32>
    %30 = vector.broadcast %29 : vector<17x1xf32> to vector<17x17xf32>
    %31 = arith.subf %27, %30 : vector<17x17xf32>
    %32 = math.exp %31 : vector<17x17xf32>
    %cst_17 = arith.constant dense<0.000000e+00> : vector<17xf32>
    %33 = vector.multi_reduction <add>, %32, %cst_17 [1] : vector<17x17xf32> to vector<17xf32>
    %34 = vector.shape_cast %33 : vector<17xf32> to vector<17x1xf32>
    %35 = tpu.reciprocal %34 {approx = true} : vector<17x1xf32> -> vector<17x1xf32>
    %36 = vector.broadcast %35 : vector<17x1xf32> to vector<17x17xf32>
    %37 = arith.mulf %32, %36 : vector<17x17xf32>
    %38 = arith.truncf %37 : vector<17x17xf32> to vector<17x17xbf16>
    %39 = vector.extract_strided_slice %20 {offsets = [0, 0], sizes = [17, 8], strides = [1, 1]} : vector<17x32xbf16> to vector<17x8xbf16>
    %cst_18 = arith.constant dense<0.000000e+00> : vector<17x8xf32>
    %40 = tpu.matmul %38, %39, %cst_18 {dimension_numbers = #tpu.dot_dimension_numbers<[1], [0], [0], [1], [0, 0, 1, 1], [], []>} : vector<17x17xbf16>, vector<17x8xbf16>, vector<17x8xf32> -> vector<17x8xf32>
    %c0_19 = arith.constant 0 : index
    %c0_20 = arith.constant 0 : index
    %41 = vector.load %arg18[%c0_19, %c0_20] : memref<34x32xf32, #tpu.memory_space<vmem>>, vector<17x8xf32>
    tpu.vector_store %arg18[%c0_19, %c0_20], %40 {strides = array<i32>} : memref<34x32xf32, #tpu.memory_space<vmem>>, vector<17x8xf32>,
    %42 = vector.extract_strided_slice %17 {offsets = [0, 8], sizes = [17, 8], strides = [1, 1]} : vector<17x32xbf16> to vector<17x8xbf16>
    %43 = vector.extract_strided_slice %22 {offsets = [8, 0], sizes = [8, 17], strides = [1, 1]} : vector<32x17xbf16> to vector<8x17xbf16>
    %cst_21 = arith.constant dense<0.000000e+00> : vector<17x17xf32>
    %44 = tpu.matmul %42, %43, %cst_21 {dimension_numbers = #tpu.dot_dimension_numbers<[1], [0], [0], [1], [0, 0, 1, 1], [], []>} : vector<17x8xbf16>, vector<8x17xbf16>, vector<17x17xf32> -> vector<17x17xf32>
    %45 = vector.broadcast %7 : f32 to vector<17x17xf32>
    %46 = arith.mulf %44, %45 : vector<17x17xf32>
    %cst_22 = arith.constant dense<0xFF800000> : vector<17xf32>
    %47 = vector.multi_reduction <maximumf>, %46, %cst_22 [1] : vector<17x17xf32> to vector<17xf32>
    %48 = vector.shape_cast %47 : vector<17xf32> to vector<17x1xf32>
    %49 = vector.broadcast %48 : vector<17x1xf32> to vector<17x17xf32>
    %50 = arith.subf %46, %49 : vector<17x17xf32>
    %51 = math.exp %50 : vector<17x17xf32>
    %cst_23 = arith.constant dense<0.000000e+00> : vector<17xf32>
    %52 = vector.multi_reduction <add>, %51, %cst_23 [1] : vector<17x17xf32> to vector<17xf32>
    %53 = vector.shape_cast %52 : vector<17xf32> to vector<17x1xf32>
    %54 = tpu.reciprocal %53 {approx = true} : vector<17x1xf32> -> vector<17x1xf32>
    %55 = vector.broadcast %54 : vector<17x1xf32> to vector<17x17xf32>
    %56 = arith.mulf %51, %55 : vector<17x17xf32>
    %57 = arith.truncf %56 : vector<17x17xf32> to vector<17x17xbf16>
    %58 = vector.extract_strided_slice %20 {offsets = [0, 8], sizes = [17, 8], strides = [1, 1]} : vector<17x32xbf16> to vector<17x8xbf16>
    %cst_24 = arith.constant dense<0.000000e+00> : vector<17x8xf32>
    %59 = tpu.matmul %57, %58, %cst_24 {dimension_numbers = #tpu.dot_dimension_numbers<[1], [0], [0], [1], [0, 0, 1, 1], [], []>} : vector<17x17xbf16>, vector<17x8xbf16>, vector<17x8xf32> -> vector<17x8xf32>
    %c0_25 = arith.constant 0 : index
    %c8 = arith.constant 8 : index
    %60 = vector.load %arg18[%c0_25, %c8] : memref<34x32xf32, #tpu.memory_space<vmem>>, vector<17x8xf32>
    tpu.vector_store %arg18[%c0_25, %c8], %59 {strides = array<i32>} : memref<34x32xf32, #tpu.memory_space<vmem>>, vector<17x8xf32>,
    %61 = vector.extract_strided_slice %17 {offsets = [0, 16], sizes = [17, 8], strides = [1, 1]} : vector<17x32xbf16> to vector<17x8xbf16>
    %62 = vector.extract_strided_slice %22 {offsets = [16, 0], sizes = [8, 17], strides = [1, 1]} : vector<32x17xbf16> to vector<8x17xbf16>
    %cst_26 = arith.constant dense<0.000000e+00> : vector<17x17xf32>
    %63 = tpu.matmul %61, %62, %cst_26 {dimension_numbers = #tpu.dot_dimension_numbers<[1], [0], [0], [1], [0, 0, 1, 1], [], []>} : vector<17x8xbf16>, vector<8x17xbf16>, vector<17x17xf32> -> vector<17x17xf32>
    %64 = vector.broadcast %7 : f32 to vector<17x17xf32>
    %65 = arith.mulf %63, %64 : vector<17x17xf32>
    %cst_27 = arith.constant dense<0xFF800000> : vector<17xf32>
    %66 = vector.multi_reduction <maximumf>, %65, %cst_27 [1] : vector<17x17xf32> to vector<17xf32>
    %67 = vector.shape_cast %66 : vector<17xf32> to vector<17x1xf32>
    %68 = vector.broadcast %67 : vector<17x1xf32> to vector<17x17xf32>
    %69 = arith.subf %65, %68 : vector<17x17xf32>
    %70 = math.exp %69 : vector<17x17xf32>
    %cst_28 = arith.constant dense<0.000000e+00> : vector<17xf32>
    %71 = vector.multi_reduction <add>, %70, %cst_28 [1] : vector<17x17xf32> to vector<17xf32>
    %72 = vector.shape_cast %71 : vector<17xf32> to vector<17x1xf32>
    %73 = tpu.reciprocal %72 {approx = true} : vector<17x1xf32> -> vector<17x1xf32>
    %74 = vector.broadcast %73 : vector<17x1xf32> to vector<17x17xf32>
    %75 = arith.mulf %70, %74 : vector<17x17xf32>
    %76 = arith.truncf %75 : vector<17x17xf32> to vector<17x17xbf16>
    %77 = vector.extract_strided_slice %20 {offsets = [0, 16], sizes = [17, 8], strides = [1, 1]} : vector<17x32xbf16> to vector<17x8xbf16>
    %cst_29 = arith.constant dense<0.000000e+00> : vector<17x8xf32>
    %78 = tpu.matmul %76, %77, %cst_29 {dimension_numbers = #tpu.dot_dimension_numbers<[1], [0], [0], [1], [0, 0, 1, 1], [], []>} : vector<17x17xbf16>, vector<17x8xbf16>, vector<17x8xf32> -> vector<17x8xf32>
    %c0_30 = arith.constant 0 : index
    %c16 = arith.constant 16 : index
    %79 = vector.load %arg18[%c0_30, %c16] : memref<34x32xf32, #tpu.memory_space<vmem>>, vector<17x8xf32>
    tpu.vector_store %arg18[%c0_30, %c16], %78 {strides = array<i32>} : memref<34x32xf32, #tpu.memory_space<vmem>>, vector<17x8xf32>,
    %80 = vector.extract_strided_slice %17 {offsets = [0, 24], sizes = [17, 8], strides = [1, 1]} : vector<17x32xbf16> to vector<17x8xbf16>
    %81 = vector.extract_strided_slice %22 {offsets = [24, 0], sizes = [8, 17], strides = [1, 1]} : vector<32x17xbf16> to vector<8x17xbf16>
    %cst_31 = arith.constant dense<0.000000e+00> : vector<17x17xf32>
    %82 = tpu.matmul %80, %81, %cst_31 {dimension_numbers = #tpu.dot_dimension_numbers<[1], [0], [0], [1], [0, 0, 1, 1], [], []>} : vector<17x8xbf16>, vector<8x17xbf16>, vector<17x17xf32> -> vector<17x17xf32>
    %83 = vector.broadcast %7 : f32 to vector<17x17xf32>
    %84 = arith.mulf %82, %83 : vector<17x17xf32>
    %cst_32 = arith.constant dense<0xFF800000> : vector<17xf32>
    %85 = vector.multi_reduction <maximumf>, %84, %cst_32 [1] : vector<17x17xf32> to vector<17xf32>
    %86 = vector.shape_cast %85 : vector<17xf32> to vector<17x1xf32>
    %87 = vector.broadcast %86 : vector<17x1xf32> to vector<17x17xf32>
    %88 = arith.subf %84, %87 : vector<17x17xf32>
    %89 = math.exp %88 : vector<17x17xf32>
    %cst_33 = arith.constant dense<0.000000e+00> : vector<17xf32>
    %90 = vector.multi_reduction <add>, %89, %cst_33 [1] : vector<17x17xf32> to vector<17xf32>
    %91 = vector.shape_cast %90 : vector<17xf32> to vector<17x1xf32>
    %92 = tpu.reciprocal %91 {approx = true} : vector<17x1xf32> -> vector<17x1xf32>
    %93 = vector.broadcast %92 : vector<17x1xf32> to vector<17x17xf32>
    %94 = arith.mulf %89, %93 : vector<17x17xf32>
    %95 = arith.truncf %94 : vector<17x17xf32> to vector<17x17xbf16>
    %96 = vector.extract_strided_slice %20 {offsets = [0, 24], sizes = [17, 8], strides = [1, 1]} : vector<17x32xbf16> to vector<17x8xbf16>
    %cst_34 = arith.constant dense<0.000000e+00> : vector<17x8xf32>
    %97 = tpu.matmul %95, %96, %cst_34 {dimension_numbers = #tpu.dot_dimension_numbers<[1], [0], [0], [1], [0, 0, 1, 1], [], []>} : vector<17x17xbf16>, vector<17x8xbf16>, vector<17x8xf32> -> vector<17x8xf32>
    %c0_35 = arith.constant 0 : index
    %c24 = arith.constant 24 : index
    %98 = vector.load %arg18[%c0_35, %c24] : memref<34x32xf32, #tpu.memory_space<vmem>>, vector<17x8xf32>
    tpu.vector_store %arg18[%c0_35, %c24], %97 {strides = array<i32>} : memref<34x32xf32, #tpu.memory_space<vmem>>, vector<17x8xf32>,
    %99 = vector.extract_strided_slice %15 {offsets = [17, 0], sizes = [17, 32], strides = [1, 1]} : vector<34x96xf32> to vector<17x32xf32>
    %100 = arith.truncf %99 : vector<17x32xf32> to vector<17x32xbf16>
    %101 = vector.extract_strided_slice %15 {offsets = [17, 32], sizes = [17, 32], strides = [1, 1]} : vector<34x96xf32> to vector<17x32xf32>
    %102 = vector.extract_strided_slice %15 {offsets = [17, 64], sizes = [17, 32], strides = [1, 1]} : vector<34x96xf32> to vector<17x32xf32>
    %103 = arith.truncf %102 : vector<17x32xf32> to vector<17x32xbf16>
    %104 = tpu.transpose %101, [1, 0] : vector<17x32xf32> -> vector<32x17xf32>
    %105 = arith.truncf %104 : vector<32x17xf32> to vector<32x17xbf16>
    %106 = vector.extract_strided_slice %100 {offsets = [0, 0], sizes = [17, 8], strides = [1, 1]} : vector<17x32xbf16> to vector<17x8xbf16>
    %107 = vector.extract_strided_slice %105 {offsets = [0, 0], sizes = [8, 17], strides = [1, 1]} : vector<32x17xbf16> to vector<8x17xbf16>
    %cst_36 = arith.constant dense<0.000000e+00> : vector<17x17xf32>
    %108 = tpu.matmul %106, %107, %cst_36 {dimension_numbers = #tpu.dot_dimension_numbers<[1], [0], [0], [1], [0, 0, 1, 1], [], []>} : vector<17x8xbf16>, vector<8x17xbf16>, vector<17x17xf32> -> vector<17x17xf32>
    %109 = vector.broadcast %7 : f32 to vector<17x17xf32>
    %110 = arith.mulf %108, %109 : vector<17x17xf32>
    %cst_37 = arith.constant dense<0xFF800000> : vector<17xf32>
    %111 = vector.multi_reduction <maximumf>, %110, %cst_37 [1] : vector<17x17xf32> to vector<17xf32>
    %112 = vector.shape_cast %111 : vector<17xf32> to vector<17x1xf32>
    %113 = vector.broadcast %112 : vector<17x1xf32> to vector<17x17xf32>
    %114 = arith.subf %110, %113 : vector<17x17xf32>
    %115 = math.exp %114 : vector<17x17xf32>
    %cst_38 = arith.constant dense<0.000000e+00> : vector<17xf32>
    %116 = vector.multi_reduction <add>, %115, %cst_38 [1] : vector<17x17xf32> to vector<17xf32>
    %117 = vector.shape_cast %116 : vector<17xf32> to vector<17x1xf32>
    %118 = tpu.reciprocal %117 {approx = true} : vector<17x1xf32> -> vector<17x1xf32>
    %119 = vector.broadcast %118 : vector<17x1xf32> to vector<17x17xf32>
    %120 = arith.mulf %115, %119 : vector<17x17xf32>
    %121 = arith.truncf %120 : vector<17x17xf32> to vector<17x17xbf16>
    %122 = vector.extract_strided_slice %103 {offsets = [0, 0], sizes = [17, 8], strides = [1, 1]} : vector<17x32xbf16> to vector<17x8xbf16>
    %cst_39 = arith.constant dense<0.000000e+00> : vector<17x8xf32>
    %123 = tpu.matmul %121, %122, %cst_39 {dimension_numbers = #tpu.dot_dimension_numbers<[1], [0], [0], [1], [0, 0, 1, 1], [], []>} : vector<17x17xbf16>, vector<17x8xbf16>, vector<17x8xf32> -> vector<17x8xf32>
    %c17 = arith.constant 17 : index
    %c0_40 = arith.constant 0 : index
    %124 = vector.load %arg18[%c17, %c0_40] : memref<34x32xf32, #tpu.memory_space<vmem>>, vector<17x8xf32>
    tpu.vector_store %arg18[%c17, %c0_40], %123 {strides = array<i32>} : memref<34x32xf32, #tpu.memory_space<vmem>>, vector<17x8xf32>,
    %125 = vector.extract_strided_slice %100 {offsets = [0, 8], sizes = [17, 8], strides = [1, 1]} : vector<17x32xbf16> to vector<17x8xbf16>
    %126 = vector.extract_strided_slice %105 {offsets = [8, 0], sizes = [8, 17], strides = [1, 1]} : vector<32x17xbf16> to vector<8x17xbf16>
    %cst_41 = arith.constant dense<0.000000e+00> : vector<17x17xf32>
    %127 = tpu.matmul %125, %126, %cst_41 {dimension_numbers = #tpu.dot_dimension_numbers<[1], [0], [0], [1], [0, 0, 1, 1], [], []>} : vector<17x8xbf16>, vector<8x17xbf16>, vector<17x17xf32> -> vector<17x17xf32>
    %128 = vector.broadcast %7 : f32 to vector<17x17xf32>
    %129 = arith.mulf %127, %128 : vector<17x17xf32>
    %cst_42 = arith.constant dense<0xFF800000> : vector<17xf32>
    %130 = vector.multi_reduction <maximumf>, %129, %cst_42 [1] : vector<17x17xf32> to vector<17xf32>
    %131 = vector.shape_cast %130 : vector<17xf32> to vector<17x1xf32>
    %132 = vector.broadcast %131 : vector<17x1xf32> to vector<17x17xf32>
    %133 = arith.subf %129, %132 : vector<17x17xf32>
    %134 = math.exp %133 : vector<17x17xf32>
    %cst_43 = arith.constant dense<0.000000e+00> : vector<17xf32>
    %135 = vector.multi_reduction <add>, %134, %cst_43 [1] : vector<17x17xf32> to vector<17xf32>
    %136 = vector.shape_cast %135 : vector<17xf32> to vector<17x1xf32>
    %137 = tpu.reciprocal %136 {approx = true} : vector<17x1xf32> -> vector<17x1xf32>
    %138 = vector.broadcast %137 : vector<17x1xf32> to vector<17x17xf32>
    %139 = arith.mulf %134, %138 : vector<17x17xf32>
    %140 = arith.truncf %139 : vector<17x17xf32> to vector<17x17xbf16>
    %141 = vector.extract_strided_slice %103 {offsets = [0, 8], sizes = [17, 8], strides = [1, 1]} : vector<17x32xbf16> to vector<17x8xbf16>
    %cst_44 = arith.constant dense<0.000000e+00> : vector<17x8xf32>
    %142 = tpu.matmul %140, %141, %cst_44 {dimension_numbers = #tpu.dot_dimension_numbers<[1], [0], [0], [1], [0, 0, 1, 1], [], []>} : vector<17x17xbf16>, vector<17x8xbf16>, vector<17x8xf32> -> vector<17x8xf32>
    %c17_45 = arith.constant 17 : index
    %c8_46 = arith.constant 8 : index
    %143 = vector.load %arg18[%c17_45, %c8_46] : memref<34x32xf32, #tpu.memory_space<vmem>>, vector<17x8xf32>
    tpu.vector_store %arg18[%c17_45, %c8_46], %142 {strides = array<i32>} : memref<34x32xf32, #tpu.memory_space<vmem>>, vector<17x8xf32>,
    %144 = vector.extract_strided_slice %100 {offsets = [0, 16], sizes = [17, 8], strides = [1, 1]} : vector<17x32xbf16> to vector<17x8xbf16>
    %145 = vector.extract_strided_slice %105 {offsets = [16, 0], sizes = [8, 17], strides = [1, 1]} : vector<32x17xbf16> to vector<8x17xbf16>
    %cst_47 = arith.constant dense<0.000000e+00> : vector<17x17xf32>
    %146 = tpu.matmul %144, %145, %cst_47 {dimension_numbers = #tpu.dot_dimension_numbers<[1], [0], [0], [1], [0, 0, 1, 1], [], []>} : vector<17x8xbf16>, vector<8x17xbf16>, vector<17x17xf32> -> vector<17x17xf32>
    %147 = vector.broadcast %7 : f32 to vector<17x17xf32>
    %148 = arith.mulf %146, %147 : vector<17x17xf32>
    %cst_48 = arith.constant dense<0xFF800000> : vector<17xf32>
    %149 = vector.multi_reduction <maximumf>, %148, %cst_48 [1] : vector<17x17xf32> to vector<17xf32>
    %150 = vector.shape_cast %149 : vector<17xf32> to vector<17x1xf32>
    %151 = vector.broadcast %150 : vector<17x1xf32> to vector<17x17xf32>
    %152 = arith.subf %148, %151 : vector<17x17xf32>
    %153 = math.exp %152 : vector<17x17xf32>
    %cst_49 = arith.constant dense<0.000000e+00> : vector<17xf32>
    %154 = vector.multi_reduction <add>, %153, %cst_49 [1] : vector<17x17xf32> to vector<17xf32>
    %155 = vector.shape_cast %154 : vector<17xf32> to vector<17x1xf32>
    %156 = tpu.reciprocal %155 {approx = true} : vector<17x1xf32> -> vector<17x1xf32>
    %157 = vector.broadcast %156 : vector<17x1xf32> to vector<17x17xf32>
    %158 = arith.mulf %153, %157 : vector<17x17xf32>
    %159 = arith.truncf %158 : vector<17x17xf32> to vector<17x17xbf16>
    %160 = vector.extract_strided_slice %103 {offsets = [0, 16], sizes = [17, 8], strides = [1, 1]} : vector<17x32xbf16> to vector<17x8xbf16>
    %cst_50 = arith.constant dense<0.000000e+00> : vector<17x8xf32>
    %161 = tpu.matmul %159, %160, %cst_50 {dimension_numbers = #tpu.dot_dimension_numbers<[1], [0], [0], [1], [0, 0, 1, 1], [], []>} : vector<17x17xbf16>, vector<17x8xbf16>, vector<17x8xf32> -> vector<17x8xf32>
    %c17_51 = arith.constant 17 : index
    %c16_52 = arith.constant 16 : index
    %162 = vector.load %arg18[%c17_51, %c16_52] : memref<34x32xf32, #tpu.memory_space<vmem>>, vector<17x8xf32>
    tpu.vector_store %arg18[%c17_51, %c16_52], %161 {strides = array<i32>} : memref<34x32xf32, #tpu.memory_space<vmem>>, vector<17x8xf32>,
    %163 = vector.extract_strided_slice %100 {offsets = [0, 24], sizes = [17, 8], strides = [1, 1]} : vector<17x32xbf16> to vector<17x8xbf16>
    %164 = vector.extract_strided_slice %105 {offsets = [24, 0], sizes = [8, 17], strides = [1, 1]} : vector<32x17xbf16> to vector<8x17xbf16>
    %cst_53 = arith.constant dense<0.000000e+00> : vector<17x17xf32>
    %165 = tpu.matmul %163, %164, %cst_53 {dimension_numbers = #tpu.dot_dimension_numbers<[1], [0], [0], [1], [0, 0, 1, 1], [], []>} : vector<17x8xbf16>, vector<8x17xbf16>, vector<17x17xf32> -> vector<17x17xf32>
    %166 = vector.broadcast %7 : f32 to vector<17x17xf32>
    %167 = arith.mulf %165, %166 : vector<17x17xf32>
    %cst_54 = arith.constant dense<0xFF800000> : vector<17xf32>
    %168 = vector.multi_reduction <maximumf>, %167, %cst_54 [1] : vector<17x17xf32> to vector<17xf32>
    %169 = vector.shape_cast %168 : vector<17xf32> to vector<17x1xf32>
    %170 = vector.broadcast %169 : vector<17x1xf32> to vector<17x17xf32>
    %171 = arith.subf %167, %170 : vector<17x17xf32>
    %172 = math.exp %171 : vector<17x17xf32>
    %cst_55 = arith.constant dense<0.000000e+00> : vector<17xf32>
    %173 = vector.multi_reduction <add>, %172, %cst_55 [1] : vector<17x17xf32> to vector<17xf32>
    %174 = vector.shape_cast %173 : vector<17xf32> to vector<17x1xf32>
    %175 = tpu.reciprocal %174 {approx = true} : vector<17x1xf32> -> vector<17x1xf32>
    %176 = vector.broadcast %175 : vector<17x1xf32> to vector<17x17xf32>
    %177 = arith.mulf %172, %176 : vector<17x17xf32>
    %178 = arith.truncf %177 : vector<17x17xf32> to vector<17x17xbf16>
    %179 = vector.extract_strided_slice %103 {offsets = [0, 24], sizes = [17, 8], strides = [1, 1]} : vector<17x32xbf16> to vector<17x8xbf16>
    %cst_56 = arith.constant dense<0.000000e+00> : vector<17x8xf32>
    %180 = tpu.matmul %178, %179, %cst_56 {dimension_numbers = #tpu.dot_dimension_numbers<[1], [0], [0], [1], [0, 0, 1, 1], [], []>} : vector<17x17xbf16>, vector<17x8xbf16>, vector<17x8xf32> -> vector<17x8xf32>
    %c17_57 = arith.constant 17 : index
    %c24_58 = arith.constant 24 : index
    %181 = vector.load %arg18[%c17_57, %c24_58] : memref<34x32xf32, #tpu.memory_space<vmem>>, vector<17x8xf32>
    tpu.vector_store %arg18[%c17_57, %c24_58], %180 {strides = array<i32>} : memref<34x32xf32, #tpu.memory_space<vmem>>, vector<17x8xf32>,
    %c0_59 = arith.constant 0 : index
    %c0_60 = arith.constant 0 : index
    %182 = vector.load %arg18[%c0_59, %c0_60] : memref<34x32xf32, #tpu.memory_space<vmem>>, vector<34x32xf32>
    %183 = arith.truncf %182 : vector<34x32xf32> to vector<34x32xbf16>
    %c0_61 = arith.constant 0 : index
    %c0_62 = arith.constant 0 : index
    %c0_63 = arith.constant 0 : index
    %184 = vector.load %arg6[%c0_61, %c0_62, %c0_63] : memref<2x32x32xbf16, #tpu.memory_space<vmem>>, vector<1x32x32xbf16>
    %185 = vector.shape_cast %184 : vector<1x32x32xbf16> to vector<32x32xbf16>
    %cst_64 = arith.constant dense<0.000000e+00> : vector<34x32xf32>
    %186 = tpu.matmul %183, %185, %cst_64 {dimension_numbers = #tpu.dot_dimension_numbers<[1], [0], [0], [1], [0, 0, 1, 1], [], []>} : vector<34x32xbf16>, vector<32x32xbf16>, vector<34x32xf32> -> vector<34x32xf32>
    %c0_65 = arith.constant 0 : index
    %c0_66 = arith.constant 0 : index
    %c0_67 = arith.constant 0 : index
    %187 = vector.load %arg7[%c0_65, %c0_66, %c0_67] : memref<2x1x32xf32, #tpu.memory_space<vmem>>, vector<1x1x32xf32>
    %188 = vector.shape_cast %187 : vector<1x1x32xf32> to vector<1x32xf32>
    %189 = vector.broadcast %188 : vector<1x32xf32> to vector<34x32xf32>
    %190 = arith.addf %186, %189 : vector<34x32xf32>
    %191 = arith.addf %5, %190 : vector<34x32xf32>
    %c0_68 = arith.constant 0 : index
    %c0_69 = arith.constant 0 : index
    %c0_70 = arith.constant 0 : index
    %192 = vector.load %arg8[%c0_68, %c0_69, %c0_70] : memref<2x2x32xf32, #tpu.memory_space<vmem>>, vector<1x2x32xf32>
    %193 = vector.shape_cast %192 : vector<1x2x32xf32> to vector<2x32xf32>
    %cst_71 = arith.constant dense<0.000000e+00> : vector<34xf32>
    %194 = vector.multi_reduction <add>, %191, %cst_71 [1] : vector<34x32xf32> to vector<34xf32>
    %195 = vector.shape_cast %194 : vector<34xf32> to vector<34x1xf32>
    %cst_72 = arith.constant 3.200000e+01 : f32
    %196 = vector.broadcast %cst_72 : f32 to vector<34x1xf32>
    %197 = arith.divf %195, %196 : vector<34x1xf32>
    %198 = vector.broadcast %197 : vector<34x1xf32> to vector<34x32xf32>
    %199 = arith.subf %191, %198 : vector<34x32xf32>
    %200 = arith.mulf %199, %199 : vector<34x32xf32>
    %cst_73 = arith.constant dense<0.000000e+00> : vector<34xf32>
    %201 = vector.multi_reduction <add>, %200, %cst_73 [1] : vector<34x32xf32> to vector<34xf32>
    %202 = vector.shape_cast %201 : vector<34xf32> to vector<34x1xf32>
    %cst_74 = arith.constant 3.200000e+01 : f32
    %203 = vector.broadcast %cst_74 : f32 to vector<34x1xf32>
    %204 = arith.divf %202, %203 : vector<34x1xf32>
    %205 = vector.broadcast %197 : vector<34x1xf32> to vector<34x32xf32>
    %206 = arith.subf %191, %205 : vector<34x32xf32>
    %cst_75 = arith.constant 9.99999974E-6 : f32
    %207 = vector.broadcast %cst_75 : f32 to vector<34x1xf32>
    %208 = arith.addf %204, %207 : vector<34x1xf32>
    %209 = math.rsqrt %208 : vector<34x1xf32>
    %210 = vector.broadcast %209 : vector<34x1xf32> to vector<34x32xf32>
    %211 = arith.mulf %206, %210 : vector<34x32xf32>
    %212 = vector.extract_strided_slice %193 {offsets = [0, 0], sizes = [1, 32], strides = [1, 1]} : vector<2x32xf32> to vector<1x32xf32>
    %213 = vector.broadcast %212 : vector<1x32xf32> to vector<34x32xf32>
    %214 = arith.mulf %211, %213 : vector<34x32xf32>
    %215 = vector.extract_strided_slice %193 {offsets = [1, 0], sizes = [1, 32], strides = [1, 1]} : vector<2x32xf32> to vector<1x32xf32>
    %216 = vector.broadcast %215 : vector<1x32xf32> to vector<34x32xf32>
    %217 = arith.addf %214, %216 : vector<34x32xf32>
    %218 = arith.truncf %217 : vector<34x32xf32> to vector<34x32xbf16>
    %c0_76 = arith.constant 0 : index
    %c0_77 = arith.constant 0 : index
    %c0_78 = arith.constant 0 : index
    %219 = vector.load %arg9[%c0_76, %c0_77, %c0_78] : memref<2x32x64xbf16, #tpu.memory_space<vmem>>, vector<1x32x64xbf16>
    %220 = vector.shape_cast %219 : vector<1x32x64xbf16> to vector<32x64xbf16>
    %cst_79 = arith.constant dense<0.000000e+00> : vector<34x64xf32>
    %221 = tpu.matmul %218, %220, %cst_79 {dimension_numbers = #tpu.dot_dimension_numbers<[1], [0], [0], [1], [0, 0, 1, 1], [], []>} : vector<34x32xbf16>, vector<32x64xbf16>, vector<34x64xf32> -> vector<34x64xf32>
    %c0_80 = arith.constant 0 : index
    %c0_81 = arith.constant 0 : index
    %c0_82 = arith.constant 0 : index
    %222 = vector.load %arg10[%c0_80, %c0_81, %c0_82] : memref<2x1x64xf32, #tpu.memory_space<vmem>>, vector<1x1x64xf32>
    %223 = vector.shape_cast %222 : vector<1x1x64xf32> to vector<1x64xf32>
    %224 = vector.broadcast %223 : vector<1x64xf32> to vector<34x64xf32>
    %225 = arith.addf %221, %224 : vector<34x64xf32>
    %cst_83 = arith.constant 0.000000e+00 : f32
    %226 = vector.broadcast %cst_83 : f32 to vector<34x64xf32>
    %227 = arith.maximumf %225, %226 : vector<34x64xf32>
    %228 = arith.truncf %227 : vector<34x64xf32> to vector<34x64xbf16>
    %c0_84 = arith.constant 0 : index
    %c0_85 = arith.constant 0 : index
    %c0_86 = arith.constant 0 : index
    %229 = vector.load %arg11[%c0_84, %c0_85, %c0_86] : memref<2x64x32xbf16, #tpu.memory_space<vmem>>, vector<1x64x32xbf16>
    %230 = vector.shape_cast %229 : vector<1x64x32xbf16> to vector<64x32xbf16>
    %cst_87 = arith.constant dense<0.000000e+00> : vector<34x32xf32>
    %231 = tpu.matmul %228, %230, %cst_87 {dimension_numbers = #tpu.dot_dimension_numbers<[1], [0], [0], [1], [0, 0, 1, 1], [], []>} : vector<34x64xbf16>, vector<64x32xbf16>, vector<34x32xf32> -> vector<34x32xf32>
    %c0_88 = arith.constant 0 : index
    %c0_89 = arith.constant 0 : index
    %c0_90 = arith.constant 0 : index
    %232 = vector.load %arg12[%c0_88, %c0_89, %c0_90] : memref<2x1x32xf32, #tpu.memory_space<vmem>>, vector<1x1x32xf32>
    %233 = vector.shape_cast %232 : vector<1x1x32xf32> to vector<1x32xf32>
    %234 = vector.broadcast %233 : vector<1x32xf32> to vector<34x32xf32>
    %235 = arith.addf %231, %234 : vector<34x32xf32>
    %236 = arith.addf %217, %235 : vector<34x32xf32>
    %c0_91 = arith.constant 0 : index
    %c0_92 = arith.constant 0 : index
    %c0_93 = arith.constant 0 : index
    %237 = vector.load %arg13[%c0_91, %c0_92, %c0_93] : memref<2x2x32xf32, #tpu.memory_space<vmem>>, vector<1x2x32xf32>
    %238 = vector.shape_cast %237 : vector<1x2x32xf32> to vector<2x32xf32>
    %cst_94 = arith.constant dense<0.000000e+00> : vector<34xf32>
    %239 = vector.multi_reduction <add>, %236, %cst_94 [1] : vector<34x32xf32> to vector<34xf32>
    %240 = vector.shape_cast %239 : vector<34xf32> to vector<34x1xf32>
    %cst_95 = arith.constant 3.200000e+01 : f32
    %241 = vector.broadcast %cst_95 : f32 to vector<34x1xf32>
    %242 = arith.divf %240, %241 : vector<34x1xf32>
    %243 = vector.broadcast %242 : vector<34x1xf32> to vector<34x32xf32>
    %244 = arith.subf %236, %243 : vector<34x32xf32>
    %245 = arith.mulf %244, %244 : vector<34x32xf32>
    %cst_96 = arith.constant dense<0.000000e+00> : vector<34xf32>
    %246 = vector.multi_reduction <add>, %245, %cst_96 [1] : vector<34x32xf32> to vector<34xf32>
    %247 = vector.shape_cast %246 : vector<34xf32> to vector<34x1xf32>
    %cst_97 = arith.constant 3.200000e+01 : f32
    %248 = vector.broadcast %cst_97 : f32 to vector<34x1xf32>
    %249 = arith.divf %247, %248 : vector<34x1xf32>
    %250 = vector.broadcast %242 : vector<34x1xf32> to vector<34x32xf32>
    %251 = arith.subf %236, %250 : vector<34x32xf32>
    %cst_98 = arith.constant 9.99999974E-6 : f32
    %252 = vector.broadcast %cst_98 : f32 to vector<34x1xf32>
    %253 = arith.addf %249, %252 : vector<34x1xf32>
    %254 = math.rsqrt %253 : vector<34x1xf32>
    %255 = vector.broadcast %254 : vector<34x1xf32> to vector<34x32xf32>
    %256 = arith.mulf %251, %255 : vector<34x32xf32>
    %257 = vector.extract_strided_slice %238 {offsets = [0, 0], sizes = [1, 32], strides = [1, 1]} : vector<2x32xf32> to vector<1x32xf32>
    %258 = vector.broadcast %257 : vector<1x32xf32> to vector<34x32xf32>
    %259 = arith.mulf %256, %258 : vector<34x32xf32>
    %260 = vector.extract_strided_slice %238 {offsets = [1, 0], sizes = [1, 32], strides = [1, 1]} : vector<2x32xf32> to vector<1x32xf32>
    %261 = vector.broadcast %260 : vector<1x32xf32> to vector<34x32xf32>
    %262 = arith.addf %259, %261 : vector<34x32xf32>
    %263 = arith.truncf %262 : vector<34x32xf32> to vector<34x32xbf16>
    %c1 = arith.constant 1 : index
    %c0_99 = arith.constant 0 : index
    %c0_100 = arith.constant 0 : index
    %264 = vector.load %arg4[%c1, %c0_99, %c0_100] : memref<2x32x96xbf16, #tpu.memory_space<vmem>>, vector<1x32x96xbf16>
    %265 = vector.shape_cast %264 : vector<1x32x96xbf16> to vector<32x96xbf16>
    %cst_101 = arith.constant dense<0.000000e+00> : vector<34x96xf32>
    %266 = tpu.matmul %263, %265, %cst_101 {dimension_numbers = #tpu.dot_dimension_numbers<[1], [0], [0], [1], [0, 0, 1, 1], [], []>} : vector<34x32xbf16>, vector<32x96xbf16>, vector<34x96xf32> -> vector<34x96xf32>
    %c1_102 = arith.constant 1 : index
    %c0_103 = arith.constant 0 : index
    %c0_104 = arith.constant 0 : index
    %267 = vector.load %arg5[%c1_102, %c0_103, %c0_104] : memref<2x1x96xf32, #tpu.memory_space<vmem>>, vector<1x1x96xf32>
    %268 = vector.shape_cast %267 : vector<1x1x96xf32> to vector<1x96xf32>
    %269 = vector.broadcast %268 : vector<1x96xf32> to vector<34x96xf32>
    %270 = arith.addf %266, %269 : vector<34x96xf32>
    %271 = vector.extract_strided_slice %270 {offsets = [0, 0], sizes = [17, 32], strides = [1, 1]} : vector<34x96xf32> to vector<17x32xf32>
    %272 = arith.truncf %271 : vector<17x32xf32> to vector<17x32xbf16>
    %273 = vector.extract_strided_slice %270 {offsets = [0, 32], sizes = [17, 32], strides = [1, 1]} : vector<34x96xf32> to vector<17x32xf32>
    %274 = vector.extract_strided_slice %270 {offsets = [0, 64], sizes = [17, 32], strides = [1, 1]} : vector<34x96xf32> to vector<17x32xf32>
    %275 = arith.truncf %274 : vector<17x32xf32> to vector<17x32xbf16>
    %276 = tpu.transpose %273, [1, 0] : vector<17x32xf32> -> vector<32x17xf32>
    %277 = arith.truncf %276 : vector<32x17xf32> to vector<32x17xbf16>
    %278 = vector.extract_strided_slice %272 {offsets = [0, 0], sizes = [17, 8], strides = [1, 1]} : vector<17x32xbf16> to vector<17x8xbf16>
    %279 = vector.extract_strided_slice %277 {offsets = [0, 0], sizes = [8, 17], strides = [1, 1]} : vector<32x17xbf16> to vector<8x17xbf16>
    %cst_105 = arith.constant dense<0.000000e+00> : vector<17x17xf32>
    %280 = tpu.matmul %278, %279, %cst_105 {dimension_numbers = #tpu.dot_dimension_numbers<[1], [0], [0], [1], [0, 0, 1, 1], [], []>} : vector<17x8xbf16>, vector<8x17xbf16>, vector<17x17xf32> -> vector<17x17xf32>
    %281 = vector.broadcast %7 : f32 to vector<17x17xf32>
    %282 = arith.mulf %280, %281 : vector<17x17xf32>
    %cst_106 = arith.constant dense<0xFF800000> : vector<17xf32>
    %283 = vector.multi_reduction <maximumf>, %282, %cst_106 [1] : vector<17x17xf32> to vector<17xf32>
    %284 = vector.shape_cast %283 : vector<17xf32> to vector<17x1xf32>
    %285 = vector.broadcast %284 : vector<17x1xf32> to vector<17x17xf32>
    %286 = arith.subf %282, %285 : vector<17x17xf32>
    %287 = math.exp %286 : vector<17x17xf32>
    %cst_107 = arith.constant dense<0.000000e+00> : vector<17xf32>
    %288 = vector.multi_reduction <add>, %287, %cst_107 [1] : vector<17x17xf32> to vector<17xf32>
    %289 = vector.shape_cast %288 : vector<17xf32> to vector<17x1xf32>
    %290 = tpu.reciprocal %289 {approx = true} : vector<17x1xf32> -> vector<17x1xf32>
    %291 = vector.broadcast %290 : vector<17x1xf32> to vector<17x17xf32>
    %292 = arith.mulf %287, %291 : vector<17x17xf32>
    %293 = arith.truncf %292 : vector<17x17xf32> to vector<17x17xbf16>
    %294 = vector.extract_strided_slice %275 {offsets = [0, 0], sizes = [17, 8], strides = [1, 1]} : vector<17x32xbf16> to vector<17x8xbf16>
    %cst_108 = arith.constant dense<0.000000e+00> : vector<17x8xf32>
    %295 = tpu.matmul %293, %294, %cst_108 {dimension_numbers = #tpu.dot_dimension_numbers<[1], [0], [0], [1], [0, 0, 1, 1], [], []>} : vector<17x17xbf16>, vector<17x8xbf16>, vector<17x8xf32> -> vector<17x8xf32>
    %c0_109 = arith.constant 0 : index
    %c0_110 = arith.constant 0 : index
    %296 = vector.load %arg18[%c0_109, %c0_110] : memref<34x32xf32, #tpu.memory_space<vmem>>, vector<17x8xf32>
    tpu.vector_store %arg18[%c0_109, %c0_110], %295 {strides = array<i32>} : memref<34x32xf32, #tpu.memory_space<vmem>>, vector<17x8xf32>,
    %297 = vector.extract_strided_slice %272 {offsets = [0, 8], sizes = [17, 8], strides = [1, 1]} : vector<17x32xbf16> to vector<17x8xbf16>
    %298 = vector.extract_strided_slice %277 {offsets = [8, 0], sizes = [8, 17], strides = [1, 1]} : vector<32x17xbf16> to vector<8x17xbf16>
    %cst_111 = arith.constant dense<0.000000e+00> : vector<17x17xf32>
    %299 = tpu.matmul %297, %298, %cst_111 {dimension_numbers = #tpu.dot_dimension_numbers<[1], [0], [0], [1], [0, 0, 1, 1], [], []>} : vector<17x8xbf16>, vector<8x17xbf16>, vector<17x17xf32> -> vector<17x17xf32>
    %300 = vector.broadcast %7 : f32 to vector<17x17xf32>
    %301 = arith.mulf %299, %300 : vector<17x17xf32>
    %cst_112 = arith.constant dense<0xFF800000> : vector<17xf32>
    %302 = vector.multi_reduction <maximumf>, %301, %cst_112 [1] : vector<17x17xf32> to vector<17xf32>
    %303 = vector.shape_cast %302 : vector<17xf32> to vector<17x1xf32>
    %304 = vector.broadcast %303 : vector<17x1xf32> to vector<17x17xf32>
    %305 = arith.subf %301, %304 : vector<17x17xf32>
    %306 = math.exp %305 : vector<17x17xf32>
    %cst_113 = arith.constant dense<0.000000e+00> : vector<17xf32>
    %307 = vector.multi_reduction <add>, %306, %cst_113 [1] : vector<17x17xf32> to vector<17xf32>
    %308 = vector.shape_cast %307 : vector<17xf32> to vector<17x1xf32>
    %309 = tpu.reciprocal %308 {approx = true} : vector<17x1xf32> -> vector<17x1xf32>
    %310 = vector.broadcast %309 : vector<17x1xf32> to vector<17x17xf32>
    %311 = arith.mulf %306, %310 : vector<17x17xf32>
    %312 = arith.truncf %311 : vector<17x17xf32> to vector<17x17xbf16>
    %313 = vector.extract_strided_slice %275 {offsets = [0, 8], sizes = [17, 8], strides = [1, 1]} : vector<17x32xbf16> to vector<17x8xbf16>
    %cst_114 = arith.constant dense<0.000000e+00> : vector<17x8xf32>
    %314 = tpu.matmul %312, %313, %cst_114 {dimension_numbers = #tpu.dot_dimension_numbers<[1], [0], [0], [1], [0, 0, 1, 1], [], []>} : vector<17x17xbf16>, vector<17x8xbf16>, vector<17x8xf32> -> vector<17x8xf32>
    %c0_115 = arith.constant 0 : index
    %c8_116 = arith.constant 8 : index
    %315 = vector.load %arg18[%c0_115, %c8_116] : memref<34x32xf32, #tpu.memory_space<vmem>>, vector<17x8xf32>
    tpu.vector_store %arg18[%c0_115, %c8_116], %314 {strides = array<i32>} : memref<34x32xf32, #tpu.memory_space<vmem>>, vector<17x8xf32>,
    %316 = vector.extract_strided_slice %272 {offsets = [0, 16], sizes = [17, 8], strides = [1, 1]} : vector<17x32xbf16> to vector<17x8xbf16>
    %317 = vector.extract_strided_slice %277 {offsets = [16, 0], sizes = [8, 17], strides = [1, 1]} : vector<32x17xbf16> to vector<8x17xbf16>
    %cst_117 = arith.constant dense<0.000000e+00> : vector<17x17xf32>
    %318 = tpu.matmul %316, %317, %cst_117 {dimension_numbers = #tpu.dot_dimension_numbers<[1], [0], [0], [1], [0, 0, 1, 1], [], []>} : vector<17x8xbf16>, vector<8x17xbf16>, vector<17x17xf32> -> vector<17x17xf32>
    %319 = vector.broadcast %7 : f32 to vector<17x17xf32>
    %320 = arith.mulf %318, %319 : vector<17x17xf32>
    %cst_118 = arith.constant dense<0xFF800000> : vector<17xf32>
    %321 = vector.multi_reduction <maximumf>, %320, %cst_118 [1] : vector<17x17xf32> to vector<17xf32>
    %322 = vector.shape_cast %321 : vector<17xf32> to vector<17x1xf32>
    %323 = vector.broadcast %322 : vector<17x1xf32> to vector<17x17xf32>
    %324 = arith.subf %320, %323 : vector<17x17xf32>
    %325 = math.exp %324 : vector<17x17xf32>
    %cst_119 = arith.constant dense<0.000000e+00> : vector<17xf32>
    %326 = vector.multi_reduction <add>, %325, %cst_119 [1] : vector<17x17xf32> to vector<17xf32>
    %327 = vector.shape_cast %326 : vector<17xf32> to vector<17x1xf32>
    %328 = tpu.reciprocal %327 {approx = true} : vector<17x1xf32> -> vector<17x1xf32>
    %329 = vector.broadcast %328 : vector<17x1xf32> to vector<17x17xf32>
    %330 = arith.mulf %325, %329 : vector<17x17xf32>
    %331 = arith.truncf %330 : vector<17x17xf32> to vector<17x17xbf16>
    %332 = vector.extract_strided_slice %275 {offsets = [0, 16], sizes = [17, 8], strides = [1, 1]} : vector<17x32xbf16> to vector<17x8xbf16>
    %cst_120 = arith.constant dense<0.000000e+00> : vector<17x8xf32>
    %333 = tpu.matmul %331, %332, %cst_120 {dimension_numbers = #tpu.dot_dimension_numbers<[1], [0], [0], [1], [0, 0, 1, 1], [], []>} : vector<17x17xbf16>, vector<17x8xbf16>, vector<17x8xf32> -> vector<17x8xf32>
    %c0_121 = arith.constant 0 : index
    %c16_122 = arith.constant 16 : index
    %334 = vector.load %arg18[%c0_121, %c16_122] : memref<34x32xf32, #tpu.memory_space<vmem>>, vector<17x8xf32>
    tpu.vector_store %arg18[%c0_121, %c16_122], %333 {strides = array<i32>} : memref<34x32xf32, #tpu.memory_space<vmem>>, vector<17x8xf32>,
    %335 = vector.extract_strided_slice %272 {offsets = [0, 24], sizes = [17, 8], strides = [1, 1]} : vector<17x32xbf16> to vector<17x8xbf16>
    %336 = vector.extract_strided_slice %277 {offsets = [24, 0], sizes = [8, 17], strides = [1, 1]} : vector<32x17xbf16> to vector<8x17xbf16>
    %cst_123 = arith.constant dense<0.000000e+00> : vector<17x17xf32>
    %337 = tpu.matmul %335, %336, %cst_123 {dimension_numbers = #tpu.dot_dimension_numbers<[1], [0], [0], [1], [0, 0, 1, 1], [], []>} : vector<17x8xbf16>, vector<8x17xbf16>, vector<17x17xf32> -> vector<17x17xf32>
    %338 = vector.broadcast %7 : f32 to vector<17x17xf32>
    %339 = arith.mulf %337, %338 : vector<17x17xf32>
    %cst_124 = arith.constant dense<0xFF800000> : vector<17xf32>
    %340 = vector.multi_reduction <maximumf>, %339, %cst_124 [1] : vector<17x17xf32> to vector<17xf32>
    %341 = vector.shape_cast %340 : vector<17xf32> to vector<17x1xf32>
    %342 = vector.broadcast %341 : vector<17x1xf32> to vector<17x17xf32>
    %343 = arith.subf %339, %342 : vector<17x17xf32>
    %344 = math.exp %343 : vector<17x17xf32>
    %cst_125 = arith.constant dense<0.000000e+00> : vector<17xf32>
    %345 = vector.multi_reduction <add>, %344, %cst_125 [1] : vector<17x17xf32> to vector<17xf32>
    %346 = vector.shape_cast %345 : vector<17xf32> to vector<17x1xf32>
    %347 = tpu.reciprocal %346 {approx = true} : vector<17x1xf32> -> vector<17x1xf32>
    %348 = vector.broadcast %347 : vector<17x1xf32> to vector<17x17xf32>
    %349 = arith.mulf %344, %348 : vector<17x17xf32>
    %350 = arith.truncf %349 : vector<17x17xf32> to vector<17x17xbf16>
    %351 = vector.extract_strided_slice %275 {offsets = [0, 24], sizes = [17, 8], strides = [1, 1]} : vector<17x32xbf16> to vector<17x8xbf16>
    %cst_126 = arith.constant dense<0.000000e+00> : vector<17x8xf32>
    %352 = tpu.matmul %350, %351, %cst_126 {dimension_numbers = #tpu.dot_dimension_numbers<[1], [0], [0], [1], [0, 0, 1, 1], [], []>} : vector<17x17xbf16>, vector<17x8xbf16>, vector<17x8xf32> -> vector<17x8xf32>
    %c0_127 = arith.constant 0 : index
    %c24_128 = arith.constant 24 : index
    %353 = vector.load %arg18[%c0_127, %c24_128] : memref<34x32xf32, #tpu.memory_space<vmem>>, vector<17x8xf32>
    tpu.vector_store %arg18[%c0_127, %c24_128], %352 {strides = array<i32>} : memref<34x32xf32, #tpu.memory_space<vmem>>, vector<17x8xf32>,
    %354 = vector.extract_strided_slice %270 {offsets = [17, 0], sizes = [17, 32], strides = [1, 1]} : vector<34x96xf32> to vector<17x32xf32>
    %355 = arith.truncf %354 : vector<17x32xf32> to vector<17x32xbf16>
    %356 = vector.extract_strided_slice %270 {offsets = [17, 32], sizes = [17, 32], strides = [1, 1]} : vector<34x96xf32> to vector<17x32xf32>
    %357 = vector.extract_strided_slice %270 {offsets = [17, 64], sizes = [17, 32], strides = [1, 1]} : vector<34x96xf32> to vector<17x32xf32>
    %358 = arith.truncf %357 : vector<17x32xf32> to vector<17x32xbf16>
    %359 = tpu.transpose %356, [1, 0] : vector<17x32xf32> -> vector<32x17xf32>
    %360 = arith.truncf %359 : vector<32x17xf32> to vector<32x17xbf16>
    %361 = vector.extract_strided_slice %355 {offsets = [0, 0], sizes = [17, 8], strides = [1, 1]} : vector<17x32xbf16> to vector<17x8xbf16>
    %362 = vector.extract_strided_slice %360 {offsets = [0, 0], sizes = [8, 17], strides = [1, 1]} : vector<32x17xbf16> to vector<8x17xbf16>
    %cst_129 = arith.constant dense<0.000000e+00> : vector<17x17xf32>
    %363 = tpu.matmul %361, %362, %cst_129 {dimension_numbers = #tpu.dot_dimension_numbers<[1], [0], [0], [1], [0, 0, 1, 1], [], []>} : vector<17x8xbf16>, vector<8x17xbf16>, vector<17x17xf32> -> vector<17x17xf32>
    %364 = vector.broadcast %7 : f32 to vector<17x17xf32>
    %365 = arith.mulf %363, %364 : vector<17x17xf32>
    %cst_130 = arith.constant dense<0xFF800000> : vector<17xf32>
    %366 = vector.multi_reduction <maximumf>, %365, %cst_130 [1] : vector<17x17xf32> to vector<17xf32>
    %367 = vector.shape_cast %366 : vector<17xf32> to vector<17x1xf32>
    %368 = vector.broadcast %367 : vector<17x1xf32> to vector<17x17xf32>
    %369 = arith.subf %365, %368 : vector<17x17xf32>
    %370 = math.exp %369 : vector<17x17xf32>
    %cst_131 = arith.constant dense<0.000000e+00> : vector<17xf32>
    %371 = vector.multi_reduction <add>, %370, %cst_131 [1] : vector<17x17xf32> to vector<17xf32>
    %372 = vector.shape_cast %371 : vector<17xf32> to vector<17x1xf32>
    %373 = tpu.reciprocal %372 {approx = true} : vector<17x1xf32> -> vector<17x1xf32>
    %374 = vector.broadcast %373 : vector<17x1xf32> to vector<17x17xf32>
    %375 = arith.mulf %370, %374 : vector<17x17xf32>
    %376 = arith.truncf %375 : vector<17x17xf32> to vector<17x17xbf16>
    %377 = vector.extract_strided_slice %358 {offsets = [0, 0], sizes = [17, 8], strides = [1, 1]} : vector<17x32xbf16> to vector<17x8xbf16>
    %cst_132 = arith.constant dense<0.000000e+00> : vector<17x8xf32>
    %378 = tpu.matmul %376, %377, %cst_132 {dimension_numbers = #tpu.dot_dimension_numbers<[1], [0], [0], [1], [0, 0, 1, 1], [], []>} : vector<17x17xbf16>, vector<17x8xbf16>, vector<17x8xf32> -> vector<17x8xf32>
    %c17_133 = arith.constant 17 : index
    %c0_134 = arith.constant 0 : index
    %379 = vector.load %arg18[%c17_133, %c0_134] : memref<34x32xf32, #tpu.memory_space<vmem>>, vector<17x8xf32>
    tpu.vector_store %arg18[%c17_133, %c0_134], %378 {strides = array<i32>} : memref<34x32xf32, #tpu.memory_space<vmem>>, vector<17x8xf32>,
    %380 = vector.extract_strided_slice %355 {offsets = [0, 8], sizes = [17, 8], strides = [1, 1]} : vector<17x32xbf16> to vector<17x8xbf16>
    %381 = vector.extract_strided_slice %360 {offsets = [8, 0], sizes = [8, 17], strides = [1, 1]} : vector<32x17xbf16> to vector<8x17xbf16>
    %cst_135 = arith.constant dense<0.000000e+00> : vector<17x17xf32>
    %382 = tpu.matmul %380, %381, %cst_135 {dimension_numbers = #tpu.dot_dimension_numbers<[1], [0], [0], [1], [0, 0, 1, 1], [], []>} : vector<17x8xbf16>, vector<8x17xbf16>, vector<17x17xf32> -> vector<17x17xf32>
    %383 = vector.broadcast %7 : f32 to vector<17x17xf32>
    %384 = arith.mulf %382, %383 : vector<17x17xf32>
    %cst_136 = arith.constant dense<0xFF800000> : vector<17xf32>
    %385 = vector.multi_reduction <maximumf>, %384, %cst_136 [1] : vector<17x17xf32> to vector<17xf32>
    %386 = vector.shape_cast %385 : vector<17xf32> to vector<17x1xf32>
    %387 = vector.broadcast %386 : vector<17x1xf32> to vector<17x17xf32>
    %388 = arith.subf %384, %387 : vector<17x17xf32>
    %389 = math.exp %388 : vector<17x17xf32>
    %cst_137 = arith.constant dense<0.000000e+00> : vector<17xf32>
    %390 = vector.multi_reduction <add>, %389, %cst_137 [1] : vector<17x17xf32> to vector<17xf32>
    %391 = vector.shape_cast %390 : vector<17xf32> to vector<17x1xf32>
    %392 = tpu.reciprocal %391 {approx = true} : vector<17x1xf32> -> vector<17x1xf32>
    %393 = vector.broadcast %392 : vector<17x1xf32> to vector<17x17xf32>
    %394 = arith.mulf %389, %393 : vector<17x17xf32>
    %395 = arith.truncf %394 : vector<17x17xf32> to vector<17x17xbf16>
    %396 = vector.extract_strided_slice %358 {offsets = [0, 8], sizes = [17, 8], strides = [1, 1]} : vector<17x32xbf16> to vector<17x8xbf16>
    %cst_138 = arith.constant dense<0.000000e+00> : vector<17x8xf32>
    %397 = tpu.matmul %395, %396, %cst_138 {dimension_numbers = #tpu.dot_dimension_numbers<[1], [0], [0], [1], [0, 0, 1, 1], [], []>} : vector<17x17xbf16>, vector<17x8xbf16>, vector<17x8xf32> -> vector<17x8xf32>
    %c17_139 = arith.constant 17 : index
    %c8_140 = arith.constant 8 : index
    %398 = vector.load %arg18[%c17_139, %c8_140] : memref<34x32xf32, #tpu.memory_space<vmem>>, vector<17x8xf32>
    tpu.vector_store %arg18[%c17_139, %c8_140], %397 {strides = array<i32>} : memref<34x32xf32, #tpu.memory_space<vmem>>, vector<17x8xf32>,
    %399 = vector.extract_strided_slice %355 {offsets = [0, 16], sizes = [17, 8], strides = [1, 1]} : vector<17x32xbf16> to vector<17x8xbf16>
    %400 = vector.extract_strided_slice %360 {offsets = [16, 0], sizes = [8, 17], strides = [1, 1]} : vector<32x17xbf16> to vector<8x17xbf16>
    %cst_141 = arith.constant dense<0.000000e+00> : vector<17x17xf32>
    %401 = tpu.matmul %399, %400, %cst_141 {dimension_numbers = #tpu.dot_dimension_numbers<[1], [0], [0], [1], [0, 0, 1, 1], [], []>} : vector<17x8xbf16>, vector<8x17xbf16>, vector<17x17xf32> -> vector<17x17xf32>
    %402 = vector.broadcast %7 : f32 to vector<17x17xf32>
    %403 = arith.mulf %401, %402 : vector<17x17xf32>
    %cst_142 = arith.constant dense<0xFF800000> : vector<17xf32>
    %404 = vector.multi_reduction <maximumf>, %403, %cst_142 [1] : vector<17x17xf32> to vector<17xf32>
    %405 = vector.shape_cast %404 : vector<17xf32> to vector<17x1xf32>
    %406 = vector.broadcast %405 : vector<17x1xf32> to vector<17x17xf32>
    %407 = arith.subf %403, %406 : vector<17x17xf32>
    %408 = math.exp %407 : vector<17x17xf32>
    %cst_143 = arith.constant dense<0.000000e+00> : vector<17xf32>
    %409 = vector.multi_reduction <add>, %408, %cst_143 [1] : vector<17x17xf32> to vector<17xf32>
    %410 = vector.shape_cast %409 : vector<17xf32> to vector<17x1xf32>
    %411 = tpu.reciprocal %410 {approx = true} : vector<17x1xf32> -> vector<17x1xf32>
    %412 = vector.broadcast %411 : vector<17x1xf32> to vector<17x17xf32>
    %413 = arith.mulf %408, %412 : vector<17x17xf32>
    %414 = arith.truncf %413 : vector<17x17xf32> to vector<17x17xbf16>
    %415 = vector.extract_strided_slice %358 {offsets = [0, 16], sizes = [17, 8], strides = [1, 1]} : vector<17x32xbf16> to vector<17x8xbf16>
    %cst_144 = arith.constant dense<0.000000e+00> : vector<17x8xf32>
    %416 = tpu.matmul %414, %415, %cst_144 {dimension_numbers = #tpu.dot_dimension_numbers<[1], [0], [0], [1], [0, 0, 1, 1], [], []>} : vector<17x17xbf16>, vector<17x8xbf16>, vector<17x8xf32> -> vector<17x8xf32>
    %c17_145 = arith.constant 17 : index
    %c16_146 = arith.constant 16 : index
    %417 = vector.load %arg18[%c17_145, %c16_146] : memref<34x32xf32, #tpu.memory_space<vmem>>, vector<17x8xf32>
    tpu.vector_store %arg18[%c17_145, %c16_146], %416 {strides = array<i32>} : memref<34x32xf32, #tpu.memory_space<vmem>>, vector<17x8xf32>,
    %418 = vector.extract_strided_slice %355 {offsets = [0, 24], sizes = [17, 8], strides = [1, 1]} : vector<17x32xbf16> to vector<17x8xbf16>
    %419 = vector.extract_strided_slice %360 {offsets = [24, 0], sizes = [8, 17], strides = [1, 1]} : vector<32x17xbf16> to vector<8x17xbf16>
    %cst_147 = arith.constant dense<0.000000e+00> : vector<17x17xf32>
    %420 = tpu.matmul %418, %419, %cst_147 {dimension_numbers = #tpu.dot_dimension_numbers<[1], [0], [0], [1], [0, 0, 1, 1], [], []>} : vector<17x8xbf16>, vector<8x17xbf16>, vector<17x17xf32> -> vector<17x17xf32>
    %421 = vector.broadcast %7 : f32 to vector<17x17xf32>
    %422 = arith.mulf %420, %421 : vector<17x17xf32>
    %cst_148 = arith.constant dense<0xFF800000> : vector<17xf32>
    %423 = vector.multi_reduction <maximumf>, %422, %cst_148 [1] : vector<17x17xf32> to vector<17xf32>
    %424 = vector.shape_cast %423 : vector<17xf32> to vector<17x1xf32>
    %425 = vector.broadcast %424 : vector<17x1xf32> to vector<17x17xf32>
    %426 = arith.subf %422, %425 : vector<17x17xf32>
    %427 = math.exp %426 : vector<17x17xf32>
    %cst_149 = arith.constant dense<0.000000e+00> : vector<17xf32>
    %428 = vector.multi_reduction <add>, %427, %cst_149 [1] : vector<17x17xf32> to vector<17xf32>
    %429 = vector.shape_cast %428 : vector<17xf32> to vector<17x1xf32>
    %430 = tpu.reciprocal %429 {approx = true} : vector<17x1xf32> -> vector<17x1xf32>
    %431 = vector.broadcast %430 : vector<17x1xf32> to vector<17x17xf32>
    %432 = arith.mulf %427, %431 : vector<17x17xf32>
    %433 = arith.truncf %432 : vector<17x17xf32> to vector<17x17xbf16>
    %434 = vector.extract_strided_slice %358 {offsets = [0, 24], sizes = [17, 8], strides = [1, 1]} : vector<17x32xbf16> to vector<17x8xbf16>
    %cst_150 = arith.constant dense<0.000000e+00> : vector<17x8xf32>
    %435 = tpu.matmul %433, %434, %cst_150 {dimension_numbers = #tpu.dot_dimension_numbers<[1], [0], [0], [1], [0, 0, 1, 1], [], []>} : vector<17x17xbf16>, vector<17x8xbf16>, vector<17x8xf32> -> vector<17x8xf32>
    %c17_151 = arith.constant 17 : index
    %c24_152 = arith.constant 24 : index
    %436 = vector.load %arg18[%c17_151, %c24_152] : memref<34x32xf32, #tpu.memory_space<vmem>>, vector<17x8xf32>
    tpu.vector_store %arg18[%c17_151, %c24_152], %435 {strides = array<i32>} : memref<34x32xf32, #tpu.memory_space<vmem>>, vector<17x8xf32>,
    %c0_153 = arith.constant 0 : index
    %c0_154 = arith.constant 0 : index
    %437 = vector.load %arg18[%c0_153, %c0_154] : memref<34x32xf32, #tpu.memory_space<vmem>>, vector<34x32xf32>
    %438 = arith.truncf %437 : vector<34x32xf32> to vector<34x32xbf16>
    %c1_155 = arith.constant 1 : index
    %c0_156 = arith.constant 0 : index
    %c0_157 = arith.constant 0 : index
    %439 = vector.load %arg6[%c1_155, %c0_156, %c0_157] : memref<2x32x32xbf16, #tpu.memory_space<vmem>>, vector<1x32x32xbf16>
    %440 = vector.shape_cast %439 : vector<1x32x32xbf16> to vector<32x32xbf16>
    %cst_158 = arith.constant dense<0.000000e+00> : vector<34x32xf32>
    %441 = tpu.matmul %438, %440, %cst_158 {dimension_numbers = #tpu.dot_dimension_numbers<[1], [0], [0], [1], [0, 0, 1, 1], [], []>} : vector<34x32xbf16>, vector<32x32xbf16>, vector<34x32xf32> -> vector<34x32xf32>
    %c1_159 = arith.constant 1 : index
    %c0_160 = arith.constant 0 : index
    %c0_161 = arith.constant 0 : index
    %442 = vector.load %arg7[%c1_159, %c0_160, %c0_161] : memref<2x1x32xf32, #tpu.memory_space<vmem>>, vector<1x1x32xf32>
    %443 = vector.shape_cast %442 : vector<1x1x32xf32> to vector<1x32xf32>
    %444 = vector.broadcast %443 : vector<1x32xf32> to vector<34x32xf32>
    %445 = arith.addf %441, %444 : vector<34x32xf32>
    %446 = arith.addf %262, %445 : vector<34x32xf32>
    %c1_162 = arith.constant 1 : index
    %c0_163 = arith.constant 0 : index
    %c0_164 = arith.constant 0 : index
    %447 = vector.load %arg8[%c1_162, %c0_163, %c0_164] : memref<2x2x32xf32, #tpu.memory_space<vmem>>, vector<1x2x32xf32>
    %448 = vector.shape_cast %447 : vector<1x2x32xf32> to vector<2x32xf32>
    %cst_165 = arith.constant dense<0.000000e+00> : vector<34xf32>
    %449 = vector.multi_reduction <add>, %446, %cst_165 [1] : vector<34x32xf32> to vector<34xf32>
    %450 = vector.shape_cast %449 : vector<34xf32> to vector<34x1xf32>
    %cst_166 = arith.constant 3.200000e+01 : f32
    %451 = vector.broadcast %cst_166 : f32 to vector<34x1xf32>
    %452 = arith.divf %450, %451 : vector<34x1xf32>
    %453 = vector.broadcast %452 : vector<34x1xf32> to vector<34x32xf32>
    %454 = arith.subf %446, %453 : vector<34x32xf32>
    %455 = arith.mulf %454, %454 : vector<34x32xf32>
    %cst_167 = arith.constant dense<0.000000e+00> : vector<34xf32>
    %456 = vector.multi_reduction <add>, %455, %cst_167 [1] : vector<34x32xf32> to vector<34xf32>
    %457 = vector.shape_cast %456 : vector<34xf32> to vector<34x1xf32>
    %cst_168 = arith.constant 3.200000e+01 : f32
    %458 = vector.broadcast %cst_168 : f32 to vector<34x1xf32>
    %459 = arith.divf %457, %458 : vector<34x1xf32>
    %460 = vector.broadcast %452 : vector<34x1xf32> to vector<34x32xf32>
    %461 = arith.subf %446, %460 : vector<34x32xf32>
    %cst_169 = arith.constant 9.99999974E-6 : f32
    %462 = vector.broadcast %cst_169 : f32 to vector<34x1xf32>
    %463 = arith.addf %459, %462 : vector<34x1xf32>
    %464 = math.rsqrt %463 : vector<34x1xf32>
    %465 = vector.broadcast %464 : vector<34x1xf32> to vector<34x32xf32>
    %466 = arith.mulf %461, %465 : vector<34x32xf32>
    %467 = vector.extract_strided_slice %448 {offsets = [0, 0], sizes = [1, 32], strides = [1, 1]} : vector<2x32xf32> to vector<1x32xf32>
    %468 = vector.broadcast %467 : vector<1x32xf32> to vector<34x32xf32>
    %469 = arith.mulf %466, %468 : vector<34x32xf32>
    %470 = vector.extract_strided_slice %448 {offsets = [1, 0], sizes = [1, 32], strides = [1, 1]} : vector<2x32xf32> to vector<1x32xf32>
    %471 = vector.broadcast %470 : vector<1x32xf32> to vector<34x32xf32>
    %472 = arith.addf %469, %471 : vector<34x32xf32>
    %473 = arith.truncf %472 : vector<34x32xf32> to vector<34x32xbf16>
    %c1_170 = arith.constant 1 : index
    %c0_171 = arith.constant 0 : index
    %c0_172 = arith.constant 0 : index
    %474 = vector.load %arg9[%c1_170, %c0_171, %c0_172] : memref<2x32x64xbf16, #tpu.memory_space<vmem>>, vector<1x32x64xbf16>
    %475 = vector.shape_cast %474 : vector<1x32x64xbf16> to vector<32x64xbf16>
    %cst_173 = arith.constant dense<0.000000e+00> : vector<34x64xf32>
    %476 = tpu.matmul %473, %475, %cst_173 {dimension_numbers = #tpu.dot_dimension_numbers<[1], [0], [0], [1], [0, 0, 1, 1], [], []>} : vector<34x32xbf16>, vector<32x64xbf16>, vector<34x64xf32> -> vector<34x64xf32>
    %c1_174 = arith.constant 1 : index
    %c0_175 = arith.constant 0 : index
    %c0_176 = arith.constant 0 : index
    %477 = vector.load %arg10[%c1_174, %c0_175, %c0_176] : memref<2x1x64xf32, #tpu.memory_space<vmem>>, vector<1x1x64xf32>
    %478 = vector.shape_cast %477 : vector<1x1x64xf32> to vector<1x64xf32>
    %479 = vector.broadcast %478 : vector<1x64xf32> to vector<34x64xf32>
    %480 = arith.addf %476, %479 : vector<34x64xf32>
    %cst_177 = arith.constant 0.000000e+00 : f32
    %481 = vector.broadcast %cst_177 : f32 to vector<34x64xf32>
    %482 = arith.maximumf %480, %481 : vector<34x64xf32>
    %483 = arith.truncf %482 : vector<34x64xf32> to vector<34x64xbf16>
    %c1_178 = arith.constant 1 : index
    %c0_179 = arith.constant 0 : index
    %c0_180 = arith.constant 0 : index
    %484 = vector.load %arg11[%c1_178, %c0_179, %c0_180] : memref<2x64x32xbf16, #tpu.memory_space<vmem>>, vector<1x64x32xbf16>
    %485 = vector.shape_cast %484 : vector<1x64x32xbf16> to vector<64x32xbf16>
    %cst_181 = arith.constant dense<0.000000e+00> : vector<34x32xf32>
    %486 = tpu.matmul %483, %485, %cst_181 {dimension_numbers = #tpu.dot_dimension_numbers<[1], [0], [0], [1], [0, 0, 1, 1], [], []>} : vector<34x64xbf16>, vector<64x32xbf16>, vector<34x32xf32> -> vector<34x32xf32>
    %c1_182 = arith.constant 1 : index
    %c0_183 = arith.constant 0 : index
    %c0_184 = arith.constant 0 : index
    %487 = vector.load %arg12[%c1_182, %c0_183, %c0_184] : memref<2x1x32xf32, #tpu.memory_space<vmem>>, vector<1x1x32xf32>
    %488 = vector.shape_cast %487 : vector<1x1x32xf32> to vector<1x32xf32>
    %489 = vector.broadcast %488 : vector<1x32xf32> to vector<34x32xf32>
    %490 = arith.addf %486, %489 : vector<34x32xf32>
    %491 = arith.addf %472, %490 : vector<34x32xf32>
    %c1_185 = arith.constant 1 : index
    %c0_186 = arith.constant 0 : index
    %c0_187 = arith.constant 0 : index
    %492 = vector.load %arg13[%c1_185, %c0_186, %c0_187] : memref<2x2x32xf32, #tpu.memory_space<vmem>>, vector<1x2x32xf32>
    %493 = vector.shape_cast %492 : vector<1x2x32xf32> to vector<2x32xf32>
    %cst_188 = arith.constant dense<0.000000e+00> : vector<34xf32>
    %494 = vector.multi_reduction <add>, %491, %cst_188 [1] : vector<34x32xf32> to vector<34xf32>
    %495 = vector.shape_cast %494 : vector<34xf32> to vector<34x1xf32>
    %cst_189 = arith.constant 3.200000e+01 : f32
    %496 = vector.broadcast %cst_189 : f32 to vector<34x1xf32>
    %497 = arith.divf %495, %496 : vector<34x1xf32>
    %498 = vector.broadcast %497 : vector<34x1xf32> to vector<34x32xf32>
    %499 = arith.subf %491, %498 : vector<34x32xf32>
    %500 = arith.mulf %499, %499 : vector<34x32xf32>
    %cst_190 = arith.constant dense<0.000000e+00> : vector<34xf32>
    %501 = vector.multi_reduction <add>, %500, %cst_190 [1] : vector<34x32xf32> to vector<34xf32>
    %502 = vector.shape_cast %501 : vector<34xf32> to vector<34x1xf32>
    %cst_191 = arith.constant 3.200000e+01 : f32
    %503 = vector.broadcast %cst_191 : f32 to vector<34x1xf32>
    %504 = arith.divf %502, %503 : vector<34x1xf32>
    %505 = vector.broadcast %497 : vector<34x1xf32> to vector<34x32xf32>
    %506 = arith.subf %491, %505 : vector<34x32xf32>
    %cst_192 = arith.constant 9.99999974E-6 : f32
    %507 = vector.broadcast %cst_192 : f32 to vector<34x1xf32>
    %508 = arith.addf %504, %507 : vector<34x1xf32>
    %509 = math.rsqrt %508 : vector<34x1xf32>
    %510 = vector.broadcast %509 : vector<34x1xf32> to vector<34x32xf32>
    %511 = arith.mulf %506, %510 : vector<34x32xf32>
    %512 = vector.extract_strided_slice %493 {offsets = [0, 0], sizes = [1, 32], strides = [1, 1]} : vector<2x32xf32> to vector<1x32xf32>
    %513 = vector.broadcast %512 : vector<1x32xf32> to vector<34x32xf32>
    %514 = arith.mulf %511, %513 : vector<34x32xf32>
    %515 = vector.extract_strided_slice %493 {offsets = [1, 0], sizes = [1, 32], strides = [1, 1]} : vector<2x32xf32> to vector<1x32xf32>
    %516 = vector.broadcast %515 : vector<1x32xf32> to vector<34x32xf32>
    %517 = arith.addf %514, %516 : vector<34x32xf32>
    %518 = vector.extract_strided_slice %517 {offsets = [0, 0], sizes = [17, 32], strides = [1, 1]} : vector<34x32xf32> to vector<17x32xf32>
    %cst_193 = arith.constant dense<0.000000e+00> : vector<32xf32>
    %519 = vector.multi_reduction <add>, %518, %cst_193 [0] : vector<17x32xf32> to vector<32xf32>
    %520 = vector.shape_cast %519 : vector<32xf32> to vector<1x32xf32>
    %cst_194 = arith.constant 1.700000e+01 : f32
    %521 = vector.broadcast %cst_194 : f32 to vector<1x32xf32>
    %522 = arith.divf %520, %521 : vector<1x32xf32>
    %523 = vector.extract_strided_slice %517 {offsets = [17, 0], sizes = [17, 32], strides = [1, 1]} : vector<34x32xf32> to vector<17x32xf32>
    %cst_195 = arith.constant dense<0.000000e+00> : vector<32xf32>
    %524 = vector.multi_reduction <add>, %523, %cst_195 [0] : vector<17x32xf32> to vector<32xf32>
    %525 = vector.shape_cast %524 : vector<32xf32> to vector<1x32xf32>
    %cst_196 = arith.constant 1.700000e+01 : f32
    %526 = vector.broadcast %cst_196 : f32 to vector<1x32xf32>
    %527 = arith.divf %525, %526 : vector<1x32xf32>
    %528 = tpu.concatenate %522, %527 in 0 : vector<1x32xf32>, vector<1x32xf32> -> vector<2x32xf32>
    %c0_197 = arith.constant 0 : index
    %c0_198 = arith.constant 0 : index
    %529 = vector.load %arg14[%c0_197, %c0_198] : memref<2x32xf32, #tpu.memory_space<vmem>>, vector<2x32xf32>
    %cst_199 = arith.constant dense<0.000000e+00> : vector<2xf32>
    %530 = vector.multi_reduction <add>, %528, %cst_199 [1] : vector<2x32xf32> to vector<2xf32>
    %531 = vector.shape_cast %530 : vector<2xf32> to vector<2x1xf32>
    %cst_200 = arith.constant 3.200000e+01 : f32
    %532 = vector.broadcast %cst_200 : f32 to vector<2x1xf32>
    %533 = arith.divf %531, %532 : vector<2x1xf32>
    %534 = vector.broadcast %533 : vector<2x1xf32> to vector<2x32xf32>
    %535 = arith.subf %528, %534 : vector<2x32xf32>
    %536 = arith.mulf %535, %535 : vector<2x32xf32>
    %cst_201 = arith.constant dense<0.000000e+00> : vector<2xf32>
    %537 = vector.multi_reduction <add>, %536, %cst_201 [1] : vector<2x32xf32> to vector<2xf32>
    %538 = vector.shape_cast %537 : vector<2xf32> to vector<2x1xf32>
    %cst_202 = arith.constant 3.200000e+01 : f32
    %539 = vector.broadcast %cst_202 : f32 to vector<2x1xf32>
    %540 = arith.divf %538, %539 : vector<2x1xf32>
    %541 = vector.broadcast %533 : vector<2x1xf32> to vector<2x32xf32>
    %542 = arith.subf %528, %541 : vector<2x32xf32>
    %cst_203 = arith.constant 9.99999974E-6 : f32
    %543 = vector.broadcast %cst_203 : f32 to vector<2x1xf32>
    %544 = arith.addf %540, %543 : vector<2x1xf32>
    %545 = math.rsqrt %544 : vector<2x1xf32>
    %546 = vector.broadcast %545 : vector<2x1xf32> to vector<2x32xf32>
    %547 = arith.mulf %542, %546 : vector<2x32xf32>
    %548 = vector.extract_strided_slice %529 {offsets = [0, 0], sizes = [1, 32], strides = [1, 1]} : vector<2x32xf32> to vector<1x32xf32>
    %549 = vector.broadcast %548 : vector<1x32xf32> to vector<2x32xf32>
    %550 = arith.mulf %547, %549 : vector<2x32xf32>
    %551 = vector.extract_strided_slice %529 {offsets = [1, 0], sizes = [1, 32], strides = [1, 1]} : vector<2x32xf32> to vector<1x32xf32>
    %552 = vector.broadcast %551 : vector<1x32xf32> to vector<2x32xf32>
    %553 = arith.addf %550, %552 : vector<2x32xf32>
    %554 = arith.truncf %553 : vector<2x32xf32> to vector<2x32xbf16>
    %c0_204 = arith.constant 0 : index
    %c0_205 = arith.constant 0 : index
    %555 = vector.load %arg15[%c0_204, %c0_205] : memref<32x10xbf16, #tpu.memory_space<vmem>>, vector<32x10xbf16>
    %cst_206 = arith.constant dense<0.000000e+00> : vector<2x10xf32>
    %556 = tpu.matmul %554, %555, %cst_206 {dimension_numbers = #tpu.dot_dimension_numbers<[1], [0], [0], [1], [0, 0, 1, 1], [], []>} : vector<2x32xbf16>, vector<32x10xbf16>, vector<2x10xf32> -> vector<2x10xf32>
    %c0_207 = arith.constant 0 : index
    %c0_208 = arith.constant 0 : index
    %557 = vector.load %arg16[%c0_207, %c0_208] : memref<1x10xf32, #tpu.memory_space<vmem>>, vector<1x10xf32>
    %558 = vector.broadcast %557 : vector<1x10xf32> to vector<2x10xf32>
    %559 = arith.addf %556, %558 : vector<2x10xf32>
    %c0_209 = arith.constant 0 : index
    %c0_210 = arith.constant 0 : index
    %c0_211 = arith.constant 0 : index
    %560 = vector.load %arg17[%c0_209, %c0_210, %c0_211] : memref<1x2x10xf32, #tpu.memory_space<vmem>>, vector<1x2x10xf32>
    %561 = vector.shape_cast %560 : vector<1x2x10xf32> to vector<2x10xf32>
    %562 = vector.shape_cast %559 : vector<2x10xf32> to vector<1x2x10xf32>
    tpu.vector_store %arg17[%c0_209, %c0_210, %c0_211], %562 {strides = array<i32>} : memref<1x2x10xf32, #tpu.memory_space<vmem>>, vector<1x2x10xf32>,
    return
  }
  func.func @transform_0(%arg0: i32) -> (i32, i32, i32) {
    %c0_i32 = arith.constant 0 : i32
    %c0_i32_0 = arith.constant 0 : i32
    %c0_i32_1 = arith.constant 0 : i32
    return %arg0, %c0_i32, %c0_i32_0 : i32, i32, i32
  }
  func.func @transform_1(%arg0: i32) -> (i32, i32) {
    %c0_i32 = arith.constant 0 : i32
    %c0_i32_0 = arith.constant 0 : i32
    %c0_i32_1 = arith.constant 0 : i32
    return %c0_i32, %c0_i32_0 : i32, i32
  }
  func.func @transform_2(%arg0: i32) -> (i32, i32) {
    %c0_i32 = arith.constant 0 : i32
    %c0_i32_0 = arith.constant 0 : i32
    %c0_i32_1 = arith.constant 0 : i32
    return %c0_i32, %c0_i32_0 : i32, i32
  }
  func.func @transform_3(%arg0: i32) -> (i32, i32, i32) {
    %c0_i32 = arith.constant 0 : i32
    %c0_i32_0 = arith.constant 0 : i32
    %c0_i32_1 = arith.constant 0 : i32
    %c0_i32_2 = arith.constant 0 : i32
    return %c0_i32, %c0_i32_0, %c0_i32_1 : i32, i32, i32
  }
  func.func @transform_4(%arg0: i32) -> (i32, i32, i32) {
    %c0_i32 = arith.constant 0 : i32
    %c0_i32_0 = arith.constant 0 : i32
    %c0_i32_1 = arith.constant 0 : i32
    %c0_i32_2 = arith.constant 0 : i32
    return %c0_i32, %c0_i32_0, %c0_i32_1 : i32, i32, i32
  }
  func.func @transform_5(%arg0: i32) -> (i32, i32, i32) {
    %c0_i32 = arith.constant 0 : i32
    %c0_i32_0 = arith.constant 0 : i32
    %c0_i32_1 = arith.constant 0 : i32
    %c0_i32_2 = arith.constant 0 : i32
    return %c0_i32, %c0_i32_0, %c0_i32_1 : i32, i32, i32
  }
  func.func @transform_6(%arg0: i32) -> (i32, i32, i32) {
    %c0_i32 = arith.constant 0 : i32
    %c0_i32_0 = arith.constant 0 : i32
    %c0_i32_1 = arith.constant 0 : i32
    %c0_i32_2 = arith.constant 0 : i32
    return %c0_i32, %c0_i32_0, %c0_i32_1 : i32, i32, i32
  }
  func.func @transform_7(%arg0: i32) -> (i32, i32, i32) {
    %c0_i32 = arith.constant 0 : i32
    %c0_i32_0 = arith.constant 0 : i32
    %c0_i32_1 = arith.constant 0 : i32
    %c0_i32_2 = arith.constant 0 : i32
    return %c0_i32, %c0_i32_0, %c0_i32_1 : i32, i32, i32
  }
  func.func @transform_8(%arg0: i32) -> (i32, i32, i32) {
    %c0_i32 = arith.constant 0 : i32
    %c0_i32_0 = arith.constant 0 : i32
    %c0_i32_1 = arith.constant 0 : i32
    %c0_i32_2 = arith.constant 0 : i32
    return %c0_i32, %c0_i32_0, %c0_i32_1 : i32, i32, i32
  }
  func.func @transform_9(%arg0: i32) -> (i32, i32, i32) {
    %c0_i32 = arith.constant 0 : i32
    %c0_i32_0 = arith.constant 0 : i32
    %c0_i32_1 = arith.constant 0 : i32
    %c0_i32_2 = arith.constant 0 : i32
    return %c0_i32, %c0_i32_0, %c0_i32_1 : i32, i32, i32
  }
  func.func @transform_10(%arg0: i32) -> (i32, i32, i32) {
    %c0_i32 = arith.constant 0 : i32
    %c0_i32_0 = arith.constant 0 : i32
    %c0_i32_1 = arith.constant 0 : i32
    %c0_i32_2 = arith.constant 0 : i32
    return %c0_i32, %c0_i32_0, %c0_i32_1 : i32, i32, i32
  }
  func.func @transform_11(%arg0: i32) -> (i32, i32, i32) {
    %c0_i32 = arith.constant 0 : i32
    %c0_i32_0 = arith.constant 0 : i32
    %c0_i32_1 = arith.constant 0 : i32
    %c0_i32_2 = arith.constant 0 : i32
    return %c0_i32, %c0_i32_0, %c0_i32_1 : i32, i32, i32
  }
  func.func @transform_12(%arg0: i32) -> (i32, i32, i32) {
    %c0_i32 = arith.constant 0 : i32
    %c0_i32_0 = arith.constant 0 : i32
    %c0_i32_1 = arith.constant 0 : i32
    %c0_i32_2 = arith.constant 0 : i32
    return %c0_i32, %c0_i32_0, %c0_i32_1 : i32, i32, i32
  }
  func.func @transform_13(%arg0: i32) -> (i32, i32) {
    %c0_i32 = arith.constant 0 : i32
    %c0_i32_0 = arith.constant 0 : i32
    %c0_i32_1 = arith.constant 0 : i32
    return %c0_i32, %c0_i32_0 : i32, i32
  }
  func.func @transform_14(%arg0: i32) -> (i32, i32) {
    %c0_i32 = arith.constant 0 : i32
    %c0_i32_0 = arith.constant 0 : i32
    %c0_i32_1 = arith.constant 0 : i32
    return %c0_i32, %c0_i32_0 : i32, i32
  }
  func.func @transform_15(%arg0: i32) -> (i32, i32) {
    %c0_i32 = arith.constant 0 : i32
    %c0_i32_0 = arith.constant 0 : i32
    %c0_i32_1 = arith.constant 0 : i32
    return %c0_i32, %c0_i32_0 : i32, i32
  }
  func.func @transform_16(%arg0: i32) -> (i32, i32, i32) {
    %c0_i32 = arith.constant 0 : i32
    %c0_i32_0 = arith.constant 0 : i32
    %c0_i32_1 = arith.constant 0 : i32
    return %arg0, %c0_i32, %c0_i32_0 : i32, i32, i32
  }
}

</mosaic_0001>

<llo_original>
// kernel: tile.9
$region0: #{tile.9}
  %s0 = inlined_call_operand.vmem [shape: f32[2,17,32], index: 0, kind: input, shape index: {}]
  %s1 = inlined_call_operand.vmem [shape: f32[34,32], index: 1, kind: output, shape index: {}]
  %v2 = vld [vmem:[%s0] sm:$0xff]
  %vm3 = vcmask 261120
  %4 = vst.msk [vmem:[%s1] sm:$0xff] %vm3, %v2
  %s5 = scalar_lea.vmem %s0, 8
  %v6 = vld [vmem:[%s5] sm:$0xff]
  %vm7 = vcmask 261120
  %s8 = scalar_lea.vmem %s1, 8
  %9 = vst.msk [vmem:[%s8] sm:$0xff] %vm7, %v6
  %s10 = scalar_lea.vmem %s0, 16
  %s11 = smov 3
  %v12 = vld [vmem:[%s10] ss:$8 sm:%s11]
  %vm13 = vcmask 261120
  %s14 = scalar_lea.vmem %s1, 16
  %15 = vst.msk [vmem:[%s14] sm:$0x3] %vm13, %v12
  %s16 = scalar_lea.vmem %s0, 25
  %v17 = vld [vmem:[%s16] sm:$0xff]
  %vm18 = vcmask 261120
  %s19 = scalar_lea.vmem %s1, 18
  %20 = vst.msk [vmem:[%s19] sm:$0xff] %vm18, %v17
  %s21 = scalar_lea.vmem %s0, 33
  %v22 = vld [vmem:[%s21] sm:$0xff]
  %vm23 = vcmask 261120
  %s24 = scalar_lea.vmem %s1, 26
  %25 = vst.msk [vmem:[%s24] sm:$0xff] %vm23, %v22

// kernel: vit_forward.1
$region0: #{vit_forward.1}
  #allocation0 [shape = 'u32[]', space=smem, size = 0x4, offset = 0x4, fixed_abs, tag = 'smem constant byte address 0x4 - core index']
  #allocation1 [shape = 'u32[72,128]{1,0:T(1,128)}', space=vmem, size = 0x9000, scoped, tag = 'internal scratch']
  #allocation2 [shape = 'f32[34,32]{1,0:T(8,128)}', space=vmem, size = 0x5000, scoped, tag = 'scratch operand']
  %s0 = inlined_call_operand.vmem [shape: bf16[1,34,64], index: 0, kind: input, shape index: {}]
  %s1 = inlined_call_operand.vmem [shape: bf16[64,32], index: 1, kind: input, shape index: {}]
  %s2 = inlined_call_operand.vmem [shape: f32[34,32], index: 2, kind: input, shape index: {}]
  %s3 = inlined_call_operand.vmem [shape: bf16[2,32,96], index: 3, kind: input, shape index: {}]
  %s4 = inlined_call_operand.vmem [shape: f32[2,1,96], index: 4, kind: input, shape index: {}]
  %s5 = inlined_call_operand.vmem [shape: bf16[2,32,32], index: 5, kind: input, shape index: {}]
  %s6 = inlined_call_operand.vmem [shape: f32[2,1,32], index: 6, kind: input, shape index: {}]
  %s7 = inlined_call_operand.vmem [shape: f32[2,2,32], index: 7, kind: input, shape index: {}]
  %s8 = inlined_call_operand.vmem [shape: bf16[2,32,64], index: 8, kind: input, shape index: {}]
  %s9 = inlined_call_operand.vmem [shape: f32[2,1,64], index: 9, kind: input, shape index: {}]
  %s10 = inlined_call_operand.vmem [shape: bf16[2,64,32], index: 10, kind: input, shape index: {}]
  %s11 = inlined_call_operand.vmem [shape: f32[2,1,32], index: 11, kind: input, shape index: {}]
  %s12 = inlined_call_operand.vmem [shape: f32[2,2,32], index: 12, kind: input, shape index: {}]
  %s13 = inlined_call_operand.vmem [shape: f32[2,32], index: 13, kind: input, shape index: {}]
  %s14 = inlined_call_operand.vmem [shape: bf16[32,10], index: 14, kind: input, shape index: {}]
  %s15 = inlined_call_operand.vmem [shape: f32[1,10], index: 15, kind: input, shape index: {}]
  %s16 = inlined_call_operand.hbm [shape: f32[1,2,10], index: 16, kind: output, shape index: {}]
  %s17 = sld [smem:[#allocation0]]
  $region74: #{vit_forward.1} parent=0
    _
  %s19 = ssub.s32 1, %s17
  %s20 = scalar_select 0, %s19, %s17
  $region1: #{vit_forward.1} parent=0
    #allocation3 [shape = 'u8[1024]{0}', space=vmem, size = 0x400, scoped, tag = 'output window, operand 0, single buffered']
    #allocation4 [shape = 's32[1]{0}', space=sflag, size = 0x4, scoped, tag = 'scoped memory for vit_forward.1']
    %21 = vsyncpa [#allocation4], 0
    // Predicated region
    $region2: #{vit_forward.1} parent=1 // pred_check
      _
    $region3: #{vit_forward.1} parent=1 // pred_check_branch
      %23 = sbr.rel (0) target = $region5
    $region4: #{vit_forward.1} parent=1 // pred_region
      _
    $region5: #{vit_forward.1} parent=1 // pred_fallthru
      _
    // Predicated region
    $region6: #{vit_forward.1} parent=1 // pred_check
      _
    $region7: #{vit_forward.1} parent=1 // pred_check_branch
      %25 = sbr.rel (0) target = $region9
    $region8: #{vit_forward.1} parent=1 // pred_region
      _
    $region9: #{vit_forward.1} parent=1 // pred_fallthru
      _
    // Predicated region
    $region10: #{vit_forward.1} parent=1 // pred_check
      _
    $region11: #{vit_forward.1} parent=1 // pred_check_branch
      %27 = sbr.rel (0) target = $region13
    $region12: #{vit_forward.1} parent=1 // pred_region
      _
    $region13: #{vit_forward.1} parent=1 // pred_fallthru
      _
    // Predicated region
    $region14: #{vit_forward.1} parent=1 // pred_check
      _
    $region15: #{vit_forward.1} parent=1 // pred_check_branch
      %29 = sbr.rel (0) target = $region17
    $region16: #{vit_forward.1} parent=1 // pred_region
      _
    $region17: #{vit_forward.1} parent=1 // pred_fallthru
      _
    // Predicated region
    $region18: #{vit_forward.1} parent=1 // pred_check
      _
    $region19: #{vit_forward.1} parent=1 // pred_check_branch
      %31 = sbr.rel (0) target = $region21
    $region20: #{vit_forward.1} parent=1 // pred_region
      _
    $region21: #{vit_forward.1} parent=1 // pred_fallthru
      _
    // Predicated region
    $region22: #{vit_forward.1} parent=1 // pred_check
      _
    $region23: #{vit_forward.1} parent=1 // pred_check_branch
      %33 = sbr.rel (0) target = $region25
    $region24: #{vit_forward.1} parent=1 // pred_region
      _
    $region25: #{vit_forward.1} parent=1 // pred_fallthru
      _
    // Predicated region
    $region26: #{vit_forward.1} parent=1 // pred_check
      _
    $region27: #{vit_forward.1} parent=1 // pred_check_branch
      %35 = sbr.rel (0) target = $region29
    $region28: #{vit_forward.1} parent=1 // pred_region
      _
    $region29: #{vit_forward.1} parent=1 // pred_fallthru
      _
    // Predicated region
    $region30: #{vit_forward.1} parent=1 // pred_check
      _
    $region31: #{vit_forward.1} parent=1 // pred_check_branch
      %37 = sbr.rel (0) target = $region33
    $region32: #{vit_forward.1} parent=1 // pred_region
      _
    $region33: #{vit_forward.1} parent=1 // pred_fallthru
      _
    // Predicated region
    $region34: #{vit_forward.1} parent=1 // pred_check
      _
    $region35: #{vit_forward.1} parent=1 // pred_check_branch
      %39 = sbr.rel (0) target = $region37
    $region36: #{vit_forward.1} parent=1 // pred_region
      _
    $region37: #{vit_forward.1} parent=1 // pred_fallthru
      _
    // Predicated region
    $region38: #{vit_forward.1} parent=1 // pred_check
      _
    $region39: #{vit_forward.1} parent=1 // pred_check_branch
      %41 = sbr.rel (0) target = $region41
    $region40: #{vit_forward.1} parent=1 // pred_region
      _
    $region41: #{vit_forward.1} parent=1 // pred_fallthru
      _
    // Predicated region
    $region42: #{vit_forward.1} parent=1 // pred_check
      _
    $region43: #{vit_forward.1} parent=1 // pred_check_branch
      %43 = sbr.rel (0) target = $region45
    $region44: #{vit_forward.1} parent=1 // pred_region
      _
    $region45: #{vit_forward.1} parent=1 // pred_fallthru
      _
    // Predicated region
    $region46: #{vit_forward.1} parent=1 // pred_check
      _
    $region47: #{vit_forward.1} parent=1 // pred_check_branch
      %45 = sbr.rel (0) target = $region49
    $region48: #{vit_forward.1} parent=1 // pred_region
      _
    $region49: #{vit_forward.1} parent=1 // pred_fallthru
      _
    // Predicated region
    $region50: #{vit_forward.1} parent=1 // pred_check
      _
    $region51: #{vit_forward.1} parent=1 // pred_check_branch
      %47 = sbr.rel (0) target = $region53
    $region52: #{vit_forward.1} parent=1 // pred_region
      _
    $region53: #{vit_forward.1} parent=1 // pred_fallthru
      _
    // Predicated region
    $region54: #{vit_forward.1} parent=1 // pred_check
      _
    $region55: #{vit_forward.1} parent=1 // pred_check_branch
      %49 = sbr.rel (0) target = $region57
    $region56: #{vit_forward.1} parent=1 // pred_region
      _
    $region57: #{vit_forward.1} parent=1 // pred_fallthru
      _
    // Predicated region
    $region58: #{vit_forward.1} parent=1 // pred_check
      _
    $region59: #{vit_forward.1} parent=1 // pred_check_branch
      %51 = sbr.rel (0) target = $region61
    $region60: #{vit_forward.1} parent=1 // pred_region
      _
    $region61: #{vit_forward.1} parent=1 // pred_fallthru
      _
    // Predicated region
    $region62: #{vit_forward.1} parent=1 // pred_check
      _
    $region63: #{vit_forward.1} parent=1 // pred_check_branch
      %53 = sbr.rel (0) target = $region65
    $region64: #{vit_forward.1} parent=1 // pred_region
      _
    $region65: #{vit_forward.1} parent=1 // pred_fallthru
      _
    %v55 = vld [vmem:[%s0] sm:$0xf]
    %v56 = vld [vmem:[%s0 + $0x4] sm:$0xf]
    %v57 = vld [vmem:[%s0 + $0x8] sm:$0xf]
    %v58 = vld [vmem:[%s0 + $0xc] sm:$0xf]
    %v59 = vld [vmem:[%s0 + $0x10] sm:$0x1]
    %v60 = vld [vmem:[%s1] sm:$0xf]
    %v61 = vld [vmem:[%s1 + $0x4] sm:$0xf]
    %v62 = vld [vmem:[%s1 + $0x8] sm:$0xf]
    %v63 = vld [vmem:[%s1 + $0xc] sm:$0xf]
    %v64 = vld [vmem:[%s1 + $0x10] sm:$0xf]
    %v65 = vld [vmem:[%s1 + $0x14] sm:$0xf]
    %v66 = vld [vmem:[%s1 + $0x18] sm:$0xf]
    %v67 = vld [vmem:[%s1 + $0x1c] sm:$0xf]
    %v68 = vld [vmem:[%s2] sm:$0xff]
    %v69 = vld [vmem:[%s2 + $0x8] sm:$0xff]
    %v70 = vld [vmem:[%s2 + $0x10] sm:$0xff]
    %v71 = vld [vmem:[%s2 + $0x18] sm:$0xff]
    %v72 = vld [vmem:[%s2 + $0x20] sm:$0x3]
    %v78 = vunpack.c.l.b16 %v55
    %v79 = vunpack.c.l.b16 %v56
    %v80 = vunpack.c.l.b16 %v57
    %v81 = vunpack.c.l.b16 %v58
    %v82 = vunpack.c.l.b16 %v59
    %v83 = vpack.c.b16 %v79, %v78
    %v84 = vpack.c.b16 %v81, %v80
    %v85 = vpack.c.b16 %v82, %v82
    %v94 = vunpack.c.l.b16 %v60
    %v95 = vunpack.c.l.b16 %v61
    %v96 = vunpack.c.l.b16 %v62
    %v97 = vunpack.c.l.b16 %v63
    %v98 = vunpack.c.l.b16 %v64
    %v99 = vunpack.c.l.b16 %v65
    %v100 = vunpack.c.l.b16 %v66
    %v101 = vunpack.c.l.b16 %v67
    %v102 = vpack.c.b16 %v95, %v94
    %v103 = vpack.c.b16 %v97, %v96
    %v104 = vpack.c.b16 %v99, %v98
    %v105 = vpack.c.b16 %v101, %v100
    %vm110 = vcmask 523264
    %v112 = vsel %vm110, %v83, 0
    %v115 = vsel %vm110, %v84, 0
    %v118 = vsel %vm110, %v85, 0
    %120 = vmatpush.bf16.msra.mxu0 0
    %121 = vmatpush.bf16.msra.mxu0 0
    %122 = vmatpush.bf16.msra.mxu0 0
    %123 = vmatpush.bf16.msra.mxu0 0
    %124 = vmatpush.bf16.msra.mxu0 %v105
    %125 = vmatpush.bf16.msra.mxu0 %v104
    %126 = vmatpush.bf16.msra.mxu0 %v103
    %127 = vmatpush.bf16.msra.mxu0 %v102
    %128 = vmatmul.bf16.gmra.mxu0 %v112
    %v129 = vpop.f32.mrf.mxu0
    %v130 = vadd.f32 %v68, %v129
    %v131 = vpop.f32.mrf.mxu0
    %v132 = vadd.f32 %v69, %v131
    %133 = vmatmul.bf16.gmra.mxu0 %v115
    %v134 = vpop.f32.mrf.mxu0
    %v135 = vadd.f32 %v70, %v134
    %v136 = vpop.f32.mrf.mxu0
    %v137 = vadd.f32 %v71, %v136
    %138 = vmatmul.bf16.gmra.mxu0 %v118
    %v139 = vpop.f32.mrf.mxu0
    %v140 = vadd.f32 %v72, %v139
    %v141 = vpop.f32.mrf.mxu0
    %142 = vdwg.mxu0
    %v143 = vpack.c.bf16 %v132, %v130
    %v144 = vpack.c.bf16 %v137, %v135
    %v145 = vpack.c.bf16 %v140, %v140
    %v146 = vld [vmem:[%s3] sm:$0xf]
    %v147 = vld [vmem:[%s3 + $0x4] sm:$0xf]
    %v148 = vld [vmem:[%s3 + $0x8] sm:$0xf]
    %v149 = vld [vmem:[%s3 + $0xc] sm:$0xf]
    %v150 = vld [vmem:[%s4] sm:$0x1]
    %v152 = vperm.slane %v150, 0
    %v158 = vunpack.c.l.b16 %v146
    %v159 = vunpack.c.l.b16 %v147
    %v160 = vunpack.c.l.b16 %v148
    %v161 = vunpack.c.l.b16 %v149
    %v162 = vpack.c.b16 %v159, %v158
    %v163 = vpack.c.b16 %v161, %v160
    %vm166 = vcmask 261120
    %v168 = vsel %vm166, %v143, 0
    %v171 = vsel %vm166, %v144, 0
    %v174 = vsel %vm166, %v145, 0
    %176 = vmatpush.bf16.msra.mxu0 0
    %177 = vmatpush.bf16.msra.mxu0 0
    %178 = vmatpush.bf16.msra.mxu0 0
    %179 = vmatpush.bf16.msra.mxu0 0
    %180 = vmatpush.bf16.msra.mxu0 0
    %181 = vmatpush.bf16.msra.mxu0 0
    %182 = vmatpush.bf16.msra.mxu0 %v163
    %183 = vmatpush.bf16.msra.mxu0 %v162
    %184 = vmatmul.bf16.gmra.mxu0 %v168
    %v185 = vpop.f32.mrf.mxu0
    %v186 = vadd.f32 %v152, %v185
    %v187 = vpop.f32.mrf.mxu0
    %v188 = vadd.f32 %v152, %v187
    %189 = vmatmul.bf16.gmra.mxu0 %v171
    %v190 = vpop.f32.mrf.mxu0
    %v191 = vadd.f32 %v152, %v190
    %v192 = vpop.f32.mrf.mxu0
    %v193 = vadd.f32 %v152, %v192
    %194 = vmatmul.bf16.gmra.mxu0 %v174
    %v195 = vpop.f32.mrf.mxu0
    %v196 = vadd.f32 %v152, %v195
    %v197 = vpop.f32.mrf.mxu0
    %198 = vdwg.mxu0
    %v199 = vpack.c.bf16 %v186, %v186
    %v200 = vpack.c.bf16 %v188, %v188
    %v201 = vpack.c.bf16 %v191, %v191
    %205 = vrot.lane.b32.xlu0 %v186, 96
    %v206 = vpop.permute.xlu0 %205
    %207 = vrot.lane.b32.xlu0 %v188, 96
    %v208 = vpop.permute.xlu0 %207
    %209 = vrot.lane.b32.xlu0 %v191, 96
    %v210 = vpop.permute.xlu0 %209
    %214 = vxpose.xlu0.b32.start [1/16] %v206, 128
    %215 = vxpose.xlu0.b32.cont [2/16] %v208, 128
    %216 = vxpose.xlu0.b32.cont [3/16] %v210, 128
    %217 = vxpose.xlu0.b32.cont [4/16] 0.0, 128
    %218 = vxpose.xlu0.b32.cont [5/16] 0.0, 128
    %219 = vxpose.xlu0.b32.cont [6/16] 0.0, 128
    %220 = vxpose.xlu0.b32.cont [7/16] 0.0, 128
    %221 = vxpose.xlu0.b32.cont [8/16] 0.0, 128
    %222 = vxpose.xlu0.b32.cont [9/16] 0.0, 128
    %223 = vxpose.xlu0.b32.cont [10/16] 0.0, 128
    %224 = vxpose.xlu0.b32.cont [11/16] 0.0, 128
    %225 = vxpose.xlu0.b32.cont [12/16] 0.0, 128
    %226 = vxpose.xlu0.b32.cont [13/16] 0.0, 128
    %227 = vxpose.xlu0.b32.cont [14/16] 0.0, 128
    %228 = vxpose.xlu0.b32.cont [15/16] 0.0, 128
    %229 = vxpose.xlu0.b32.end [16/16] 0.0, 128
    %v230 = vpop.trf.xlu0
    %v231 = vpop.trf.xlu0
    %v232 = vpop.trf.xlu0
    %v233 = vpop.trf.xlu0
    %v234 = vpop.trf.xlu0
    %v235 = vpop.trf.xlu0
    %v236 = vpop.trf.xlu0
    %v237 = vpop.trf.xlu0
    %v238 = vpop.trf.xlu0
    %v239 = vpop.trf.xlu0
    %v240 = vpop.trf.xlu0
    %v241 = vpop.trf.xlu0
    %v242 = vpop.trf.xlu0
    %v243 = vpop.trf.xlu0
    %v244 = vpop.trf.xlu0
    %v245 = vpop.trf.xlu0
    %v246 = vpack.c.bf16 %v230, %v230
    %v247 = vpack.c.bf16 %v231, %v231
    %v248 = vpack.c.bf16 %v232, %v232
    %v249 = vpack.c.bf16 %v233, %v233
    %v253 = vunpack.c.l.b16 %v199
    %v254 = vunpack.c.l.b16 %v200
    %v255 = vunpack.c.l.b16 %v201
    %v256 = vpack.c.b16 %v254, %v253
    %v257 = vpack.c.b16 %v255, %v255
    %vm258 = vcmask 64512
    %v260 = vsel %vm258, %v256, 0
    %v263 = vsel %vm258, %v257, 0
    %vm265 = vcmask 1043456
    %v267 = vsel %vm265, %v246, 0
    %269 = vmatpush.bf16.msra.mxu0 0
    %270 = vmatpush.bf16.msra.mxu0 0
    %271 = vmatpush.bf16.msra.mxu0 0
    %272 = vmatpush.bf16.msra.mxu0 0
    %273 = vmatpush.bf16.msra.mxu0 0
    %274 = vmatpush.bf16.msra.mxu0 0
    %275 = vmatpush.bf16.msra.mxu0 0
    %276 = vmatpush.bf16.msra.mxu0 %v267
    %277 = vmatmul.bf16.gmra.mxu0 %v260
    %v278 = vpop.f32.mrf.mxu0
    %v279 = vadd.f32 0.0, %v278
    %v280 = vpop.f32.mrf.mxu0
    %v281 = vadd.f32 0.0, %v280
    %282 = vmatmul.bf16.gmra.mxu0 %v263
    %v283 = vpop.f32.mrf.mxu0
    %v284 = vadd.f32 0.0, %v283
    %v285 = vpop.f32.mrf.mxu0
    %286 = vdwg.mxu0
    %v287 = vmul.f32 %v279, 0.35355338
    %v288 = vmul.f32 %v281, 0.35355338
    %v289 = vmul.f32 %v284, 0.35355338
    %vm290 = vcmask 138240
    %v291 = vsel %vm290, %v287, -inf
    %292 = vmax.xlane.f32.xlu0 %v291
    %v293 = vpop.xlane.xlu0 %292
    %v294 = vsel %vm290, %v288, -inf
    %295 = vmax.xlane.f32.xlu0 %v294
    %v296 = vpop.xlane.xlu0 %295
    %vm297 = vcmask 131072
    %v298 = vsel %vm297, %v289, -inf
    %299 = vmax.xlane.f32.xlu0 %v298
    %v300 = vpop.xlane.xlu0 %299
    %v301 = vsub.f32 %v287, %v293
    %v302 = vsub.f32 %v288, %v296
    %v303 = vsub.f32 %v289, %v300
    %v304 = vmul.f32 %v301, 1.442695
    %v305 = vpow.pop %v304
    %v306 = vmul.f32 %v302, 1.442695
    %v307 = vpow.pop %v306
    %v308 = vmul.f32 %v303, 1.442695
    %v309 = vpow.pop %v308
    %v310 = vsel %vm290, %v305, 0.0
    %311 = vadd.xlane.f32.xlu0 %v310
    %v312 = vpop.xlane.xlu0 %311
    %v313 = vsel %vm290, %v307, 0.0
    %314 = vadd.xlane.f32.xlu0 %v313
    %v315 = vpop.xlane.xlu0 %314
    %v316 = vsel %vm297, %v309, 0.0
    %317 = vadd.xlane.f32.xlu0 %v316
    %v318 = vpop.xlane.xlu0 %317
    %v319 = vrcp.pop %v312
    %v320 = vrcp.pop %v315
    %v321 = vrcp.pop %v318
    %v322 = vmul.f32 %v305, %v319
    %v323 = vmul.f32 %v307, %v320
    %v324 = vmul.f32 %v309, %v321
    %v325 = vpack.c.bf16 %v323, %v322
    %v326 = vpack.c.bf16 %v324, %v324
    %327 = vrot.lane.b32.xlu0 %v256, 64
    %v328 = vpop.permute.xlu0 %327
    %329 = vrot.lane.b32.xlu0 %v257, 64
    %v330 = vpop.permute.xlu0 %329
    %v333 = vsel %vm290, %v325, 0
    %v336 = vsel %vm290, %v326, 0
    %vm338 = vcmask 1040384
    %v339 = vsel 0, 4294967295, 65535
    %v340 = vsel %vm338, %v339, 0
    %v342 = vand.u32 %v330, %v340
    %344 = vmatpush.bf16.msra.mxu0 0
    %345 = vmatpush.bf16.msra.mxu0 0
    %346 = vmatpush.bf16.msra.mxu0 0
    %347 = vmatpush.bf16.msra.mxu0 0
    %348 = vmatpush.bf16.msra.mxu0 0
    %349 = vmatpush.bf16.msra.mxu0 0
    %350 = vmatpush.bf16.msra.mxu0 %v342
    %351 = vmatpush.bf16.msra.mxu0 %v328
    %352 = vmatmul.bf16.gmra.mxu0 %v333
    %v353 = vpop.f32.mrf.mxu0
    %v354 = vadd.f32 0.0, %v353
    %v355 = vpop.f32.mrf.mxu0
    %v356 = vadd.f32 0.0, %v355
    %357 = vmatmul.bf16.gmra.mxu0 %v336
    %v358 = vpop.f32.mrf.mxu0
    %v359 = vadd.f32 0.0, %v358
    %v360 = vpop.f32.mrf.mxu0
    %361 = vdwg.mxu0
    %362 = vst.msk [vmem:[#allocation2] sm:$0xff] %vm258, %v354
    %363 = vst.msk [vmem:[#allocation2 + $0x8] sm:$0xff] %vm258, %v356
    %vm364 = vcmask 57344
    %365 = vst.msk [vmem:[#allocation2 + $0x10] sm:$0x1] %vm364, %v359
    %366 = vrot.lane.b32.xlu0 %v256, 120
    %v367 = vpop.permute.xlu0 %366
    %368 = vrot.lane.b32.xlu0 %v257, 120
    %v369 = vpop.permute.xlu0 %368
    %v371 = vsel %vm258, %v367, 0
    %v374 = vsel %vm258, %v369, 0
    %v377 = vsel %vm265, %v247, 0
    %379 = vmatpush.bf16.msra.mxu0 0
    %380 = vmatpush.bf16.msra.mxu0 0
    %381 = vmatpush.bf16.msra.mxu0 0
    %382 = vmatpush.bf16.msra.mxu0 0
    %383 = vmatpush.bf16.msra.mxu0 0
    %384 = vmatpush.bf16.msra.mxu0 0
    %385 = vmatpush.bf16.msra.mxu0 0
    %386 = vmatpush.bf16.msra.mxu0 %v377
    %387 = vmatmul.bf16.gmra.mxu0 %v371
    %v388 = vpop.f32.mrf.mxu0
    %v389 = vadd.f32 0.0, %v388
    %v390 = vpop.f32.mrf.mxu0
    %v391 = vadd.f32 0.0, %v390
    %392 = vmatmul.bf16.gmra.mxu0 %v374
    %v393 = vpop.f32.mrf.mxu0
    %v394 = vadd.f32 0.0, %v393
    %v395 = vpop.f32.mrf.mxu0
    %396 = vdwg.mxu0
    %v397 = vmul.f32 %v389, 0.35355338
    %v398 = vmul.f32 %v391, 0.35355338
    %v399 = vmul.f32 %v394, 0.35355338
    %v400 = vsel %vm290, %v397, -inf
    %401 = vmax.xlane.f32.xlu0 %v400
    %v402 = vpop.xlane.xlu0 %401
    %v403 = vsel %vm290, %v398, -inf
    %404 = vmax.xlane.f32.xlu0 %v403
    %v405 = vpop.xlane.xlu0 %404
    %v406 = vsel %vm297, %v399, -inf
    %407 = vmax.xlane.f32.xlu0 %v406
    %v408 = vpop.xlane.xlu0 %407
    %v409 = vsub.f32 %v397, %v402
    %v410 = vsub.f32 %v398, %v405
    %v411 = vsub.f32 %v399, %v408
    %v412 = vmul.f32 %v409, 1.442695
    %v413 = vpow.pop %v412
    %v414 = vmul.f32 %v410, 1.442695
    %v415 = vpow.pop %v414
    %v416 = vmul.f32 %v411, 1.442695
    %v417 = vpow.pop %v416
    %v418 = vsel %vm290, %v413, 0.0
    %419 = vadd.xlane.f32.xlu0 %v418
    %v420 = vpop.xlane.xlu0 %419
    %v421 = vsel %vm290, %v415, 0.0
    %422 = vadd.xlane.f32.xlu0 %v421
    %v423 = vpop.xlane.xlu0 %422
    %v424 = vsel %vm297, %v417, 0.0
    %425 = vadd.xlane.f32.xlu0 %v424
    %v426 = vpop.xlane.xlu0 %425
    %v427 = vrcp.pop %v420
    %v428 = vrcp.pop %v423
    %v429 = vrcp.pop %v426
    %v430 = vmul.f32 %v413, %v427
    %v431 = vmul.f32 %v415, %v428
    %v432 = vmul.f32 %v417, %v429
    %v433 = vpack.c.bf16 %v431, %v430
    %v434 = vpack.c.bf16 %v432, %v432
    %435 = vrot.lane.b32.xlu0 %v256, 56
    %v436 = vpop.permute.xlu0 %435
    %437 = vrot.lane.b32.xlu0 %v257, 56
    %v438 = vpop.permute.xlu0 %437
    %v441 = vsel %vm290, %v433, 0
    %v444 = vsel %vm290, %v434, 0
    %v447 = vand.u32 %v438, %v340
    %449 = vmatpush.bf16.msra.mxu0 0
    %450 = vmatpush.bf16.msra.mxu0 0
    %451 = vmatpush.bf16.msra.mxu0 0
    %452 = vmatpush.bf16.msra.mxu0 0
    %453 = vmatpush.bf16.msra.mxu0 0
    %454 = vmatpush.bf16.msra.mxu0 0
    %455 = vmatpush.bf16.msra.mxu0 %v447
    %456 = vmatpush.bf16.msra.mxu0 %v436
    %457 = vmatmul.bf16.gmra.mxu0 %v441
    %v458 = vpop.f32.mrf.mxu0
    %v459 = vadd.f32 0.0, %v458
    %v460 = vpop.f32.mrf.mxu0
    %v461 = vadd.f32 0.0, %v460
    %462 = vmatmul.bf16.gmra.mxu0 %v444
    %v463 = vpop.f32.mrf.mxu0
    %v464 = vadd.f32 0.0, %v463
    %v465 = vpop.f32.mrf.mxu0
    %466 = vdwg.mxu0
    %470 = vrot.lane.b32.xlu0 %v459, 8
    %v471 = vpop.permute.xlu0 %470
    %472 = vrot.lane.b32.xlu0 %v461, 8
    %v473 = vpop.permute.xlu0 %472
    %474 = vrot.lane.b32.xlu0 %v464, 8
    %v475 = vpop.permute.xlu0 %474
    %vm479 = vcmask 130112
    %480 = vst.msk [vmem:[#allocation2] sm:$0xff] %vm479, %v471
    %481 = vst.msk [vmem:[#allocation2 + $0x8] sm:$0xff] %vm479, %v473
    %vm482 = vcmask 122944
    %483 = vst.msk [vmem:[#allocation2 + $0x10] sm:$0x1] %vm482, %v475
    %484 = vrot.lane.b32.xlu0 %v256, 112
    %v485 = vpop.permute.xlu0 %484
    %486 = vrot.lane.b32.xlu0 %v257, 112
    %v487 = vpop.permute.xlu0 %486
    %v489 = vsel %vm258, %v485, 0
    %v492 = vsel %vm258, %v487, 0
    %v495 = vsel %vm265, %v248, 0
    %497 = vmatpush.bf16.msra.mxu0 0
    %498 = vmatpush.bf16.msra.mxu0 0
    %499 = vmatpush.bf16.msra.mxu0 0
    %500 = vmatpush.bf16.msra.mxu0 0
    %501 = vmatpush.bf16.msra.mxu0 0
    %502 = vmatpush.bf16.msra.mxu0 0
    %503 = vmatpush.bf16.msra.mxu0 0
    %504 = vmatpush.bf16.msra.mxu0 %v495
    %505 = vmatmul.bf16.gmra.mxu0 %v489
    %v506 = vpop.f32.mrf.mxu0
    %v507 = vadd.f32 0.0, %v506
    %v508 = vpop.f32.mrf.mxu0
    %v509 = vadd.f32 0.0, %v508
    %510 = vmatmul.bf16.gmra.mxu0 %v492
    %v511 = vpop.f32.mrf.mxu0
    %v512 = vadd.f32 0.0, %v511
    %v513 = vpop.f32.mrf.mxu0
    %514 = vdwg.mxu0
    %v515 = vmul.f32 %v507, 0.35355338
    %v516 = vmul.f32 %v509, 0.35355338
    %v517 = vmul.f32 %v512, 0.35355338
    %v518 = vsel %vm290, %v515, -inf
    %519 = vmax.xlane.f32.xlu0 %v518
    %v520 = vpop.xlane.xlu0 %519
    %v521 = vsel %vm290, %v516, -inf
    %522 = vmax.xlane.f32.xlu0 %v521
    %v523 = vpop.xlane.xlu0 %522
    %v524 = vsel %vm297, %v517, -inf
    %525 = vmax.xlane.f32.xlu0 %v524
    %v526 = vpop.xlane.xlu0 %525
    %v527 = vsub.f32 %v515, %v520
    %v528 = vsub.f32 %v516, %v523
    %v529 = vsub.f32 %v517, %v526
    %v530 = vmul.f32 %v527, 1.442695
    %v531 = vpow.pop %v530
    %v532 = vmul.f32 %v528, 1.442695
    %v533 = vpow.pop %v532
    %v534 = vmul.f32 %v529, 1.442695
    %v535 = vpow.pop %v534
    %v536 = vsel %vm290, %v531, 0.0
    %537 = vadd.xlane.f32.xlu0 %v536
    %v538 = vpop.xlane.xlu0 %537
    %v539 = vsel %vm290, %v533, 0.0
    %540 = vadd.xlane.f32.xlu0 %v539
    %v541 = vpop.xlane.xlu0 %540
    %v542 = vsel %vm297, %v535, 0.0
    %543 = vadd.xlane.f32.xlu0 %v542
    %v544 = vpop.xlane.xlu0 %543
    %v545 = vrcp.pop %v538
    %v546 = vrcp.pop %v541
    %v547 = vrcp.pop %v544
    %v548 = vmul.f32 %v531, %v545
    %v549 = vmul.f32 %v533, %v546
    %v550 = vmul.f32 %v535, %v547
    %v551 = vpack.c.bf16 %v549, %v548
    %v552 = vpack.c.bf16 %v550, %v550
    %553 = vrot.lane.b32.xlu0 %v256, 48
    %v554 = vpop.permute.xlu0 %553
    %555 = vrot.lane.b32.xlu0 %v257, 48
    %v556 = vpop.permute.xlu0 %555
    %v559 = vsel %vm290, %v551, 0
    %v562 = vsel %vm290, %v552, 0
    %v565 = vand.u32 %v556, %v340
    %567 = vmatpush.bf16.msra.mxu0 0
    %568 = vmatpush.bf16.msra.mxu0 0
    %569 = vmatpush.bf16.msra.mxu0 0
    %570 = vmatpush.bf16.msra.mxu0 0
    %571 = vmatpush.bf16.msra.mxu0 0
    %572 = vmatpush.bf16.msra.mxu0 0
    %573 = vmatpush.bf16.msra.mxu0 %v565
    %574 = vmatpush.bf16.msra.mxu0 %v554
    %575 = vmatmul.bf16.gmra.mxu0 %v559
    %v576 = vpop.f32.mrf.mxu0
    %v577 = vadd.f32 0.0, %v576
    %v578 = vpop.f32.mrf.mxu0
    %v579 = vadd.f32 0.0, %v578
    %580 = vmatmul.bf16.gmra.mxu0 %v562
    %v581 = vpop.f32.mrf.mxu0
    %v582 = vadd.f32 0.0, %v581
    %v583 = vpop.f32.mrf.mxu0
    %584 = vdwg.mxu0
    %588 = vrot.lane.b32.xlu0 %v577, 16
    %v589 = vpop.permute.xlu0 %588
    %590 = vrot.lane.b32.xlu0 %v579, 16
    %v591 = vpop.permute.xlu0 %590
    %592 = vrot.lane.b32.xlu0 %v582, 16
    %v593 = vpop.permute.xlu0 %592
    %vm597 = vcmask 195712
    %598 = vst.msk [vmem:[#allocation2] sm:$0xff] %vm597, %v589
    %599 = vst.msk [vmem:[#allocation2 + $0x8] sm:$0xff] %vm597, %v591
    %vm600 = vcmask 188544
    %601 = vst.msk [vmem:[#allocation2 + $0x10] sm:$0x1] %vm600, %v593
    %602 = vrot.lane.b32.xlu0 %v256, 104
    %v603 = vpop.permute.xlu0 %602
    %604 = vrot.lane.b32.xlu0 %v257, 104
    %v605 = vpop.permute.xlu0 %604
    %v607 = vsel %vm258, %v603, 0
    %v610 = vsel %vm258, %v605, 0
    %v613 = vsel %vm265, %v249, 0
    %615 = vmatpush.bf16.msra.mxu0 0
    %616 = vmatpush.bf16.msra.mxu0 0
    %617 = vmatpush.bf16.msra.mxu0 0
    %618 = vmatpush.bf16.msra.mxu0 0
    %619 = vmatpush.bf16.msra.mxu0 0
    %620 = vmatpush.bf16.msra.mxu0 0
    %621 = vmatpush.bf16.msra.mxu0 0
    %622 = vmatpush.bf16.msra.mxu0 %v613
    %623 = vmatmul.bf16.gmra.mxu0 %v607
    %v624 = vpop.f32.mrf.mxu0
    %v625 = vadd.f32 0.0, %v624
    %v626 = vpop.f32.mrf.mxu0
    %v627 = vadd.f32 0.0, %v626
    %628 = vmatmul.bf16.gmra.mxu0 %v610
    %v629 = vpop.f32.mrf.mxu0
    %v630 = vadd.f32 0.0, %v629
    %v631 = vpop.f32.mrf.mxu0
    %632 = vdwg.mxu0
    %v633 = vmul.f32 %v625, 0.35355338
    %v634 = vmul.f32 %v627, 0.35355338
    %v635 = vmul.f32 %v630, 0.35355338
    %v636 = vsel %vm290, %v633, -inf
    %637 = vmax.xlane.f32.xlu0 %v636
    %v638 = vpop.xlane.xlu0 %637
    %v639 = vsel %vm290, %v634, -inf
    %640 = vmax.xlane.f32.xlu0 %v639
    %v641 = vpop.xlane.xlu0 %640
    %v642 = vsel %vm297, %v635, -inf
    %643 = vmax.xlane.f32.xlu0 %v642
    %v644 = vpop.xlane.xlu0 %643
    %v645 = vsub.f32 %v633, %v638
    %v646 = vsub.f32 %v634, %v641
    %v647 = vsub.f32 %v635, %v644
    %v648 = vmul.f32 %v645, 1.442695
    %v649 = vpow.pop %v648
    %v650 = vmul.f32 %v646, 1.442695
    %v651 = vpow.pop %v650
    %v652 = vmul.f32 %v647, 1.442695
    %v653 = vpow.pop %v652
    %v654 = vsel %vm290, %v649, 0.0
    %655 = vadd.xlane.f32.xlu0 %v654
    %v656 = vpop.xlane.xlu0 %655
    %v657 = vsel %vm290, %v651, 0.0
    %658 = vadd.xlane.f32.xlu0 %v657
    %v659 = vpop.xlane.xlu0 %658
    %v660 = vsel %vm297, %v653, 0.0
    %661 = vadd.xlane.f32.xlu0 %v660
    %v662 = vpop.xlane.xlu0 %661
    %v663 = vrcp.pop %v656
    %v664 = vrcp.pop %v659
    %v665 = vrcp.pop %v662
    %v666 = vmul.f32 %v649, %v663
    %v667 = vmul.f32 %v651, %v664
    %v668 = vmul.f32 %v653, %v665
    %v669 = vpack.c.bf16 %v667, %v666
    %v670 = vpack.c.bf16 %v668, %v668
    %671 = vrot.lane.b32.xlu0 %v256, 40
    %v672 = vpop.permute.xlu0 %671
    %673 = vrot.lane.b32.xlu0 %v257, 40
    %v674 = vpop.permute.xlu0 %673
    %v677 = vsel %vm290, %v669, 0
    %v680 = vsel %vm290, %v670, 0
    %v683 = vand.u32 %v674, %v340
    %685 = vmatpush.bf16.msra.mxu0 0
    %686 = vmatpush.bf16.msra.mxu0 0
    %687 = vmatpush.bf16.msra.mxu0 0
    %688 = vmatpush.bf16.msra.mxu0 0
    %689 = vmatpush.bf16.msra.mxu0 0
    %690 = vmatpush.bf16.msra.mxu0 0
    %691 = vmatpush.bf16.msra.mxu0 %v683
    %692 = vmatpush.bf16.msra.mxu0 %v672
    %693 = vmatmul.bf16.gmra.mxu0 %v677
    %v694 = vpop.f32.mrf.mxu0
    %v695 = vadd.f32 0.0, %v694
    %v696 = vpop.f32.mrf.mxu0
    %v697 = vadd.f32 0.0, %v696
    %698 = vmatmul.bf16.gmra.mxu0 %v680
    %v699 = vpop.f32.mrf.mxu0
    %v700 = vadd.f32 0.0, %v699
    %v701 = vpop.f32.mrf.mxu0
    %702 = vdwg.mxu0
    %706 = vrot.lane.b32.xlu0 %v695, 24
    %v707 = vpop.permute.xlu0 %706
    %708 = vrot.lane.b32.xlu0 %v697, 24
    %v709 = vpop.permute.xlu0 %708
    %710 = vrot.lane.b32.xlu0 %v700, 24
    %v711 = vpop.permute.xlu0 %710
    %vm715 = vcmask 261312
    %716 = vst.msk [vmem:[#allocation2] sm:$0xff] %vm715, %v707
    %717 = vst.msk [vmem:[#allocation2 + $0x8] sm:$0xff] %vm715, %v709
    %vm718 = vcmask 254144
    %719 = vst.msk [vmem:[#allocation2 + $0x10] sm:$0x1] %vm718, %v711
    %v720 = vpack.c.bf16 %v193, %v193
    %v721 = vpack.c.bf16 %v196, %v196
    %vm724 = vcmask 1046528
    %v725 = vrot.slane %v191, 1
    %v726 = vrot.slane %v193, 1
    %v727 = vsel %vm724, %v725, %v726
    %v728 = vrot.slane %v196, 1
    %v729 = vsel %vm724, %v726, %v728
    %730 = vrot.lane.b32.xlu0 %v727, 96
    %v731 = vpop.permute.xlu0 %730
    %732 = vrot.lane.b32.xlu0 %v729, 96
    %v733 = vpop.permute.xlu0 %732
    %734 = vrot.lane.b32.xlu0 %v728, 96
    %v735 = vpop.permute.xlu0 %734
    %739 = vxpose.xlu0.b32.start [1/16] %v731, 128
    %740 = vxpose.xlu0.b32.cont [2/16] %v733, 128
    %741 = vxpose.xlu0.b32.cont [3/16] %v735, 128
    %742 = vxpose.xlu0.b32.cont [4/16] 0.0, 128
    %743 = vxpose.xlu0.b32.cont [5/16] 0.0, 128
    %744 = vxpose.xlu0.b32.cont [6/16] 0.0, 128
    %745 = vxpose.xlu0.b32.cont [7/16] 0.0, 128
    %746 = vxpose.xlu0.b32.cont [8/16] 0.0, 128
    %747 = vxpose.xlu0.b32.cont [9/16] 0.0, 128
    %748 = vxpose.xlu0.b32.cont [10/16] 0.0, 128
    %749 = vxpose.xlu0.b32.cont [11/16] 0.0, 128
    %750 = vxpose.xlu0.b32.cont [12/16] 0.0, 128
    %751 = vxpose.xlu0.b32.cont [13/16] 0.0, 128
    %752 = vxpose.xlu0.b32.cont [14/16] 0.0, 128
    %753 = vxpose.xlu0.b32.cont [15/16] 0.0, 128
    %754 = vxpose.xlu0.b32.end [16/16] 0.0, 128
    %v755 = vpop.trf.xlu0
    %v756 = vpop.trf.xlu0
    %v757 = vpop.trf.xlu0
    %v758 = vpop.trf.xlu0
    %v759 = vpop.trf.xlu0
    %v760 = vpop.trf.xlu0
    %v761 = vpop.trf.xlu0
    %v762 = vpop.trf.xlu0
    %v763 = vpop.trf.xlu0
    %v764 = vpop.trf.xlu0
    %v765 = vpop.trf.xlu0
    %v766 = vpop.trf.xlu0
    %v767 = vpop.trf.xlu0
    %v768 = vpop.trf.xlu0
    %v769 = vpop.trf.xlu0
    %v770 = vpop.trf.xlu0
    %v771 = vpack.c.bf16 %v755, %v755
    %v772 = vpack.c.bf16 %v756, %v756
    %v773 = vpack.c.bf16 %v757, %v757
    %v774 = vpack.c.bf16 %v758, %v758
    %v777 = vunpack.c.l.b16 %v720
    %v778 = vunpack.c.l.b16 %v721
    %v779 = vpack.c.b16 %v777, %v255
    %v780 = vpack.c.b16 %v778, %v778
    %vm781 = vsmask.f32 7424
    %v783 = vshrl.u32 %v779, 16
    %v785 = vshll.u32 %v779, 16
    %v787 = vrot.slane %v785, 1
    %v788 = vor.u32 %v783, %v787
    %v790 = vshll.u32 %v780, 16
    %v792 = vrot.slane %v790, 1
    %v793 = vsel %vm781, %v788, %v792
    %v794 = vshrl.u32 %v780, 16
    %v797 = vsel %vm258, %v793, 0
    %v800 = vsel %vm258, %v794, 0
    %v803 = vsel %vm265, %v771, 0
    %805 = vmatpush.bf16.msra.mxu0 0
    %806 = vmatpush.bf16.msra.mxu0 0
    %807 = vmatpush.bf16.msra.mxu0 0
    %808 = vmatpush.bf16.msra.mxu0 0
    %809 = vmatpush.bf16.msra.mxu0 0
    %810 = vmatpush.bf16.msra.mxu0 0
    %811 = vmatpush.bf16.msra.mxu0 0
    %812 = vmatpush.bf16.msra.mxu0 %v803
    %813 = vmatmul.bf16.gmra.mxu0 %v797
    %v814 = vpop.f32.mrf.mxu0
    %v815 = vadd.f32 0.0, %v814
    %v816 = vpop.f32.mrf.mxu0
    %v817 = vadd.f32 0.0, %v816
    %818 = vmatmul.bf16.gmra.mxu0 %v800
    %v819 = vpop.f32.mrf.mxu0
    %v820 = vadd.f32 0.0, %v819
    %v821 = vpop.f32.mrf.mxu0
    %822 = vdwg.mxu0
    %v823 = vmul.f32 %v815, 0.35355338
    %v824 = vmul.f32 %v817, 0.35355338
    %v825 = vmul.f32 %v820, 0.35355338
    %v826 = vsel %vm290, %v823, -inf
    %827 = vmax.xlane.f32.xlu0 %v826
    %v828 = vpop.xlane.xlu0 %827
    %v829 = vsel %vm290, %v824, -inf
    %830 = vmax.xlane.f32.xlu0 %v829
    %v831 = vpop.xlane.xlu0 %830
    %v832 = vsel %vm297, %v825, -inf
    %833 = vmax.xlane.f32.xlu0 %v832
    %v834 = vpop.xlane.xlu0 %833
    %v835 = vsub.f32 %v823, %v828
    %v836 = vsub.f32 %v824, %v831
    %v837 = vsub.f32 %v825, %v834
    %v838 = vmul.f32 %v835, 1.442695
    %v839 = vpow.pop %v838
    %v840 = vmul.f32 %v836, 1.442695
    %v841 = vpow.pop %v840
    %v842 = vmul.f32 %v837, 1.442695
    %v843 = vpow.pop %v842
    %v844 = vsel %vm290, %v839, 0.0
    %845 = vadd.xlane.f32.xlu0 %v844
    %v846 = vpop.xlane.xlu0 %845
    %v847 = vsel %vm290, %v841, 0.0
    %848 = vadd.xlane.f32.xlu0 %v847
    %v849 = vpop.xlane.xlu0 %848
    %v850 = vsel %vm297, %v843, 0.0
    %851 = vadd.xlane.f32.xlu0 %v850
    %v852 = vpop.xlane.xlu0 %851
    %v853 = vrcp.pop %v846
    %v854 = vrcp.pop %v849
    %v855 = vrcp.pop %v852
    %v856 = vmul.f32 %v839, %v853
    %v857 = vmul.f32 %v841, %v854
    %v858 = vmul.f32 %v843, %v855
    %v859 = vpack.c.bf16 %v857, %v856
    %v860 = vpack.c.bf16 %v858, %v858
    %861 = vrot.lane.b32.xlu0 %v793, 64
    %v862 = vpop.permute.xlu0 %861
    %863 = vrot.lane.b32.xlu0 %v794, 64
    %v864 = vpop.permute.xlu0 %863
    %v867 = vsel %vm290, %v859, 0
    %v870 = vsel %vm290, %v860, 0
    %v873 = vand.u32 %v864, %v340
    %875 = vmatpush.bf16.msra.mxu0 0
    %876 = vmatpush.bf16.msra.mxu0 0
    %877 = vmatpush.bf16.msra.mxu0 0
    %878 = vmatpush.bf16.msra.mxu0 0
    %879 = vmatpush.bf16.msra.mxu0 0
    %880 = vmatpush.bf16.msra.mxu0 0
    %881 = vmatpush.bf16.msra.mxu0 %v873
    %882 = vmatpush.bf16.msra.mxu0 %v862
    %883 = vmatmul.bf16.gmra.mxu0 %v867
    %v884 = vpop.f32.mrf.mxu0
    %v885 = vadd.f32 0.0, %v884
    %v886 = vpop.f32.mrf.mxu0
    %v887 = vadd.f32 0.0, %v886
    %888 = vmatmul.bf16.gmra.mxu0 %v870
    %v889 = vpop.f32.mrf.mxu0
    %v890 = vadd.f32 0.0, %v889
    %v891 = vpop.f32.mrf.mxu0
    %892 = vdwg.mxu0
    %893 = vst.msk [vmem:[#allocation2 + $0x11] sm:$0xff] %vm258, %v885
    %894 = vst.msk [vmem:[#allocation2 + $0x19] sm:$0xff] %vm258, %v887
    %895 = vst.msk [vmem:[#allocation2 + $0x21] sm:$0x1] %vm364, %v890
    %896 = vrot.lane.b32.xlu0 %v793, 120
    %v897 = vpop.permute.xlu0 %896
    %898 = vrot.lane.b32.xlu0 %v794, 120
    %v899 = vpop.permute.xlu0 %898
    %v901 = vsel %vm258, %v897, 0
    %v904 = vsel %vm258, %v899, 0
    %v907 = vsel %vm265, %v772, 0
    %909 = vmatpush.bf16.msra.mxu0 0
    %910 = vmatpush.bf16.msra.mxu0 0
    %911 = vmatpush.bf16.msra.mxu0 0
    %912 = vmatpush.bf16.msra.mxu0 0
    %913 = vmatpush.bf16.msra.mxu0 0
    %914 = vmatpush.bf16.msra.mxu0 0
    %915 = vmatpush.bf16.msra.mxu0 0
    %916 = vmatpush.bf16.msra.mxu0 %v907
    %917 = vmatmul.bf16.gmra.mxu0 %v901
    %v918 = vpop.f32.mrf.mxu0
    %v919 = vadd.f32 0.0, %v918
    %v920 = vpop.f32.mrf.mxu0
    %v921 = vadd.f32 0.0, %v920
    %922 = vmatmul.bf16.gmra.mxu0 %v904
    %v923 = vpop.f32.mrf.mxu0
    %v924 = vadd.f32 0.0, %v923
    %v925 = vpop.f32.mrf.mxu0
    %926 = vdwg.mxu0
    %v927 = vmul.f32 %v919, 0.35355338
    %v928 = vmul.f32 %v921, 0.35355338
    %v929 = vmul.f32 %v924, 0.35355338
    %v930 = vsel %vm290, %v927, -inf
    %931 = vmax.xlane.f32.xlu0 %v930
    %v932 = vpop.xlane.xlu0 %931
    %v933 = vsel %vm290, %v928, -inf
    %934 = vmax.xlane.f32.xlu0 %v933
    %v935 = vpop.xlane.xlu0 %934
    %v936 = vsel %vm297, %v929, -inf
    %937 = vmax.xlane.f32.xlu0 %v936
    %v938 = vpop.xlane.xlu0 %937
    %v939 = vsub.f32 %v927, %v932
    %v940 = vsub.f32 %v928, %v935
    %v941 = vsub.f32 %v929, %v938
    %v942 = vmul.f32 %v939, 1.442695
    %v943 = vpow.pop %v942
    %v944 = vmul.f32 %v940, 1.442695
    %v945 = vpow.pop %v944
    %v946 = vmul.f32 %v941, 1.442695
    %v947 = vpow.pop %v946
    %v948 = vsel %vm290, %v943, 0.0
    %949 = vadd.xlane.f32.xlu0 %v948
    %v950 = vpop.xlane.xlu0 %949
    %v951 = vsel %vm290, %v945, 0.0
    %952 = vadd.xlane.f32.xlu0 %v951
    %v953 = vpop.xlane.xlu0 %952
    %v954 = vsel %vm297, %v947, 0.0
    %955 = vadd.xlane.f32.xlu0 %v954
    %v956 = vpop.xlane.xlu0 %955
    %v957 = vrcp.pop %v950
    %v958 = vrcp.pop %v953
    %v959 = vrcp.pop %v956
    %v960 = vmul.f32 %v943, %v957
    %v961 = vmul.f32 %v945, %v958
    %v962 = vmul.f32 %v947, %v959
    %v963 = vpack.c.bf16 %v961, %v960
    %v964 = vpack.c.bf16 %v962, %v962
    %965 = vrot.lane.b32.xlu0 %v793, 56
    %v966 = vpop.permute.xlu0 %965
    %967 = vrot.lane.b32.xlu0 %v794, 56
    %v968 = vpop.permute.xlu0 %967
    %v971 = vsel %vm290, %v963, 0
    %v974 = vsel %vm290, %v964, 0
    %v977 = vand.u32 %v968, %v340
    %979 = vmatpush.bf16.msra.mxu0 0
    %980 = vmatpush.bf16.msra.mxu0 0
    %981 = vmatpush.bf16.msra.mxu0 0
    %982 = vmatpush.bf16.msra.mxu0 0
    %983 = vmatpush.bf16.msra.mxu0 0
    %984 = vmatpush.bf16.msra.mxu0 0
    %985 = vmatpush.bf16.msra.mxu0 %v977
    %986 = vmatpush.bf16.msra.mxu0 %v966
    %987 = vmatmul.bf16.gmra.mxu0 %v971
    %v988 = vpop.f32.mrf.mxu0
    %v989 = vadd.f32 0.0, %v988
    %v990 = vpop.f32.mrf.mxu0
    %v991 = vadd.f32 0.0, %v990
    %992 = vmatmul.bf16.gmra.mxu0 %v974
    %v993 = vpop.f32.mrf.mxu0
    %v994 = vadd.f32 0.0, %v993
    %v995 = vpop.f32.mrf.mxu0
    %996 = vdwg.mxu0
    %1000 = vrot.lane.b32.xlu0 %v989, 8
    %v1001 = vpop.permute.xlu0 %1000
    %1002 = vrot.lane.b32.xlu0 %v991, 8
    %v1003 = vpop.permute.xlu0 %1002
    %1004 = vrot.lane.b32.xlu0 %v994, 8
    %v1005 = vpop.permute.xlu0 %1004
    %1009 = vst.msk [vmem:[#allocation2 + $0x11] sm:$0xff] %vm479, %v1001
    %1010 = vst.msk [vmem:[#allocation2 + $0x19] sm:$0xff] %vm479, %v1003
    %1011 = vst.msk [vmem:[#allocation2 + $0x21] sm:$0x1] %vm482, %v1005
    %1012 = vrot.lane.b32.xlu0 %v793, 112
    %v1013 = vpop.permute.xlu0 %1012
    %1014 = vrot.lane.b32.xlu0 %v794, 112
    %v1015 = vpop.permute.xlu0 %1014
    %v1017 = vsel %vm258, %v1013, 0
    %v1020 = vsel %vm258, %v1015, 0
    %v1023 = vsel %vm265, %v773, 0
    %1025 = vmatpush.bf16.msra.mxu0 0
    %1026 = vmatpush.bf16.msra.mxu0 0
    %1027 = vmatpush.bf16.msra.mxu0 0
    %1028 = vmatpush.bf16.msra.mxu0 0
    %1029 = vmatpush.bf16.msra.mxu0 0
    %1030 = vmatpush.bf16.msra.mxu0 0
    %1031 = vmatpush.bf16.msra.mxu0 0
    %1032 = vmatpush.bf16.msra.mxu0 %v1023
    %1033 = vmatmul.bf16.gmra.mxu0 %v1017
    %v1034 = vpop.f32.mrf.mxu0
    %v1035 = vadd.f32 0.0, %v1034
    %v1036 = vpop.f32.mrf.mxu0
    %v1037 = vadd.f32 0.0, %v1036
    %1038 = vmatmul.bf16.gmra.mxu0 %v1020
    %v1039 = vpop.f32.mrf.mxu0
    %v1040 = vadd.f32 0.0, %v1039
    %v1041 = vpop.f32.mrf.mxu0
    %1042 = vdwg.mxu0
    %v1043 = vmul.f32 %v1035, 0.35355338
    %v1044 = vmul.f32 %v1037, 0.35355338
    %v1045 = vmul.f32 %v1040, 0.35355338
    %v1046 = vsel %vm290, %v1043, -inf
    %1047 = vmax.xlane.f32.xlu0 %v1046
    %v1048 = vpop.xlane.xlu0 %1047
    %v1049 = vsel %vm290, %v1044, -inf
    %1050 = vmax.xlane.f32.xlu0 %v1049
    %v1051 = vpop.xlane.xlu0 %1050
    %v1052 = vsel %vm297, %v1045, -inf
    %1053 = vmax.xlane.f32.xlu0 %v1052
    %v1054 = vpop.xlane.xlu0 %1053
    %v1055 = vsub.f32 %v1043, %v1048
    %v1056 = vsub.f32 %v1044, %v1051
    %v1057 = vsub.f32 %v1045, %v1054
    %v1058 = vmul.f32 %v1055, 1.442695
    %v1059 = vpow.pop %v1058
    %v1060 = vmul.f32 %v1056, 1.442695
    %v1061 = vpow.pop %v1060
    %v1062 = vmul.f32 %v1057, 1.442695
    %v1063 = vpow.pop %v1062
    %v1064 = vsel %vm290, %v1059, 0.0
    %1065 = vadd.xlane.f32.xlu0 %v1064
    %v1066 = vpop.xlane.xlu0 %1065
    %v1067 = vsel %vm290, %v1061, 0.0
    %1068 = vadd.xlane.f32.xlu0 %v1067
    %v1069 = vpop.xlane.xlu0 %1068
    %v1070 = vsel %vm297, %v1063, 0.0
    %1071 = vadd.xlane.f32.xlu0 %v1070
    %v1072 = vpop.xlane.xlu0 %1071
    %v1073 = vrcp.pop %v1066
    %v1074 = vrcp.pop %v1069
    %v1075 = vrcp.pop %v1072
    %v1076 = vmul.f32 %v1059, %v1073
    %v1077 = vmul.f32 %v1061, %v1074
    %v1078 = vmul.f32 %v1063, %v1075
    %v1079 = vpack.c.bf16 %v1077, %v1076
    %v1080 = vpack.c.bf16 %v1078, %v1078
    %1081 = vrot.lane.b32.xlu0 %v793, 48
    %v1082 = vpop.permute.xlu0 %1081
    %1083 = vrot.lane.b32.xlu0 %v794, 48
    %v1084 = vpop.permute.xlu0 %1083
    %v1087 = vsel %vm290, %v1079, 0
    %v1090 = vsel %vm290, %v1080, 0
    %v1093 = vand.u32 %v1084, %v340
    %1095 = vmatpush.bf16.msra.mxu0 0
    %1096 = vmatpush.bf16.msra.mxu0 0
    %1097 = vmatpush.bf16.msra.mxu0 0
    %1098 = vmatpush.bf16.msra.mxu0 0
    %1099 = vmatpush.bf16.msra.mxu0 0
    %1100 = vmatpush.bf16.msra.mxu0 0
    %1101 = vmatpush.bf16.msra.mxu0 %v1093
    %1102 = vmatpush.bf16.msra.mxu0 %v1082
    %1103 = vmatmul.bf16.gmra.mxu0 %v1087
    %v1104 = vpop.f32.mrf.mxu0
    %v1105 = vadd.f32 0.0, %v1104
    %v1106 = vpop.f32.mrf.mxu0
    %v1107 = vadd.f32 0.0, %v1106
    %1108 = vmatmul.bf16.gmra.mxu0 %v1090
    %v1109 = vpop.f32.mrf.mxu0
    %v1110 = vadd.f32 0.0, %v1109
    %v1111 = vpop.f32.mrf.mxu0
    %1112 = vdwg.mxu0
    %1116 = vrot.lane.b32.xlu0 %v1105, 16
    %v1117 = vpop.permute.xlu0 %1116
    %1118 = vrot.lane.b32.xlu0 %v1107, 16
    %v1119 = vpop.permute.xlu0 %1118
    %1120 = vrot.lane.b32.xlu0 %v1110, 16
    %v1121 = vpop.permute.xlu0 %1120
    %1125 = vst.msk [vmem:[#allocation2 + $0x11] sm:$0xff] %vm597, %v1117
    %1126 = vst.msk [vmem:[#allocation2 + $0x19] sm:$0xff] %vm597, %v1119
    %1127 = vst.msk [vmem:[#allocation2 + $0x21] sm:$0x1] %vm600, %v1121
    %1128 = vrot.lane.b32.xlu0 %v793, 104
    %v1129 = vpop.permute.xlu0 %1128
    %1130 = vrot.lane.b32.xlu0 %v794, 104
    %v1131 = vpop.permute.xlu0 %1130
    %v1133 = vsel %vm258, %v1129, 0
    %v1136 = vsel %vm258, %v1131, 0
    %v1139 = vsel %vm265, %v774, 0
    %1141 = vmatpush.bf16.msra.mxu0 0
    %1142 = vmatpush.bf16.msra.mxu0 0
    %1143 = vmatpush.bf16.msra.mxu0 0
    %1144 = vmatpush.bf16.msra.mxu0 0
    %1145 = vmatpush.bf16.msra.mxu0 0
    %1146 = vmatpush.bf16.msra.mxu0 0
    %1147 = vmatpush.bf16.msra.mxu0 0
    %1148 = vmatpush.bf16.msra.mxu0 %v1139
    %1149 = vmatmul.bf16.gmra.mxu0 %v1133
    %v1150 = vpop.f32.mrf.mxu0
    %v1151 = vadd.f32 0.0, %v1150
    %v1152 = vpop.f32.mrf.mxu0
    %v1153 = vadd.f32 0.0, %v1152
    %1154 = vmatmul.bf16.gmra.mxu0 %v1136
    %v1155 = vpop.f32.mrf.mxu0
    %v1156 = vadd.f32 0.0, %v1155
    %v1157 = vpop.f32.mrf.mxu0
    %1158 = vdwg.mxu0
    %v1159 = vmul.f32 %v1151, 0.35355338
    %v1160 = vmul.f32 %v1153, 0.35355338
    %v1161 = vmul.f32 %v1156, 0.35355338
    %v1162 = vsel %vm290, %v1159, -inf
    %1163 = vmax.xlane.f32.xlu0 %v1162
    %v1164 = vpop.xlane.xlu0 %1163
    %v1165 = vsel %vm290, %v1160, -inf
    %1166 = vmax.xlane.f32.xlu0 %v1165
    %v1167 = vpop.xlane.xlu0 %1166
    %v1168 = vsel %vm297, %v1161, -inf
    %1169 = vmax.xlane.f32.xlu0 %v1168
    %v1170 = vpop.xlane.xlu0 %1169
    %v1171 = vsub.f32 %v1159, %v1164
    %v1172 = vsub.f32 %v1160, %v1167
    %v1173 = vsub.f32 %v1161, %v1170
    %v1174 = vmul.f32 %v1171, 1.442695
    %v1175 = vpow.pop %v1174
    %v1176 = vmul.f32 %v1172, 1.442695
    %v1177 = vpow.pop %v1176
    %v1178 = vmul.f32 %v1173, 1.442695
    %v1179 = vpow.pop %v1178
    %v1180 = vsel %vm290, %v1175, 0.0
    %1181 = vadd.xlane.f32.xlu0 %v1180
    %v1182 = vpop.xlane.xlu0 %1181
    %v1183 = vsel %vm290, %v1177, 0.0
    %1184 = vadd.xlane.f32.xlu0 %v1183
    %v1185 = vpop.xlane.xlu0 %1184
    %v1186 = vsel %vm297, %v1179, 0.0
    %1187 = vadd.xlane.f32.xlu0 %v1186
    %v1188 = vpop.xlane.xlu0 %1187
    %v1189 = vrcp.pop %v1182
    %v1190 = vrcp.pop %v1185
    %v1191 = vrcp.pop %v1188
    %v1192 = vmul.f32 %v1175, %v1189
    %v1193 = vmul.f32 %v1177, %v1190
    %v1194 = vmul.f32 %v1179, %v1191
    %v1195 = vpack.c.bf16 %v1193, %v1192
    %v1196 = vpack.c.bf16 %v1194, %v1194
    %1197 = vrot.lane.b32.xlu0 %v793, 40
    %v1198 = vpop.permute.xlu0 %1197
    %1199 = vrot.lane.b32.xlu0 %v794, 40
    %v1200 = vpop.permute.xlu0 %1199
    %v1203 = vsel %vm290, %v1195, 0
    %v1206 = vsel %vm290, %v1196, 0
    %v1209 = vand.u32 %v1200, %v340
    %1211 = vmatpush.bf16.msra.mxu0 0
    %1212 = vmatpush.bf16.msra.mxu0 0
    %1213 = vmatpush.bf16.msra.mxu0 0
    %1214 = vmatpush.bf16.msra.mxu0 0
    %1215 = vmatpush.bf16.msra.mxu0 0
    %1216 = vmatpush.bf16.msra.mxu0 0
    %1217 = vmatpush.bf16.msra.mxu0 %v1209
    %1218 = vmatpush.bf16.msra.mxu0 %v1198
    %1219 = vmatmul.bf16.gmra.mxu0 %v1203
    %v1220 = vpop.f32.mrf.mxu0
    %v1221 = vadd.f32 0.0, %v1220
    %v1222 = vpop.f32.mrf.mxu0
    %v1223 = vadd.f32 0.0, %v1222
    %1224 = vmatmul.bf16.gmra.mxu0 %v1206
    %v1225 = vpop.f32.mrf.mxu0
    %v1226 = vadd.f32 0.0, %v1225
    %v1227 = vpop.f32.mrf.mxu0
    %1228 = vdwg.mxu0
    %1232 = vrot.lane.b32.xlu0 %v1221, 24
    %v1233 = vpop.permute.xlu0 %1232
    %1234 = vrot.lane.b32.xlu0 %v1223, 24
    %v1235 = vpop.permute.xlu0 %1234
    %1236 = vrot.lane.b32.xlu0 %v1226, 24
    %v1237 = vpop.permute.xlu0 %1236
    %1241 = vst.msk [vmem:[#allocation2 + $0x11] sm:$0xff] %vm715, %v1233
    %1242 = vst.msk [vmem:[#allocation2 + $0x19] sm:$0xff] %vm715, %v1235
    %1243 = vst.msk [vmem:[#allocation2 + $0x21] sm:$0x1] %vm718, %v1237
    %v1244 = vld [vmem:[#allocation2] sm:$0xff]
    %v1245 = vld [vmem:[#allocation2 + $0x8] sm:$0xff]
    %v1246 = vld [vmem:[#allocation2 + $0x10] sm:$0xff]
    %v1247 = vld [vmem:[#allocation2 + $0x18] sm:$0xff]
    %v1248 = vld [vmem:[#allocation2 + $0x20] sm:$0x3]
    %v1249 = vpack.c.bf16 %v1245, %v1244
    %v1250 = vpack.c.bf16 %v1247, %v1246
    %v1251 = vpack.c.bf16 %v1248, %v1248
    %v1252 = vld [vmem:[%s5] sm:$0xf]
    %v1253 = vld [vmem:[%s5 + $0x4] sm:$0xf]
    %v1254 = vld [vmem:[%s5 + $0x8] sm:$0xf]
    %v1255 = vld [vmem:[%s5 + $0xc] sm:$0xf]
    %v1256 = vld [vmem:[%s6] sm:$0x1]
    %v1258 = vperm.slane %v1256, 0
    %v1264 = vunpack.c.l.b16 %v1252
    %v1265 = vunpack.c.l.b16 %v1253
    %v1266 = vunpack.c.l.b16 %v1254
    %v1267 = vunpack.c.l.b16 %v1255
    %v1268 = vpack.c.b16 %v1265, %v1264
    %v1269 = vpack.c.b16 %v1267, %v1266
    %v1273 = vsel %vm166, %v1249, 0
    %v1276 = vsel %vm166, %v1250, 0
    %v1279 = vsel %vm166, %v1251, 0
    %1281 = vmatpush.bf16.msra.mxu0 0
    %1282 = vmatpush.bf16.msra.mxu0 0
    %1283 = vmatpush.bf16.msra.mxu0 0
    %1284 = vmatpush.bf16.msra.mxu0 0
    %1285 = vmatpush.bf16.msra.mxu0 0
    %1286 = vmatpush.bf16.msra.mxu0 0
    %1287 = vmatpush.bf16.msra.mxu0 %v1269
    %1288 = vmatpush.bf16.msra.mxu0 %v1268
    %1289 = vmatmul.bf16.gmra.mxu0 %v1273
    %v1290 = vpop.f32.mrf.mxu0
    %v1291 = vadd.f32 %v1258, %v1290
    %v1292 = vpop.f32.mrf.mxu0
    %v1293 = vadd.f32 %v1258, %v1292
    %1294 = vmatmul.bf16.gmra.mxu0 %v1276
    %v1295 = vpop.f32.mrf.mxu0
    %v1296 = vadd.f32 %v1258, %v1295
    %v1297 = vpop.f32.mrf.mxu0
    %v1298 = vadd.f32 %v1258, %v1297
    %1299 = vmatmul.bf16.gmra.mxu0 %v1279
    %v1300 = vpop.f32.mrf.mxu0
    %v1301 = vadd.f32 %v1258, %v1300
    %v1302 = vpop.f32.mrf.mxu0
    %1303 = vdwg.mxu0
    %v1304 = vadd.f32 %v130, %v1291
    %v1305 = vadd.f32 %v132, %v1293
    %v1306 = vadd.f32 %v135, %v1296
    %v1307 = vadd.f32 %v137, %v1298
    %v1308 = vadd.f32 %v140, %v1301
    %v1309 = vld [vmem:[%s7] sm:$0x3]
    %v1310 = vsel %vm166, %v1304, 0.0
    %1311 = vadd.xlane.f32.xlu0 %v1310
    %v1312 = vpop.xlane.xlu0 %1311
    %v1313 = vsel %vm166, %v1305, 0.0
    %1314 = vadd.xlane.f32.xlu0 %v1313
    %v1315 = vpop.xlane.xlu0 %1314
    %v1316 = vsel %vm166, %v1306, 0.0
    %1317 = vadd.xlane.f32.xlu0 %v1316
    %v1318 = vpop.xlane.xlu0 %1317
    %v1319 = vsel %vm166, %v1307, 0.0
    %1320 = vadd.xlane.f32.xlu0 %v1319
    %v1321 = vpop.xlane.xlu0 %1320
    %vm1322 = vcmask 254976
    %v1323 = vsel %vm1322, %v1308, 0.0
    %1324 = vadd.xlane.f32.xlu0 %v1323
    %v1325 = vpop.xlane.xlu0 %1324
    %v1326 = vrcp.pop 32.0
    %v1327 = vmul.f32 32.0, %v1326
    %v1328 = vsub.f32 1.0, %v1327
    %v1329 = vmul.f32 %v1326, %v1328
    %v1330 = vadd.f32 %v1326, %v1329
    %vm1331 = vweird.f32 %v1326
    %v1332 = vsel %vm1331, %v1326, %v1330
    %v1333 = vmul.f32 %v1312, %v1332
    %v1334 = vmul.f32 %v1315, %v1332
    %v1335 = vmul.f32 %v1318, %v1332
    %v1336 = vmul.f32 %v1321, %v1332
    %v1337 = vmul.f32 %v1325, %v1332
    %v1338 = vsub.f32 %v1304, %v1333
    %v1339 = vsub.f32 %v1305, %v1334
    %v1340 = vsub.f32 %v1306, %v1335
    %v1341 = vsub.f32 %v1307, %v1336
    %v1342 = vsub.f32 %v1308, %v1337
    %v1343 = vmul.f32 %v1338, %v1338
    %v1344 = vmul.f32 %v1339, %v1339
    %v1345 = vmul.f32 %v1340, %v1340
    %v1346 = vmul.f32 %v1341, %v1341
    %v1347 = vmul.f32 %v1342, %v1342
    %v1348 = vsel %vm166, %v1343, 0.0
    %1349 = vadd.xlane.f32.xlu0 %v1348
    %v1350 = vpop.xlane.xlu0 %1349
    %v1351 = vsel %vm166, %v1344, 0.0
    %1352 = vadd.xlane.f32.xlu0 %v1351
    %v1353 = vpop.xlane.xlu0 %1352
    %v1354 = vsel %vm166, %v1345, 0.0
    %1355 = vadd.xlane.f32.xlu0 %v1354
    %v1356 = vpop.xlane.xlu0 %1355
    %v1357 = vsel %vm166, %v1346, 0.0
    %1358 = vadd.xlane.f32.xlu0 %v1357
    %v1359 = vpop.xlane.xlu0 %1358
    %v1360 = vsel %vm1322, %v1347, 0.0
    %1361 = vadd.xlane.f32.xlu0 %v1360
    %v1362 = vpop.xlane.xlu0 %1361
    %v1363 = vmul.f32 %v1350, %v1332
    %v1364 = vmul.f32 %v1353, %v1332
    %v1365 = vmul.f32 %v1356, %v1332
    %v1366 = vmul.f32 %v1359, %v1332
    %v1367 = vmul.f32 %v1362, %v1332
    %v1368 = vadd.f32 %v1363, 1e-05
    %v1369 = vadd.f32 %v1364, 1e-05
    %v1370 = vadd.f32 %v1365, 1e-05
    %v1371 = vadd.f32 %v1366, 1e-05
    %v1372 = vadd.f32 %v1367, 1e-05
    %v1373 = vrsqrt.pop %v1368
    %v1374 = vmul.f32 %v1373, %v1368
    %v1375 = vmul.f32 %v1374, %v1373
    %v1376 = vmul.f32 0.5, %v1375
    %v1377 = vsub.f32 1.5, %v1376
    %v1378 = vmul.f32 %v1373, %v1377
    %vm1379 = vweird.f32 %v1368
    %vm1380 = vweird.f32 %v1373
    %vm1381 = vmor %vm1379, %vm1380
    %v1382 = vsel %vm1381, %v1373, %v1378
    %v1383 = vrsqrt.pop %v1369
    %v1384 = vmul.f32 %v1383, %v1369
    %v1385 = vmul.f32 %v1384, %v1383
    %v1386 = vmul.f32 0.5, %v1385
    %v1387 = vsub.f32 1.5, %v1386
    %v1388 = vmul.f32 %v1383, %v1387
    %vm1389 = vweird.f32 %v1369
    %vm1390 = vweird.f32 %v1383
    %vm1391 = vmor %vm1389, %vm1390
    %v1392 = vsel %vm1391, %v1383, %v1388
    %v1393 = vrsqrt.pop %v1370
    %v1394 = vmul.f32 %v1393, %v1370
    %v1395 = vmul.f32 %v1394, %v1393
    %v1396 = vmul.f32 0.5, %v1395
    %v1397 = vsub.f32 1.5, %v1396
    %v1398 = vmul.f32 %v1393, %v1397
    %vm1399 = vweird.f32 %v1370
    %vm1400 = vweird.f32 %v1393
    %vm1401 = vmor %vm1399, %vm1400
    %v1402 = vsel %vm1401, %v1393, %v1398
    %v1403 = vrsqrt.pop %v1371
    %v1404 = vmul.f32 %v1403, %v1371
    %v1405 = vmul.f32 %v1404, %v1403
    %v1406 = vmul.f32 0.5, %v1405
    %v1407 = vsub.f32 1.5, %v1406
    %v1408 = vmul.f32 %v1403, %v1407
    %vm1409 = vweird.f32 %v1371
    %vm1410 = vweird.f32 %v1403
    %vm1411 = vmor %vm1409, %vm1410
    %v1412 = vsel %vm1411, %v1403, %v1408
    %v1413 = vrsqrt.pop %v1372
    %v1414 = vmul.f32 %v1413, %v1372
    %v1415 = vmul.f32 %v1414, %v1413
    %v1416 = vmul.f32 0.5, %v1415
    %v1417 = vsub.f32 1.5, %v1416
    %v1418 = vmul.f32 %v1413, %v1417
    %vm1419 = vweird.f32 %v1372
    %vm1420 = vweird.f32 %v1413
    %vm1421 = vmor %vm1419, %vm1420
    %v1422 = vsel %vm1421, %v1413, %v1418
    %v1423 = vmul.f32 %v1338, %v1382
    %v1424 = vmul.f32 %v1339, %v1392
    %v1425 = vmul.f32 %v1340, %v1402
    %v1426 = vmul.f32 %v1341, %v1412
    %v1427 = vmul.f32 %v1342, %v1422
    %v1428 = vperm.slane %v1309, 0
    %v1429 = vmul.f32 %v1423, %v1428
    %v1430 = vmul.f32 %v1424, %v1428
    %v1431 = vmul.f32 %v1425, %v1428
    %v1432 = vmul.f32 %v1426, %v1428
    %v1433 = vmul.f32 %v1427, %v1428
    %v1434 = vperm.slane %v1309, 1
    %v1435 = vadd.f32 %v1429, %v1434
    %v1436 = vadd.f32 %v1430, %v1434
    %v1437 = vadd.f32 %v1431, %v1434
    %v1438 = vadd.f32 %v1432, %v1434
    %v1439 = vadd.f32 %v1433, %v1434
    %v1440 = vpack.c.bf16 %v1436, %v1435
    %v1441 = vpack.c.bf16 %v1438, %v1437
    %v1442 = vpack.c.bf16 %v1439, %v1439
    %v1443 = vld [vmem:[%s8] sm:$0xf]
    %v1444 = vld [vmem:[%s8 + $0x4] sm:$0xf]
    %v1445 = vld [vmem:[%s8 + $0x8] sm:$0xf]
    %v1446 = vld [vmem:[%s8 + $0xc] sm:$0xf]
    %v1447 = vld [vmem:[%s9] sm:$0x1]
    %v1449 = vperm.slane %v1447, 0
    %v1455 = vunpack.c.l.b16 %v1443
    %v1456 = vunpack.c.l.b16 %v1444
    %v1457 = vunpack.c.l.b16 %v1445
    %v1458 = vunpack.c.l.b16 %v1446
    %v1459 = vpack.c.b16 %v1456, %v1455
    %v1460 = vpack.c.b16 %v1458, %v1457
    %v1464 = vsel %vm166, %v1440, 0
    %v1467 = vsel %vm166, %v1441, 0
    %v1470 = vsel %vm166, %v1442, 0
    %1472 = vmatpush.bf16.msra.mxu0 0
    %1473 = vmatpush.bf16.msra.mxu0 0
    %1474 = vmatpush.bf16.msra.mxu0 0
    %1475 = vmatpush.bf16.msra.mxu0 0
    %1476 = vmatpush.bf16.msra.mxu0 0
    %1477 = vmatpush.bf16.msra.mxu0 0
    %1478 = vmatpush.bf16.msra.mxu0 %v1460
    %1479 = vmatpush.bf16.msra.mxu0 %v1459
    %1480 = vmatmul.bf16.gmra.mxu0 %v1464
    %v1481 = vpop.f32.mrf.mxu0
    %v1482 = vadd.f32 %v1449, %v1481
    %v1483 = vpop.f32.mrf.mxu0
    %v1484 = vadd.f32 %v1449, %v1483
    %1485 = vmatmul.bf16.gmra.mxu0 %v1467
    %v1486 = vpop.f32.mrf.mxu0
    %v1487 = vadd.f32 %v1449, %v1486
    %v1488 = vpop.f32.mrf.mxu0
    %v1489 = vadd.f32 %v1449, %v1488
    %1490 = vmatmul.bf16.gmra.mxu0 %v1470
    %v1491 = vpop.f32.mrf.mxu0
    %v1492 = vadd.f32 %v1449, %v1491
    %v1493 = vpop.f32.mrf.mxu0
    %1494 = vdwg.mxu0
    %v1495 = vmax.f32 %v1482, 0.0
    %v1496 = vmax.f32 %v1484, 0.0
    %v1497 = vmax.f32 %v1487, 0.0
    %v1498 = vmax.f32 %v1489, 0.0
    %v1499 = vmax.f32 %v1492, 0.0
    %v1500 = vpack.c.bf16 %v1496, %v1495
    %v1501 = vpack.c.bf16 %v1498, %v1497
    %v1502 = vpack.c.bf16 %v1499, %v1499
    %v1503 = vld [vmem:[%s10] sm:$0xf]
    %v1504 = vld [vmem:[%s10 + $0x4] sm:$0xf]
    %v1505 = vld [vmem:[%s10 + $0x8] sm:$0xf]
    %v1506 = vld [vmem:[%s10 + $0xc] sm:$0xf]
    %v1507 = vld [vmem:[%s10 + $0x10] sm:$0xf]
    %v1508 = vld [vmem:[%s10 + $0x14] sm:$0xf]
    %v1509 = vld [vmem:[%s10 + $0x18] sm:$0xf]
    %v1510 = vld [vmem:[%s10 + $0x1c] sm:$0xf]
    %v1511 = vld [vmem:[%s11] sm:$0x1]
    %v1513 = vperm.slane %v1511, 0
    %v1523 = vunpack.c.l.b16 %v1503
    %v1524 = vunpack.c.l.b16 %v1504
    %v1525 = vunpack.c.l.b16 %v1505
    %v1526 = vunpack.c.l.b16 %v1506
    %v1527 = vunpack.c.l.b16 %v1507
    %v1528 = vunpack.c.l.b16 %v1508
    %v1529 = vunpack.c.l.b16 %v1509
    %v1530 = vunpack.c.l.b16 %v1510
    %v1531 = vpack.c.b16 %v1524, %v1523
    %v1532 = vpack.c.b16 %v1526, %v1525
    %v1533 = vpack.c.b16 %v1528, %v1527
    %v1534 = vpack.c.b16 %v1530, %v1529
    %v1540 = vsel %vm110, %v1500, 0
    %v1543 = vsel %vm110, %v1501, 0
    %v1546 = vsel %vm110, %v1502, 0
    %1548 = vmatpush.bf16.msra.mxu0 0
    %1549 = vmatpush.bf16.msra.mxu0 0
    %1550 = vmatpush.bf16.msra.mxu0 0
    %1551 = vmatpush.bf16.msra.mxu0 0
    %1552 = vmatpush.bf16.msra.mxu0 %v1534
    %1553 = vmatpush.bf16.msra.mxu0 %v1533
    %1554 = vmatpush.bf16.msra.mxu0 %v1532
    %1555 = vmatpush.bf16.msra.mxu0 %v1531
    %1556 = vmatmul.bf16.gmra.mxu0 %v1540
    %v1557 = vpop.f32.mrf.mxu0
    %v1558 = vadd.f32 %v1513, %v1557
    %v1559 = vpop.f32.mrf.mxu0
    %v1560 = vadd.f32 %v1513, %v1559
    %1561 = vmatmul.bf16.gmra.mxu0 %v1543
    %v1562 = vpop.f32.mrf.mxu0
    %v1563 = vadd.f32 %v1513, %v1562
    %v1564 = vpop.f32.mrf.mxu0
    %v1565 = vadd.f32 %v1513, %v1564
    %1566 = vmatmul.bf16.gmra.mxu0 %v1546
    %v1567 = vpop.f32.mrf.mxu0
    %v1568 = vadd.f32 %v1513, %v1567
    %v1569 = vpop.f32.mrf.mxu0
    %1570 = vdwg.mxu0
    %v1571 = vadd.f32 %v1435, %v1558
    %v1572 = vadd.f32 %v1436, %v1560
    %v1573 = vadd.f32 %v1437, %v1563
    %v1574 = vadd.f32 %v1438, %v1565
    %v1575 = vadd.f32 %v1439, %v1568
    %v1576 = vld [vmem:[%s12] sm:$0x3]
    %v1577 = vsel %vm166, %v1571, 0.0
    %1578 = vadd.xlane.f32.xlu0 %v1577
    %v1579 = vpop.xlane.xlu0 %1578
    %v1580 = vsel %vm166, %v1572, 0.0
    %1581 = vadd.xlane.f32.xlu0 %v1580
    %v1582 = vpop.xlane.xlu0 %1581
    %v1583 = vsel %vm166, %v1573, 0.0
    %1584 = vadd.xlane.f32.xlu0 %v1583
    %v1585 = vpop.xlane.xlu0 %1584
    %v1586 = vsel %vm166, %v1574, 0.0
    %1587 = vadd.xlane.f32.xlu0 %v1586
    %v1588 = vpop.xlane.xlu0 %1587
    %v1589 = vsel %vm1322, %v1575, 0.0
    %1590 = vadd.xlane.f32.xlu0 %v1589
    %v1591 = vpop.xlane.xlu0 %1590
    %v1592 = vmul.f32 %v1579, %v1332
    %v1593 = vmul.f32 %v1582, %v1332
    %v1594 = vmul.f32 %v1585, %v1332
    %v1595 = vmul.f32 %v1588, %v1332
    %v1596 = vmul.f32 %v1591, %v1332
    %v1597 = vsub.f32 %v1571, %v1592
    %v1598 = vsub.f32 %v1572, %v1593
    %v1599 = vsub.f32 %v1573, %v1594
    %v1600 = vsub.f32 %v1574, %v1595
    %v1601 = vsub.f32 %v1575, %v1596
    %v1602 = vmul.f32 %v1597, %v1597
    %v1603 = vmul.f32 %v1598, %v1598
    %v1604 = vmul.f32 %v1599, %v1599
    %v1605 = vmul.f32 %v1600, %v1600
    %v1606 = vmul.f32 %v1601, %v1601
    %v1607 = vsel %vm166, %v1602, 0.0
    %1608 = vadd.xlane.f32.xlu0 %v1607
    %v1609 = vpop.xlane.xlu0 %1608
    %v1610 = vsel %vm166, %v1603, 0.0
    %1611 = vadd.xlane.f32.xlu0 %v1610
    %v1612 = vpop.xlane.xlu0 %1611
    %v1613 = vsel %vm166, %v1604, 0.0
    %1614 = vadd.xlane.f32.xlu0 %v1613
    %v1615 = vpop.xlane.xlu0 %1614
    %v1616 = vsel %vm166, %v1605, 0.0
    %1617 = vadd.xlane.f32.xlu0 %v1616
    %v1618 = vpop.xlane.xlu0 %1617
    %v1619 = vsel %vm1322, %v1606, 0.0
    %1620 = vadd.xlane.f32.xlu0 %v1619
    %v1621 = vpop.xlane.xlu0 %1620
    %v1622 = vmul.f32 %v1609, %v1332
    %v1623 = vmul.f32 %v1612, %v1332
    %v1624 = vmul.f32 %v1615, %v1332
    %v1625 = vmul.f32 %v1618, %v1332
    %v1626 = vmul.f32 %v1621, %v1332
    %v1627 = vadd.f32 %v1622, 1e-05
    %v1628 = vadd.f32 %v1623, 1e-05
    %v1629 = vadd.f32 %v1624, 1e-05
    %v1630 = vadd.f32 %v1625, 1e-05
    %v1631 = vadd.f32 %v1626, 1e-05
    %v1632 = vrsqrt.pop %v1627
    %v1633 = vmul.f32 %v1632, %v1627
    %v1634 = vmul.f32 %v1633, %v1632
    %v1635 = vmul.f32 0.5, %v1634
    %v1636 = vsub.f32 1.5, %v1635
    %v1637 = vmul.f32 %v1632, %v1636
    %vm1638 = vweird.f32 %v1627
    %vm1639 = vweird.f32 %v1632
    %vm1640 = vmor %vm1638, %vm1639
    %v1641 = vsel %vm1640, %v1632, %v1637
    %v1642 = vrsqrt.pop %v1628
    %v1643 = vmul.f32 %v1642, %v1628
    %v1644 = vmul.f32 %v1643, %v1642
    %v1645 = vmul.f32 0.5, %v1644
    %v1646 = vsub.f32 1.5, %v1645
    %v1647 = vmul.f32 %v1642, %v1646
    %vm1648 = vweird.f32 %v1628
    %vm1649 = vweird.f32 %v1642
    %vm1650 = vmor %vm1648, %vm1649
    %v1651 = vsel %vm1650, %v1642, %v1647
    %v1652 = vrsqrt.pop %v1629
    %v1653 = vmul.f32 %v1652, %v1629
    %v1654 = vmul.f32 %v1653, %v1652
    %v1655 = vmul.f32 0.5, %v1654
    %v1656 = vsub.f32 1.5, %v1655
    %v1657 = vmul.f32 %v1652, %v1656
    %vm1658 = vweird.f32 %v1629
    %vm1659 = vweird.f32 %v1652
    %vm1660 = vmor %vm1658, %vm1659
    %v1661 = vsel %vm1660, %v1652, %v1657
    %v1662 = vrsqrt.pop %v1630
    %v1663 = vmul.f32 %v1662, %v1630
    %v1664 = vmul.f32 %v1663, %v1662
    %v1665 = vmul.f32 0.5, %v1664
    %v1666 = vsub.f32 1.5, %v1665
    %v1667 = vmul.f32 %v1662, %v1666
    %vm1668 = vweird.f32 %v1630
    %vm1669 = vweird.f32 %v1662
    %vm1670 = vmor %vm1668, %vm1669
    %v1671 = vsel %vm1670, %v1662, %v1667
    %v1672 = vrsqrt.pop %v1631
    %v1673 = vmul.f32 %v1672, %v1631
    %v1674 = vmul.f32 %v1673, %v1672
    %v1675 = vmul.f32 0.5, %v1674
    %v1676 = vsub.f32 1.5, %v1675
    %v1677 = vmul.f32 %v1672, %v1676
    %vm1678 = vweird.f32 %v1631
    %vm1679 = vweird.f32 %v1672
    %vm1680 = vmor %vm1678, %vm1679
    %v1681 = vsel %vm1680, %v1672, %v1677
    %v1682 = vmul.f32 %v1597, %v1641
    %v1683 = vmul.f32 %v1598, %v1651
    %v1684 = vmul.f32 %v1599, %v1661
    %v1685 = vmul.f32 %v1600, %v1671
    %v1686 = vmul.f32 %v1601, %v1681
    %v1687 = vperm.slane %v1576, 0
    %v1688 = vmul.f32 %v1682, %v1687
    %v1689 = vmul.f32 %v1683, %v1687
    %v1690 = vmul.f32 %v1684, %v1687
    %v1691 = vmul.f32 %v1685, %v1687
    %v1692 = vmul.f32 %v1686, %v1687
    %v1693 = vperm.slane %v1576, 1
    %v1694 = vadd.f32 %v1688, %v1693
    %v1695 = vadd.f32 %v1689, %v1693
    %v1696 = vadd.f32 %v1690, %v1693
    %v1697 = vadd.f32 %v1691, %v1693
    %v1698 = vadd.f32 %v1692, %v1693
    %v1699 = vpack.c.bf16 %v1695, %v1694
    %v1700 = vpack.c.bf16 %v1697, %v1696
    %v1701 = vpack.c.bf16 %v1698, %v1698
    %s1702 = scalar_lea.vmem %s3, 16
    %v1703 = vld [vmem:[%s1702] sm:$0xf]
    %v1704 = vld [vmem:[%s1702 + $0x4] sm:$0xf]
    %v1705 = vld [vmem:[%s1702 + $0x8] sm:$0xf]
    %v1706 = vld [vmem:[%s1702 + $0xc] sm:$0xf]
    %s1707 = scalar_lea.vmem %s4, 1
    %v1708 = vld [vmem:[%s1707] sm:$0x1]
    %v1710 = vperm.slane %v1708, 0
    %v1716 = vunpack.c.l.b16 %v1703
    %v1717 = vunpack.c.l.b16 %v1704
    %v1718 = vunpack.c.l.b16 %v1705
    %v1719 = vunpack.c.l.b16 %v1706
    %v1720 = vpack.c.b16 %v1717, %v1716
    %v1721 = vpack.c.b16 %v1719, %v1718
    %v1725 = vsel %vm166, %v1699, 0
    %v1728 = vsel %vm166, %v1700, 0
    %v1731 = vsel %vm166, %v1701, 0
    %1733 = vmatpush.bf16.msra.mxu0 0
    %1734 = vmatpush.bf16.msra.mxu0 0
    %1735 = vmatpush.bf16.msra.mxu0 0
    %1736 = vmatpush.bf16.msra.mxu0 0
    %1737 = vmatpush.bf16.msra.mxu0 0
    %1738 = vmatpush.bf16.msra.mxu0 0
    %1739 = vmatpush.bf16.msra.mxu0 %v1721
    %1740 = vmatpush.bf16.msra.mxu0 %v1720
    %1741 = vmatmul.bf16.gmra.mxu0 %v1725
    %v1742 = vpop.f32.mrf.mxu0
    %v1743 = vadd.f32 %v1710, %v1742
    %v1744 = vpop.f32.mrf.mxu0
    %v1745 = vadd.f32 %v1710, %v1744
    %1746 = vmatmul.bf16.gmra.mxu0 %v1728
    %v1747 = vpop.f32.mrf.mxu0
    %v1748 = vadd.f32 %v1710, %v1747
    %v1749 = vpop.f32.mrf.mxu0
    %v1750 = vadd.f32 %v1710, %v1749
    %1751 = vmatmul.bf16.gmra.mxu0 %v1731
    %v1752 = vpop.f32.mrf.mxu0
    %v1753 = vadd.f32 %v1710, %v1752
    %v1754 = vpop.f32.mrf.mxu0
    %1755 = vdwg.mxu0
    %v1756 = vpack.c.bf16 %v1743, %v1743
    %v1757 = vpack.c.bf16 %v1745, %v1745
    %v1758 = vpack.c.bf16 %v1748, %v1748
    %1762 = vrot.lane.b32.xlu0 %v1743, 96
    %v1763 = vpop.permute.xlu0 %1762
    %1764 = vrot.lane.b32.xlu0 %v1745, 96
    %v1765 = vpop.permute.xlu0 %1764
    %1766 = vrot.lane.b32.xlu0 %v1748, 96
    %v1767 = vpop.permute.xlu0 %1766
    %1771 = vxpose.xlu0.b32.start [1/16] %v1763, 128
    %1772 = vxpose.xlu0.b32.cont [2/16] %v1765, 128
    %1773 = vxpose.xlu0.b32.cont [3/16] %v1767, 128
    %1774 = vxpose.xlu0.b32.cont [4/16] 0.0, 128
    %1775 = vxpose.xlu0.b32.cont [5/16] 0.0, 128
    %1776 = vxpose.xlu0.b32.cont [6/16] 0.0, 128
    %1777 = vxpose.xlu0.b32.cont [7/16] 0.0, 128
    %1778 = vxpose.xlu0.b32.cont [8/16] 0.0, 128
    %1779 = vxpose.xlu0.b32.cont [9/16] 0.0, 128
    %1780 = vxpose.xlu0.b32.cont [10/16] 0.0, 128
    %1781 = vxpose.xlu0.b32.cont [11/16] 0.0, 128
    %1782 = vxpose.xlu0.b32.cont [12/16] 0.0, 128
    %1783 = vxpose.xlu0.b32.cont [13/16] 0.0, 128
    %1784 = vxpose.xlu0.b32.cont [14/16] 0.0, 128
    %1785 = vxpose.xlu0.b32.cont [15/16] 0.0, 128
    %1786 = vxpose.xlu0.b32.end [16/16] 0.0, 128
    %v1787 = vpop.trf.xlu0
    %v1788 = vpop.trf.xlu0
    %v1789 = vpop.trf.xlu0
    %v1790 = vpop.trf.xlu0
    %v1791 = vpop.trf.xlu0
    %v1792 = vpop.trf.xlu0
    %v1793 = vpop.trf.xlu0
    %v1794 = vpop.trf.xlu0
    %v1795 = vpop.trf.xlu0
    %v1796 = vpop.trf.xlu0
    %v1797 = vpop.trf.xlu0
    %v1798 = vpop.trf.xlu0
    %v1799 = vpop.trf.xlu0
    %v1800 = vpop.trf.xlu0
    %v1801 = vpop.trf.xlu0
    %v1802 = vpop.trf.xlu0
    %v1803 = vpack.c.bf16 %v1787, %v1787
    %v1804 = vpack.c.bf16 %v1788, %v1788
    %v1805 = vpack.c.bf16 %v1789, %v1789
    %v1806 = vpack.c.bf16 %v1790, %v1790
    %v1810 = vunpack.c.l.b16 %v1756
    %v1811 = vunpack.c.l.b16 %v1757
    %v1812 = vunpack.c.l.b16 %v1758
    %v1813 = vpack.c.b16 %v1811, %v1810
    %v1814 = vpack.c.b16 %v1812, %v1812
    %v1816 = vsel %vm258, %v1813, 0
    %v1819 = vsel %vm258, %v1814, 0
    %v1822 = vsel %vm265, %v1803, 0
    %1824 = vmatpush.bf16.msra.mxu0 0
    %1825 = vmatpush.bf16.msra.mxu0 0
    %1826 = vmatpush.bf16.msra.mxu0 0
    %1827 = vmatpush.bf16.msra.mxu0 0
    %1828 = vmatpush.bf16.msra.mxu0 0
    %1829 = vmatpush.bf16.msra.mxu0 0
    %1830 = vmatpush.bf16.msra.mxu0 0
    %1831 = vmatpush.bf16.msra.mxu0 %v1822
    %1832 = vmatmul.bf16.gmra.mxu0 %v1816
    %v1833 = vpop.f32.mrf.mxu0
    %v1834 = vadd.f32 0.0, %v1833
    %v1835 = vpop.f32.mrf.mxu0
    %v1836 = vadd.f32 0.0, %v1835
    %1837 = vmatmul.bf16.gmra.mxu0 %v1819
    %v1838 = vpop.f32.mrf.mxu0
    %v1839 = vadd.f32 0.0, %v1838
    %v1840 = vpop.f32.mrf.mxu0
    %1841 = vdwg.mxu0
    %v1842 = vmul.f32 %v1834, 0.35355338
    %v1843 = vmul.f32 %v1836, 0.35355338
    %v1844 = vmul.f32 %v1839, 0.35355338
    %v1845 = vsel %vm290, %v1842, -inf
    %1846 = vmax.xlane.f32.xlu0 %v1845
    %v1847 = vpop.xlane.xlu0 %1846
    %v1848 = vsel %vm290, %v1843, -inf
    %1849 = vmax.xlane.f32.xlu0 %v1848
    %v1850 = vpop.xlane.xlu0 %1849
    %v1851 = vsel %vm297, %v1844, -inf
    %1852 = vmax.xlane.f32.xlu0 %v1851
    %v1853 = vpop.xlane.xlu0 %1852
    %v1854 = vsub.f32 %v1842, %v1847
    %v1855 = vsub.f32 %v1843, %v1850
    %v1856 = vsub.f32 %v1844, %v1853
    %v1857 = vmul.f32 %v1854, 1.442695
    %v1858 = vpow.pop %v1857
    %v1859 = vmul.f32 %v1855, 1.442695
    %v1860 = vpow.pop %v1859
    %v1861 = vmul.f32 %v1856, 1.442695
    %v1862 = vpow.pop %v1861
    %v1863 = vsel %vm290, %v1858, 0.0
    %1864 = vadd.xlane.f32.xlu0 %v1863
    %v1865 = vpop.xlane.xlu0 %1864
    %v1866 = vsel %vm290, %v1860, 0.0
    %1867 = vadd.xlane.f32.xlu0 %v1866
    %v1868 = vpop.xlane.xlu0 %1867
    %v1869 = vsel %vm297, %v1862, 0.0
    %1870 = vadd.xlane.f32.xlu0 %v1869
    %v1871 = vpop.xlane.xlu0 %1870
    %v1872 = vrcp.pop %v1865
    %v1873 = vrcp.pop %v1868
    %v1874 = vrcp.pop %v1871
    %v1875 = vmul.f32 %v1858, %v1872
    %v1876 = vmul.f32 %v1860, %v1873
    %v1877 = vmul.f32 %v1862, %v1874
    %v1878 = vpack.c.bf16 %v1876, %v1875
    %v1879 = vpack.c.bf16 %v1877, %v1877
    %1880 = vrot.lane.b32.xlu0 %v1813, 64
    %v1881 = vpop.permute.xlu0 %1880
    %1882 = vrot.lane.b32.xlu0 %v1814, 64
    %v1883 = vpop.permute.xlu0 %1882
    %v1886 = vsel %vm290, %v1878, 0
    %v1889 = vsel %vm290, %v1879, 0
    %v1892 = vand.u32 %v1883, %v340
    %1894 = vmatpush.bf16.msra.mxu0 0
    %1895 = vmatpush.bf16.msra.mxu0 0
    %1896 = vmatpush.bf16.msra.mxu0 0
    %1897 = vmatpush.bf16.msra.mxu0 0
    %1898 = vmatpush.bf16.msra.mxu0 0
    %1899 = vmatpush.bf16.msra.mxu0 0
    %1900 = vmatpush.bf16.msra.mxu0 %v1892
    %1901 = vmatpush.bf16.msra.mxu0 %v1881
    %1902 = vmatmul.bf16.gmra.mxu0 %v1886
    %v1903 = vpop.f32.mrf.mxu0
    %v1904 = vadd.f32 0.0, %v1903
    %v1905 = vpop.f32.mrf.mxu0
    %v1906 = vadd.f32 0.0, %v1905
    %1907 = vmatmul.bf16.gmra.mxu0 %v1889
    %v1908 = vpop.f32.mrf.mxu0
    %v1909 = vadd.f32 0.0, %v1908
    %v1910 = vpop.f32.mrf.mxu0
    %1911 = vdwg.mxu0
    %1912 = vst.msk [vmem:[#allocation2] sm:$0xff] %vm258, %v1904
    %1913 = vst.msk [vmem:[#allocation2 + $0x8] sm:$0xff] %vm258, %v1906
    %1914 = vst.msk [vmem:[#allocation2 + $0x10] sm:$0x1] %vm364, %v1909
    %1915 = vrot.lane.b32.xlu0 %v1813, 120
    %v1916 = vpop.permute.xlu0 %1915
    %1917 = vrot.lane.b32.xlu0 %v1814, 120
    %v1918 = vpop.permute.xlu0 %1917
    %v1920 = vsel %vm258, %v1916, 0
    %v1923 = vsel %vm258, %v1918, 0
    %v1926 = vsel %vm265, %v1804, 0
    %1928 = vmatpush.bf16.msra.mxu0 0
    %1929 = vmatpush.bf16.msra.mxu0 0
    %1930 = vmatpush.bf16.msra.mxu0 0
    %1931 = vmatpush.bf16.msra.mxu0 0
    %1932 = vmatpush.bf16.msra.mxu0 0
    %1933 = vmatpush.bf16.msra.mxu0 0
    %1934 = vmatpush.bf16.msra.mxu0 0
    %1935 = vmatpush.bf16.msra.mxu0 %v1926
    %1936 = vmatmul.bf16.gmra.mxu0 %v1920
    %v1937 = vpop.f32.mrf.mxu0
    %v1938 = vadd.f32 0.0, %v1937
    %v1939 = vpop.f32.mrf.mxu0
    %v1940 = vadd.f32 0.0, %v1939
    %1941 = vmatmul.bf16.gmra.mxu0 %v1923
    %v1942 = vpop.f32.mrf.mxu0
    %v1943 = vadd.f32 0.0, %v1942
    %v1944 = vpop.f32.mrf.mxu0
    %1945 = vdwg.mxu0
    %v1946 = vmul.f32 %v1938, 0.35355338
    %v1947 = vmul.f32 %v1940, 0.35355338
    %v1948 = vmul.f32 %v1943, 0.35355338
    %v1949 = vsel %vm290, %v1946, -inf
    %1950 = vmax.xlane.f32.xlu0 %v1949
    %v1951 = vpop.xlane.xlu0 %1950
    %v1952 = vsel %vm290, %v1947, -inf
    %1953 = vmax.xlane.f32.xlu0 %v1952
    %v1954 = vpop.xlane.xlu0 %1953
    %v1955 = vsel %vm297, %v1948, -inf
    %1956 = vmax.xlane.f32.xlu0 %v1955
    %v1957 = vpop.xlane.xlu0 %1956
    %v1958 = vsub.f32 %v1946, %v1951
    %v1959 = vsub.f32 %v1947, %v1954
    %v1960 = vsub.f32 %v1948, %v1957
    %v1961 = vmul.f32 %v1958, 1.442695
    %v1962 = vpow.pop %v1961
    %v1963 = vmul.f32 %v1959, 1.442695
    %v1964 = vpow.pop %v1963
    %v1965 = vmul.f32 %v1960, 1.442695
    %v1966 = vpow.pop %v1965
    %v1967 = vsel %vm290, %v1962, 0.0
    %1968 = vadd.xlane.f32.xlu0 %v1967
    %v1969 = vpop.xlane.xlu0 %1968
    %v1970 = vsel %vm290, %v1964, 0.0
    %1971 = vadd.xlane.f32.xlu0 %v1970
    %v1972 = vpop.xlane.xlu0 %1971
    %v1973 = vsel %vm297, %v1966, 0.0
    %1974 = vadd.xlane.f32.xlu0 %v1973
    %v1975 = vpop.xlane.xlu0 %1974
    %v1976 = vrcp.pop %v1969
    %v1977 = vrcp.pop %v1972
    %v1978 = vrcp.pop %v1975
    %v1979 = vmul.f32 %v1962, %v1976
    %v1980 = vmul.f32 %v1964, %v1977
    %v1981 = vmul.f32 %v1966, %v1978
    %v1982 = vpack.c.bf16 %v1980, %v1979
    %v1983 = vpack.c.bf16 %v1981, %v1981
    %1984 = vrot.lane.b32.xlu0 %v1813, 56
    %v1985 = vpop.permute.xlu0 %1984
    %1986 = vrot.lane.b32.xlu0 %v1814, 56
    %v1987 = vpop.permute.xlu0 %1986
    %v1990 = vsel %vm290, %v1982, 0
    %v1993 = vsel %vm290, %v1983, 0
    %v1996 = vand.u32 %v1987, %v340
    %1998 = vmatpush.bf16.msra.mxu0 0
    %1999 = vmatpush.bf16.msra.mxu0 0
    %2000 = vmatpush.bf16.msra.mxu0 0
    %2001 = vmatpush.bf16.msra.mxu0 0
    %2002 = vmatpush.bf16.msra.mxu0 0
    %2003 = vmatpush.bf16.msra.mxu0 0
    %2004 = vmatpush.bf16.msra.mxu0 %v1996
    %2005 = vmatpush.bf16.msra.mxu0 %v1985
    %2006 = vmatmul.bf16.gmra.mxu0 %v1990
    %v2007 = vpop.f32.mrf.mxu0
    %v2008 = vadd.f32 0.0, %v2007
    %v2009 = vpop.f32.mrf.mxu0
    %v2010 = vadd.f32 0.0, %v2009
    %2011 = vmatmul.bf16.gmra.mxu0 %v1993
    %v2012 = vpop.f32.mrf.mxu0
    %v2013 = vadd.f32 0.0, %v2012
    %v2014 = vpop.f32.mrf.mxu0
    %2015 = vdwg.mxu0
    %2019 = vrot.lane.b32.xlu0 %v2008, 8
    %v2020 = vpop.permute.xlu0 %2019
    %2021 = vrot.lane.b32.xlu0 %v2010, 8
    %v2022 = vpop.permute.xlu0 %2021
    %2023 = vrot.lane.b32.xlu0 %v2013, 8
    %v2024 = vpop.permute.xlu0 %2023
    %2028 = vst.msk [vmem:[#allocation2] sm:$0xff] %vm479, %v2020
    %2029 = vst.msk [vmem:[#allocation2 + $0x8] sm:$0xff] %vm479, %v2022
    %2030 = vst.msk [vmem:[#allocation2 + $0x10] sm:$0x1] %vm482, %v2024
    %2031 = vrot.lane.b32.xlu0 %v1813, 112
    %v2032 = vpop.permute.xlu0 %2031
    %2033 = vrot.lane.b32.xlu0 %v1814, 112
    %v2034 = vpop.permute.xlu0 %2033
    %v2036 = vsel %vm258, %v2032, 0
    %v2039 = vsel %vm258, %v2034, 0
    %v2042 = vsel %vm265, %v1805, 0
    %2044 = vmatpush.bf16.msra.mxu0 0
    %2045 = vmatpush.bf16.msra.mxu0 0
    %2046 = vmatpush.bf16.msra.mxu0 0
    %2047 = vmatpush.bf16.msra.mxu0 0
    %2048 = vmatpush.bf16.msra.mxu0 0
    %2049 = vmatpush.bf16.msra.mxu0 0
    %2050 = vmatpush.bf16.msra.mxu0 0
    %2051 = vmatpush.bf16.msra.mxu0 %v2042
    %2052 = vmatmul.bf16.gmra.mxu0 %v2036
    %v2053 = vpop.f32.mrf.mxu0
    %v2054 = vadd.f32 0.0, %v2053
    %v2055 = vpop.f32.mrf.mxu0
    %v2056 = vadd.f32 0.0, %v2055
    %2057 = vmatmul.bf16.gmra.mxu0 %v2039
    %v2058 = vpop.f32.mrf.mxu0
    %v2059 = vadd.f32 0.0, %v2058
    %v2060 = vpop.f32.mrf.mxu0
    %2061 = vdwg.mxu0
    %v2062 = vmul.f32 %v2054, 0.35355338
    %v2063 = vmul.f32 %v2056, 0.35355338
    %v2064 = vmul.f32 %v2059, 0.35355338
    %v2065 = vsel %vm290, %v2062, -inf
    %2066 = vmax.xlane.f32.xlu0 %v2065
    %v2067 = vpop.xlane.xlu0 %2066
    %v2068 = vsel %vm290, %v2063, -inf
    %2069 = vmax.xlane.f32.xlu0 %v2068
    %v2070 = vpop.xlane.xlu0 %2069
    %v2071 = vsel %vm297, %v2064, -inf
    %2072 = vmax.xlane.f32.xlu0 %v2071
    %v2073 = vpop.xlane.xlu0 %2072
    %v2074 = vsub.f32 %v2062, %v2067
    %v2075 = vsub.f32 %v2063, %v2070
    %v2076 = vsub.f32 %v2064, %v2073
    %v2077 = vmul.f32 %v2074, 1.442695
    %v2078 = vpow.pop %v2077
    %v2079 = vmul.f32 %v2075, 1.442695
    %v2080 = vpow.pop %v2079
    %v2081 = vmul.f32 %v2076, 1.442695
    %v2082 = vpow.pop %v2081
    %v2083 = vsel %vm290, %v2078, 0.0
    %2084 = vadd.xlane.f32.xlu0 %v2083
    %v2085 = vpop.xlane.xlu0 %2084
    %v2086 = vsel %vm290, %v2080, 0.0
    %2087 = vadd.xlane.f32.xlu0 %v2086
    %v2088 = vpop.xlane.xlu0 %2087
    %v2089 = vsel %vm297, %v2082, 0.0
    %2090 = vadd.xlane.f32.xlu0 %v2089
    %v2091 = vpop.xlane.xlu0 %2090
    %v2092 = vrcp.pop %v2085
    %v2093 = vrcp.pop %v2088
    %v2094 = vrcp.pop %v2091
    %v2095 = vmul.f32 %v2078, %v2092
    %v2096 = vmul.f32 %v2080, %v2093
    %v2097 = vmul.f32 %v2082, %v2094
    %v2098 = vpack.c.bf16 %v2096, %v2095
    %v2099 = vpack.c.bf16 %v2097, %v2097
    %2100 = vrot.lane.b32.xlu0 %v1813, 48
    %v2101 = vpop.permute.xlu0 %2100
    %2102 = vrot.lane.b32.xlu0 %v1814, 48
    %v2103 = vpop.permute.xlu0 %2102
    %v2106 = vsel %vm290, %v2098, 0
    %v2109 = vsel %vm290, %v2099, 0
    %v2112 = vand.u32 %v2103, %v340
    %2114 = vmatpush.bf16.msra.mxu0 0
    %2115 = vmatpush.bf16.msra.mxu0 0
    %2116 = vmatpush.bf16.msra.mxu0 0
    %2117 = vmatpush.bf16.msra.mxu0 0
    %2118 = vmatpush.bf16.msra.mxu0 0
    %2119 = vmatpush.bf16.msra.mxu0 0
    %2120 = vmatpush.bf16.msra.mxu0 %v2112
    %2121 = vmatpush.bf16.msra.mxu0 %v2101
    %2122 = vmatmul.bf16.gmra.mxu0 %v2106
    %v2123 = vpop.f32.mrf.mxu0
    %v2124 = vadd.f32 0.0, %v2123
    %v2125 = vpop.f32.mrf.mxu0
    %v2126 = vadd.f32 0.0, %v2125
    %2127 = vmatmul.bf16.gmra.mxu0 %v2109
    %v2128 = vpop.f32.mrf.mxu0
    %v2129 = vadd.f32 0.0, %v2128
    %v2130 = vpop.f32.mrf.mxu0
    %2131 = vdwg.mxu0
    %2135 = vrot.lane.b32.xlu0 %v2124, 16
    %v2136 = vpop.permute.xlu0 %2135
    %2137 = vrot.lane.b32.xlu0 %v2126, 16
    %v2138 = vpop.permute.xlu0 %2137
    %2139 = vrot.lane.b32.xlu0 %v2129, 16
    %v2140 = vpop.permute.xlu0 %2139
    %2144 = vst.msk [vmem:[#allocation2] sm:$0xff] %vm597, %v2136
    %2145 = vst.msk [vmem:[#allocation2 + $0x8] sm:$0xff] %vm597, %v2138
    %2146 = vst.msk [vmem:[#allocation2 + $0x10] sm:$0x1] %vm600, %v2140
    %2147 = vrot.lane.b32.xlu0 %v1813, 104
    %v2148 = vpop.permute.xlu0 %2147
    %2149 = vrot.lane.b32.xlu0 %v1814, 104
    %v2150 = vpop.permute.xlu0 %2149
    %v2152 = vsel %vm258, %v2148, 0
    %v2155 = vsel %vm258, %v2150, 0
    %v2158 = vsel %vm265, %v1806, 0
    %2160 = vmatpush.bf16.msra.mxu0 0
    %2161 = vmatpush.bf16.msra.mxu0 0
    %2162 = vmatpush.bf16.msra.mxu0 0
    %2163 = vmatpush.bf16.msra.mxu0 0
    %2164 = vmatpush.bf16.msra.mxu0 0
    %2165 = vmatpush.bf16.msra.mxu0 0
    %2166 = vmatpush.bf16.msra.mxu0 0
    %2167 = vmatpush.bf16.msra.mxu0 %v2158
    %2168 = vmatmul.bf16.gmra.mxu0 %v2152
    %v2169 = vpop.f32.mrf.mxu0
    %v2170 = vadd.f32 0.0, %v2169
    %v2171 = vpop.f32.mrf.mxu0
    %v2172 = vadd.f32 0.0, %v2171
    %2173 = vmatmul.bf16.gmra.mxu0 %v2155
    %v2174 = vpop.f32.mrf.mxu0
    %v2175 = vadd.f32 0.0, %v2174
    %v2176 = vpop.f32.mrf.mxu0
    %2177 = vdwg.mxu0
    %v2178 = vmul.f32 %v2170, 0.35355338
    %v2179 = vmul.f32 %v2172, 0.35355338
    %v2180 = vmul.f32 %v2175, 0.35355338
    %v2181 = vsel %vm290, %v2178, -inf
    %2182 = vmax.xlane.f32.xlu0 %v2181
    %v2183 = vpop.xlane.xlu0 %2182
    %v2184 = vsel %vm290, %v2179, -inf
    %2185 = vmax.xlane.f32.xlu0 %v2184
    %v2186 = vpop.xlane.xlu0 %2185
    %v2187 = vsel %vm297, %v2180, -inf
    %2188 = vmax.xlane.f32.xlu0 %v2187
    %v2189 = vpop.xlane.xlu0 %2188
    %v2190 = vsub.f32 %v2178, %v2183
    %v2191 = vsub.f32 %v2179, %v2186
    %v2192 = vsub.f32 %v2180, %v2189
    %v2193 = vmul.f32 %v2190, 1.442695
    %v2194 = vpow.pop %v2193
    %v2195 = vmul.f32 %v2191, 1.442695
    %v2196 = vpow.pop %v2195
    %v2197 = vmul.f32 %v2192, 1.442695
    %v2198 = vpow.pop %v2197
    %v2199 = vsel %vm290, %v2194, 0.0
    %2200 = vadd.xlane.f32.xlu0 %v2199
    %v2201 = vpop.xlane.xlu0 %2200
    %v2202 = vsel %vm290, %v2196, 0.0
    %2203 = vadd.xlane.f32.xlu0 %v2202
    %v2204 = vpop.xlane.xlu0 %2203
    %v2205 = vsel %vm297, %v2198, 0.0
    %2206 = vadd.xlane.f32.xlu0 %v2205
    %v2207 = vpop.xlane.xlu0 %2206
    %v2208 = vrcp.pop %v2201
    %v2209 = vrcp.pop %v2204
    %v2210 = vrcp.pop %v2207
    %v2211 = vmul.f32 %v2194, %v2208
    %v2212 = vmul.f32 %v2196, %v2209
    %v2213 = vmul.f32 %v2198, %v2210
    %v2214 = vpack.c.bf16 %v2212, %v2211
    %v2215 = vpack.c.bf16 %v2213, %v2213
    %2216 = vrot.lane.b32.xlu0 %v1813, 40
    %v2217 = vpop.permute.xlu0 %2216
    %2218 = vrot.lane.b32.xlu0 %v1814, 40
    %v2219 = vpop.permute.xlu0 %2218
    %v2222 = vsel %vm290, %v2214, 0
    %v2225 = vsel %vm290, %v2215, 0
    %v2228 = vand.u32 %v2219, %v340
    %2230 = vmatpush.bf16.msra.mxu0 0
    %2231 = vmatpush.bf16.msra.mxu0 0
    %2232 = vmatpush.bf16.msra.mxu0 0
    %2233 = vmatpush.bf16.msra.mxu0 0
    %2234 = vmatpush.bf16.msra.mxu0 0
    %2235 = vmatpush.bf16.msra.mxu0 0
    %2236 = vmatpush.bf16.msra.mxu0 %v2228
    %2237 = vmatpush.bf16.msra.mxu0 %v2217
    %2238 = vmatmul.bf16.gmra.mxu0 %v2222
    %v2239 = vpop.f32.mrf.mxu0
    %v2240 = vadd.f32 0.0, %v2239
    %v2241 = vpop.f32.mrf.mxu0
    %v2242 = vadd.f32 0.0, %v2241
    %2243 = vmatmul.bf16.gmra.mxu0 %v2225
    %v2244 = vpop.f32.mrf.mxu0
    %v2245 = vadd.f32 0.0, %v2244
    %v2246 = vpop.f32.mrf.mxu0
    %2247 = vdwg.mxu0
    %2251 = vrot.lane.b32.xlu0 %v2240, 24
    %v2252 = vpop.permute.xlu0 %2251
    %2253 = vrot.lane.b32.xlu0 %v2242, 24
    %v2254 = vpop.permute.xlu0 %2253
    %2255 = vrot.lane.b32.xlu0 %v2245, 24
    %v2256 = vpop.permute.xlu0 %2255
    %2260 = vst.msk [vmem:[#allocation2] sm:$0xff] %vm715, %v2252
    %2261 = vst.msk [vmem:[#allocation2 + $0x8] sm:$0xff] %vm715, %v2254
    %2262 = vst.msk [vmem:[#allocation2 + $0x10] sm:$0x1] %vm718, %v2256
    %v2263 = vpack.c.bf16 %v1750, %v1750
    %v2264 = vpack.c.bf16 %v1753, %v1753
    %v2267 = vrot.slane %v1748, 1
    %v2268 = vrot.slane %v1750, 1
    %v2269 = vsel %vm724, %v2267, %v2268
    %v2270 = vrot.slane %v1753, 1
    %v2271 = vsel %vm724, %v2268, %v2270
    %2272 = vrot.lane.b32.xlu0 %v2269, 96
    %v2273 = vpop.permute.xlu0 %2272
    %2274 = vrot.lane.b32.xlu0 %v2271, 96
    %v2275 = vpop.permute.xlu0 %2274
    %2276 = vrot.lane.b32.xlu0 %v2270, 96
    %v2277 = vpop.permute.xlu0 %2276
    %2281 = vxpose.xlu0.b32.start [1/16] %v2273, 128
    %2282 = vxpose.xlu0.b32.cont [2/16] %v2275, 128
    %2283 = vxpose.xlu0.b32.cont [3/16] %v2277, 128
    %2284 = vxpose.xlu0.b32.cont [4/16] 0.0, 128
    %2285 = vxpose.xlu0.b32.cont [5/16] 0.0, 128
    %2286 = vxpose.xlu0.b32.cont [6/16] 0.0, 128
    %2287 = vxpose.xlu0.b32.cont [7/16] 0.0, 128
    %2288 = vxpose.xlu0.b32.cont [8/16] 0.0, 128
    %2289 = vxpose.xlu0.b32.cont [9/16] 0.0, 128
    %2290 = vxpose.xlu0.b32.cont [10/16] 0.0, 128
    %2291 = vxpose.xlu0.b32.cont [11/16] 0.0, 128
    %2292 = vxpose.xlu0.b32.cont [12/16] 0.0, 128
    %2293 = vxpose.xlu0.b32.cont [13/16] 0.0, 128
    %2294 = vxpose.xlu0.b32.cont [14/16] 0.0, 128
    %2295 = vxpose.xlu0.b32.cont [15/16] 0.0, 128
    %2296 = vxpose.xlu0.b32.end [16/16] 0.0, 128
    %v2297 = vpop.trf.xlu0
    %v2298 = vpop.trf.xlu0
    %v2299 = vpop.trf.xlu0
    %v2300 = vpop.trf.xlu0
    %v2301 = vpop.trf.xlu0
    %v2302 = vpop.trf.xlu0
    %v2303 = vpop.trf.xlu0
    %v2304 = vpop.trf.xlu0
    %v2305 = vpop.trf.xlu0
    %v2306 = vpop.trf.xlu0
    %v2307 = vpop.trf.xlu0
    %v2308 = vpop.trf.xlu0
    %v2309 = vpop.trf.xlu0
    %v2310 = vpop.trf.xlu0
    %v2311 = vpop.trf.xlu0
    %v2312 = vpop.trf.xlu0
    %v2313 = vpack.c.bf16 %v2297, %v2297
    %v2314 = vpack.c.bf16 %v2298, %v2298
    %v2315 = vpack.c.bf16 %v2299, %v2299
    %v2316 = vpack.c.bf16 %v2300, %v2300
    %v2319 = vunpack.c.l.b16 %v2263
    %v2320 = vunpack.c.l.b16 %v2264
    %v2321 = vpack.c.b16 %v2319, %v1812
    %v2322 = vpack.c.b16 %v2320, %v2320
    %v2324 = vshrl.u32 %v2321, 16
    %v2326 = vshll.u32 %v2321, 16
    %v2328 = vrot.slane %v2326, 1
    %v2329 = vor.u32 %v2324, %v2328
    %v2331 = vshll.u32 %v2322, 16
    %v2333 = vrot.slane %v2331, 1
    %v2334 = vsel %vm781, %v2329, %v2333
    %v2335 = vshrl.u32 %v2322, 16
    %v2338 = vsel %vm258, %v2334, 0
    %v2341 = vsel %vm258, %v2335, 0
    %v2344 = vsel %vm265, %v2313, 0
    %2346 = vmatpush.bf16.msra.mxu0 0
    %2347 = vmatpush.bf16.msra.mxu0 0
    %2348 = vmatpush.bf16.msra.mxu0 0
    %2349 = vmatpush.bf16.msra.mxu0 0
    %2350 = vmatpush.bf16.msra.mxu0 0
    %2351 = vmatpush.bf16.msra.mxu0 0
    %2352 = vmatpush.bf16.msra.mxu0 0
    %2353 = vmatpush.bf16.msra.mxu0 %v2344
    %2354 = vmatmul.bf16.gmra.mxu0 %v2338
    %v2355 = vpop.f32.mrf.mxu0
    %v2356 = vadd.f32 0.0, %v2355
    %v2357 = vpop.f32.mrf.mxu0
    %v2358 = vadd.f32 0.0, %v2357
    %2359 = vmatmul.bf16.gmra.mxu0 %v2341
    %v2360 = vpop.f32.mrf.mxu0
    %v2361 = vadd.f32 0.0, %v2360
    %v2362 = vpop.f32.mrf.mxu0
    %2363 = vdwg.mxu0
    %v2364 = vmul.f32 %v2356, 0.35355338
    %v2365 = vmul.f32 %v2358, 0.35355338
    %v2366 = vmul.f32 %v2361, 0.35355338
    %v2367 = vsel %vm290, %v2364, -inf
    %2368 = vmax.xlane.f32.xlu0 %v2367
    %v2369 = vpop.xlane.xlu0 %2368
    %v2370 = vsel %vm290, %v2365, -inf
    %2371 = vmax.xlane.f32.xlu0 %v2370
    %v2372 = vpop.xlane.xlu0 %2371
    %v2373 = vsel %vm297, %v2366, -inf
    %2374 = vmax.xlane.f32.xlu0 %v2373
    %v2375 = vpop.xlane.xlu0 %2374
    %v2376 = vsub.f32 %v2364, %v2369
    %v2377 = vsub.f32 %v2365, %v2372
    %v2378 = vsub.f32 %v2366, %v2375
    %v2379 = vmul.f32 %v2376, 1.442695
    %v2380 = vpow.pop %v2379
    %v2381 = vmul.f32 %v2377, 1.442695
    %v2382 = vpow.pop %v2381
    %v2383 = vmul.f32 %v2378, 1.442695
    %v2384 = vpow.pop %v2383
    %v2385 = vsel %vm290, %v2380, 0.0
    %2386 = vadd.xlane.f32.xlu0 %v2385
    %v2387 = vpop.xlane.xlu0 %2386
    %v2388 = vsel %vm290, %v2382, 0.0
    %2389 = vadd.xlane.f32.xlu0 %v2388
    %v2390 = vpop.xlane.xlu0 %2389
    %v2391 = vsel %vm297, %v2384, 0.0
    %2392 = vadd.xlane.f32.xlu0 %v2391
    %v2393 = vpop.xlane.xlu0 %2392
    %v2394 = vrcp.pop %v2387
    %v2395 = vrcp.pop %v2390
    %v2396 = vrcp.pop %v2393
    %v2397 = vmul.f32 %v2380, %v2394
    %v2398 = vmul.f32 %v2382, %v2395
    %v2399 = vmul.f32 %v2384, %v2396
    %v2400 = vpack.c.bf16 %v2398, %v2397
    %v2401 = vpack.c.bf16 %v2399, %v2399
    %2402 = vrot.lane.b32.xlu0 %v2334, 64
    %v2403 = vpop.permute.xlu0 %2402
    %2404 = vrot.lane.b32.xlu0 %v2335, 64
    %v2405 = vpop.permute.xlu0 %2404
    %v2408 = vsel %vm290, %v2400, 0
    %v2411 = vsel %vm290, %v2401, 0
    %v2414 = vand.u32 %v2405, %v340
    %2416 = vmatpush.bf16.msra.mxu0 0
    %2417 = vmatpush.bf16.msra.mxu0 0
    %2418 = vmatpush.bf16.msra.mxu0 0
    %2419 = vmatpush.bf16.msra.mxu0 0
    %2420 = vmatpush.bf16.msra.mxu0 0
    %2421 = vmatpush.bf16.msra.mxu0 0
    %2422 = vmatpush.bf16.msra.mxu0 %v2414
    %2423 = vmatpush.bf16.msra.mxu0 %v2403
    %2424 = vmatmul.bf16.gmra.mxu0 %v2408
    %v2425 = vpop.f32.mrf.mxu0
    %v2426 = vadd.f32 0.0, %v2425
    %v2427 = vpop.f32.mrf.mxu0
    %v2428 = vadd.f32 0.0, %v2427
    %2429 = vmatmul.bf16.gmra.mxu0 %v2411
    %v2430 = vpop.f32.mrf.mxu0
    %v2431 = vadd.f32 0.0, %v2430
    %v2432 = vpop.f32.mrf.mxu0
    %2433 = vdwg.mxu0
    %2434 = vst.msk [vmem:[#allocation2 + $0x11] sm:$0xff] %vm258, %v2426
    %2435 = vst.msk [vmem:[#allocation2 + $0x19] sm:$0xff] %vm258, %v2428
    %2436 = vst.msk [vmem:[#allocation2 + $0x21] sm:$0x1] %vm364, %v2431
    %2437 = vrot.lane.b32.xlu0 %v2334, 120
    %v2438 = vpop.permute.xlu0 %2437
    %2439 = vrot.lane.b32.xlu0 %v2335, 120
    %v2440 = vpop.permute.xlu0 %2439
    %v2442 = vsel %vm258, %v2438, 0
    %v2445 = vsel %vm258, %v2440, 0
    %v2448 = vsel %vm265, %v2314, 0
    %2450 = vmatpush.bf16.msra.mxu0 0
    %2451 = vmatpush.bf16.msra.mxu0 0
    %2452 = vmatpush.bf16.msra.mxu0 0
    %2453 = vmatpush.bf16.msra.mxu0 0
    %2454 = vmatpush.bf16.msra.mxu0 0
    %2455 = vmatpush.bf16.msra.mxu0 0
    %2456 = vmatpush.bf16.msra.mxu0 0
    %2457 = vmatpush.bf16.msra.mxu0 %v2448
    %2458 = vmatmul.bf16.gmra.mxu0 %v2442
    %v2459 = vpop.f32.mrf.mxu0
    %v2460 = vadd.f32 0.0, %v2459
    %v2461 = vpop.f32.mrf.mxu0
    %v2462 = vadd.f32 0.0, %v2461
    %2463 = vmatmul.bf16.gmra.mxu0 %v2445
    %v2464 = vpop.f32.mrf.mxu0
    %v2465 = vadd.f32 0.0, %v2464
    %v2466 = vpop.f32.mrf.mxu0
    %2467 = vdwg.mxu0
    %v2468 = vmul.f32 %v2460, 0.35355338
    %v2469 = vmul.f32 %v2462, 0.35355338
    %v2470 = vmul.f32 %v2465, 0.35355338
    %v2471 = vsel %vm290, %v2468, -inf
    %2472 = vmax.xlane.f32.xlu0 %v2471
    %v2473 = vpop.xlane.xlu0 %2472
    %v2474 = vsel %vm290, %v2469, -inf
    %2475 = vmax.xlane.f32.xlu0 %v2474
    %v2476 = vpop.xlane.xlu0 %2475
    %v2477 = vsel %vm297, %v2470, -inf
    %2478 = vmax.xlane.f32.xlu0 %v2477
    %v2479 = vpop.xlane.xlu0 %2478
    %v2480 = vsub.f32 %v2468, %v2473
    %v2481 = vsub.f32 %v2469, %v2476
    %v2482 = vsub.f32 %v2470, %v2479
    %v2483 = vmul.f32 %v2480, 1.442695
    %v2484 = vpow.pop %v2483
    %v2485 = vmul.f32 %v2481, 1.442695
    %v2486 = vpow.pop %v2485
    %v2487 = vmul.f32 %v2482, 1.442695
    %v2488 = vpow.pop %v2487
    %v2489 = vsel %vm290, %v2484, 0.0
    %2490 = vadd.xlane.f32.xlu0 %v2489
    %v2491 = vpop.xlane.xlu0 %2490
    %v2492 = vsel %vm290, %v2486, 0.0
    %2493 = vadd.xlane.f32.xlu0 %v2492
    %v2494 = vpop.xlane.xlu0 %2493
    %v2495 = vsel %vm297, %v2488, 0.0
    %2496 = vadd.xlane.f32.xlu0 %v2495
    %v2497 = vpop.xlane.xlu0 %2496
    %v2498 = vrcp.pop %v2491
    %v2499 = vrcp.pop %v2494
    %v2500 = vrcp.pop %v2497
    %v2501 = vmul.f32 %v2484, %v2498
    %v2502 = vmul.f32 %v2486, %v2499
    %v2503 = vmul.f32 %v2488, %v2500
    %v2504 = vpack.c.bf16 %v2502, %v2501
    %v2505 = vpack.c.bf16 %v2503, %v2503
    %2506 = vrot.lane.b32.xlu0 %v2334, 56
    %v2507 = vpop.permute.xlu0 %2506
    %2508 = vrot.lane.b32.xlu0 %v2335, 56
    %v2509 = vpop.permute.xlu0 %2508
    %v2512 = vsel %vm290, %v2504, 0
    %v2515 = vsel %vm290, %v2505, 0
    %v2518 = vand.u32 %v2509, %v340
    %2520 = vmatpush.bf16.msra.mxu0 0
    %2521 = vmatpush.bf16.msra.mxu0 0
    %2522 = vmatpush.bf16.msra.mxu0 0
    %2523 = vmatpush.bf16.msra.mxu0 0
    %2524 = vmatpush.bf16.msra.mxu0 0
    %2525 = vmatpush.bf16.msra.mxu0 0
    %2526 = vmatpush.bf16.msra.mxu0 %v2518
    %2527 = vmatpush.bf16.msra.mxu0 %v2507
    %2528 = vmatmul.bf16.gmra.mxu0 %v2512
    %v2529 = vpop.f32.mrf.mxu0
    %v2530 = vadd.f32 0.0, %v2529
    %v2531 = vpop.f32.mrf.mxu0
    %v2532 = vadd.f32 0.0, %v2531
    %2533 = vmatmul.bf16.gmra.mxu0 %v2515
    %v2534 = vpop.f32.mrf.mxu0
    %v2535 = vadd.f32 0.0, %v2534
    %v2536 = vpop.f32.mrf.mxu0
    %2537 = vdwg.mxu0
    %2541 = vrot.lane.b32.xlu0 %v2530, 8
    %v2542 = vpop.permute.xlu0 %2541
    %2543 = vrot.lane.b32.xlu0 %v2532, 8
    %v2544 = vpop.permute.xlu0 %2543
    %2545 = vrot.lane.b32.xlu0 %v2535, 8
    %v2546 = vpop.permute.xlu0 %2545
    %2550 = vst.msk [vmem:[#allocation2 + $0x11] sm:$0xff] %vm479, %v2542
    %2551 = vst.msk [vmem:[#allocation2 + $0x19] sm:$0xff] %vm479, %v2544
    %2552 = vst.msk [vmem:[#allocation2 + $0x21] sm:$0x1] %vm482, %v2546
    %2553 = vrot.lane.b32.xlu0 %v2334, 112
    %v2554 = vpop.permute.xlu0 %2553
    %2555 = vrot.lane.b32.xlu0 %v2335, 112
    %v2556 = vpop.permute.xlu0 %2555
    %v2558 = vsel %vm258, %v2554, 0
    %v2561 = vsel %vm258, %v2556, 0
    %v2564 = vsel %vm265, %v2315, 0
    %2566 = vmatpush.bf16.msra.mxu0 0
    %2567 = vmatpush.bf16.msra.mxu0 0
    %2568 = vmatpush.bf16.msra.mxu0 0
    %2569 = vmatpush.bf16.msra.mxu0 0
    %2570 = vmatpush.bf16.msra.mxu0 0
    %2571 = vmatpush.bf16.msra.mxu0 0
    %2572 = vmatpush.bf16.msra.mxu0 0
    %2573 = vmatpush.bf16.msra.mxu0 %v2564
    %2574 = vmatmul.bf16.gmra.mxu0 %v2558
    %v2575 = vpop.f32.mrf.mxu0
    %v2576 = vadd.f32 0.0, %v2575
    %v2577 = vpop.f32.mrf.mxu0
    %v2578 = vadd.f32 0.0, %v2577
    %2579 = vmatmul.bf16.gmra.mxu0 %v2561
    %v2580 = vpop.f32.mrf.mxu0
    %v2581 = vadd.f32 0.0, %v2580
    %v2582 = vpop.f32.mrf.mxu0
    %2583 = vdwg.mxu0
    %v2584 = vmul.f32 %v2576, 0.35355338
    %v2585 = vmul.f32 %v2578, 0.35355338
    %v2586 = vmul.f32 %v2581, 0.35355338
    %v2587 = vsel %vm290, %v2584, -inf
    %2588 = vmax.xlane.f32.xlu0 %v2587
    %v2589 = vpop.xlane.xlu0 %2588
    %v2590 = vsel %vm290, %v2585, -inf
    %2591 = vmax.xlane.f32.xlu0 %v2590
    %v2592 = vpop.xlane.xlu0 %2591
    %v2593 = vsel %vm297, %v2586, -inf
    %2594 = vmax.xlane.f32.xlu0 %v2593
    %v2595 = vpop.xlane.xlu0 %2594
    %v2596 = vsub.f32 %v2584, %v2589
    %v2597 = vsub.f32 %v2585, %v2592
    %v2598 = vsub.f32 %v2586, %v2595
    %v2599 = vmul.f32 %v2596, 1.442695
    %v2600 = vpow.pop %v2599
    %v2601 = vmul.f32 %v2597, 1.442695
    %v2602 = vpow.pop %v2601
    %v2603 = vmul.f32 %v2598, 1.442695
    %v2604 = vpow.pop %v2603
    %v2605 = vsel %vm290, %v2600, 0.0
    %2606 = vadd.xlane.f32.xlu0 %v2605
    %v2607 = vpop.xlane.xlu0 %2606
    %v2608 = vsel %vm290, %v2602, 0.0
    %2609 = vadd.xlane.f32.xlu0 %v2608
    %v2610 = vpop.xlane.xlu0 %2609
    %v2611 = vsel %vm297, %v2604, 0.0
    %2612 = vadd.xlane.f32.xlu0 %v2611
    %v2613 = vpop.xlane.xlu0 %2612
    %v2614 = vrcp.pop %v2607
    %v2615 = vrcp.pop %v2610
    %v2616 = vrcp.pop %v2613
    %v2617 = vmul.f32 %v2600, %v2614
    %v2618 = vmul.f32 %v2602, %v2615
    %v2619 = vmul.f32 %v2604, %v2616
    %v2620 = vpack.c.bf16 %v2618, %v2617
    %v2621 = vpack.c.bf16 %v2619, %v2619
    %2622 = vrot.lane.b32.xlu0 %v2334, 48
    %v2623 = vpop.permute.xlu0 %2622
    %2624 = vrot.lane.b32.xlu0 %v2335, 48
    %v2625 = vpop.permute.xlu0 %2624
    %v2628 = vsel %vm290, %v2620, 0
    %v2631 = vsel %vm290, %v2621, 0
    %v2634 = vand.u32 %v2625, %v340
    %2636 = vmatpush.bf16.msra.mxu0 0
    %2637 = vmatpush.bf16.msra.mxu0 0
    %2638 = vmatpush.bf16.msra.mxu0 0
    %2639 = vmatpush.bf16.msra.mxu0 0
    %2640 = vmatpush.bf16.msra.mxu0 0
    %2641 = vmatpush.bf16.msra.mxu0 0
    %2642 = vmatpush.bf16.msra.mxu0 %v2634
    %2643 = vmatpush.bf16.msra.mxu0 %v2623
    %2644 = vmatmul.bf16.gmra.mxu0 %v2628
    %v2645 = vpop.f32.mrf.mxu0
    %v2646 = vadd.f32 0.0, %v2645
    %v2647 = vpop.f32.mrf.mxu0
    %v2648 = vadd.f32 0.0, %v2647
    %2649 = vmatmul.bf16.gmra.mxu0 %v2631
    %v2650 = vpop.f32.mrf.mxu0
    %v2651 = vadd.f32 0.0, %v2650
    %v2652 = vpop.f32.mrf.mxu0
    %2653 = vdwg.mxu0
    %2657 = vrot.lane.b32.xlu0 %v2646, 16
    %v2658 = vpop.permute.xlu0 %2657
    %2659 = vrot.lane.b32.xlu0 %v2648, 16
    %v2660 = vpop.permute.xlu0 %2659
    %2661 = vrot.lane.b32.xlu0 %v2651, 16
    %v2662 = vpop.permute.xlu0 %2661
    %2666 = vst.msk [vmem:[#allocation2 + $0x11] sm:$0xff] %vm597, %v2658
    %2667 = vst.msk [vmem:[#allocation2 + $0x19] sm:$0xff] %vm597, %v2660
    %2668 = vst.msk [vmem:[#allocation2 + $0x21] sm:$0x1] %vm600, %v2662
    %2669 = vrot.lane.b32.xlu0 %v2334, 104
    %v2670 = vpop.permute.xlu0 %2669
    %2671 = vrot.lane.b32.xlu0 %v2335, 104
    %v2672 = vpop.permute.xlu0 %2671
    %v2674 = vsel %vm258, %v2670, 0
    %v2677 = vsel %vm258, %v2672, 0
    %v2680 = vsel %vm265, %v2316, 0
    %2682 = vmatpush.bf16.msra.mxu0 0
    %2683 = vmatpush.bf16.msra.mxu0 0
    %2684 = vmatpush.bf16.msra.mxu0 0
    %2685 = vmatpush.bf16.msra.mxu0 0
    %2686 = vmatpush.bf16.msra.mxu0 0
    %2687 = vmatpush.bf16.msra.mxu0 0
    %2688 = vmatpush.bf16.msra.mxu0 0
    %2689 = vmatpush.bf16.msra.mxu0 %v2680
    %2690 = vmatmul.bf16.gmra.mxu0 %v2674
    %v2691 = vpop.f32.mrf.mxu0
    %v2692 = vadd.f32 0.0, %v2691
    %v2693 = vpop.f32.mrf.mxu0
    %v2694 = vadd.f32 0.0, %v2693
    %2695 = vmatmul.bf16.gmra.mxu0 %v2677
    %v2696 = vpop.f32.mrf.mxu0
    %v2697 = vadd.f32 0.0, %v2696
    %v2698 = vpop.f32.mrf.mxu0
    %2699 = vdwg.mxu0
    %v2700 = vmul.f32 %v2692, 0.35355338
    %v2701 = vmul.f32 %v2694, 0.35355338
    %v2702 = vmul.f32 %v2697, 0.35355338
    %v2703 = vsel %vm290, %v2700, -inf
    %2704 = vmax.xlane.f32.xlu0 %v2703
    %v2705 = vpop.xlane.xlu0 %2704
    %v2706 = vsel %vm290, %v2701, -inf
    %2707 = vmax.xlane.f32.xlu0 %v2706
    %v2708 = vpop.xlane.xlu0 %2707
    %v2709 = vsel %vm297, %v2702, -inf
    %2710 = vmax.xlane.f32.xlu0 %v2709
    %v2711 = vpop.xlane.xlu0 %2710
    %v2712 = vsub.f32 %v2700, %v2705
    %v2713 = vsub.f32 %v2701, %v2708
    %v2714 = vsub.f32 %v2702, %v2711
    %v2715 = vmul.f32 %v2712, 1.442695
    %v2716 = vpow.pop %v2715
    %v2717 = vmul.f32 %v2713, 1.442695
    %v2718 = vpow.pop %v2717
    %v2719 = vmul.f32 %v2714, 1.442695
    %v2720 = vpow.pop %v2719
    %v2721 = vsel %vm290, %v2716, 0.0
    %2722 = vadd.xlane.f32.xlu0 %v2721
    %v2723 = vpop.xlane.xlu0 %2722
    %v2724 = vsel %vm290, %v2718, 0.0
    %2725 = vadd.xlane.f32.xlu0 %v2724
    %v2726 = vpop.xlane.xlu0 %2725
    %v2727 = vsel %vm297, %v2720, 0.0
    %2728 = vadd.xlane.f32.xlu0 %v2727
    %v2729 = vpop.xlane.xlu0 %2728
    %v2730 = vrcp.pop %v2723
    %v2731 = vrcp.pop %v2726
    %v2732 = vrcp.pop %v2729
    %v2733 = vmul.f32 %v2716, %v2730
    %v2734 = vmul.f32 %v2718, %v2731
    %v2735 = vmul.f32 %v2720, %v2732
    %v2736 = vpack.c.bf16 %v2734, %v2733
    %v2737 = vpack.c.bf16 %v2735, %v2735
    %2738 = vrot.lane.b32.xlu0 %v2334, 40
    %v2739 = vpop.permute.xlu0 %2738
    %2740 = vrot.lane.b32.xlu0 %v2335, 40
    %v2741 = vpop.permute.xlu0 %2740
    %v2744 = vsel %vm290, %v2736, 0
    %v2747 = vsel %vm290, %v2737, 0
    %v2750 = vand.u32 %v2741, %v340
    %2752 = vmatpush.bf16.msra.mxu0 0
    %2753 = vmatpush.bf16.msra.mxu0 0
    %2754 = vmatpush.bf16.msra.mxu0 0
    %2755 = vmatpush.bf16.msra.mxu0 0
    %2756 = vmatpush.bf16.msra.mxu0 0
    %2757 = vmatpush.bf16.msra.mxu0 0
    %2758 = vmatpush.bf16.msra.mxu0 %v2750
    %2759 = vmatpush.bf16.msra.mxu0 %v2739
    %2760 = vmatmul.bf16.gmra.mxu0 %v2744
    %v2761 = vpop.f32.mrf.mxu0
    %v2762 = vadd.f32 0.0, %v2761
    %v2763 = vpop.f32.mrf.mxu0
    %v2764 = vadd.f32 0.0, %v2763
    %2765 = vmatmul.bf16.gmra.mxu0 %v2747
    %v2766 = vpop.f32.mrf.mxu0
    %v2767 = vadd.f32 0.0, %v2766
    %v2768 = vpop.f32.mrf.mxu0
    %2769 = vdwg.mxu0
    %2773 = vrot.lane.b32.xlu0 %v2762, 24
    %v2774 = vpop.permute.xlu0 %2773
    %2775 = vrot.lane.b32.xlu0 %v2764, 24
    %v2776 = vpop.permute.xlu0 %2775
    %2777 = vrot.lane.b32.xlu0 %v2767, 24
    %v2778 = vpop.permute.xlu0 %2777
    %2782 = vst.msk [vmem:[#allocation2 + $0x11] sm:$0xff] %vm715, %v2774
    %2783 = vst.msk [vmem:[#allocation2 + $0x19] sm:$0xff] %vm715, %v2776
    %2784 = vst.msk [vmem:[#allocation2 + $0x21] sm:$0x1] %vm718, %v2778
    %v2785 = vld [vmem:[#allocation2] sm:$0xff]
    %v2786 = vld [vmem:[#allocation2 + $0x8] sm:$0xff]
    %v2787 = vld [vmem:[#allocation2 + $0x10] sm:$0xff]
    %v2788 = vld [vmem:[#allocation2 + $0x18] sm:$0xff]
    %v2789 = vld [vmem:[#allocation2 + $0x20] sm:$0x3]
    %v2790 = vpack.c.bf16 %v2786, %v2785
    %v2791 = vpack.c.bf16 %v2788, %v2787
    %v2792 = vpack.c.bf16 %v2789, %v2789
    %s2793 = scalar_lea.vmem %s5, 16
    %v2794 = vld [vmem:[%s2793] sm:$0xf]
    %v2795 = vld [vmem:[%s2793 + $0x4] sm:$0xf]
    %v2796 = vld [vmem:[%s2793 + $0x8] sm:$0xf]
    %v2797 = vld [vmem:[%s2793 + $0xc] sm:$0xf]
    %s2798 = scalar_lea.vmem %s6, 1
    %v2799 = vld [vmem:[%s2798] sm:$0x1]
    %v2801 = vperm.slane %v2799, 0
    %v2807 = vunpack.c.l.b16 %v2794
    %v2808 = vunpack.c.l.b16 %v2795
    %v2809 = vunpack.c.l.b16 %v2796
    %v2810 = vunpack.c.l.b16 %v2797
    %v2811 = vpack.c.b16 %v2808, %v2807
    %v2812 = vpack.c.b16 %v2810, %v2809
    %v2816 = vsel %vm166, %v2790, 0
    %v2819 = vsel %vm166, %v2791, 0
    %v2822 = vsel %vm166, %v2792, 0
    %2824 = vmatpush.bf16.msra.mxu0 0
    %2825 = vmatpush.bf16.msra.mxu0 0
    %2826 = vmatpush.bf16.msra.mxu0 0
    %2827 = vmatpush.bf16.msra.mxu0 0
    %2828 = vmatpush.bf16.msra.mxu0 0
    %2829 = vmatpush.bf16.msra.mxu0 0
    %2830 = vmatpush.bf16.msra.mxu0 %v2812
    %2831 = vmatpush.bf16.msra.mxu0 %v2811
    %2832 = vmatmul.bf16.gmra.mxu0 %v2816
    %v2833 = vpop.f32.mrf.mxu0
    %v2834 = vadd.f32 %v2801, %v2833
    %v2835 = vpop.f32.mrf.mxu0
    %v2836 = vadd.f32 %v2801, %v2835
    %2837 = vmatmul.bf16.gmra.mxu0 %v2819
    %v2838 = vpop.f32.mrf.mxu0
    %v2839 = vadd.f32 %v2801, %v2838
    %v2840 = vpop.f32.mrf.mxu0
    %v2841 = vadd.f32 %v2801, %v2840
    %2842 = vmatmul.bf16.gmra.mxu0 %v2822
    %v2843 = vpop.f32.mrf.mxu0
    %v2844 = vadd.f32 %v2801, %v2843
    %v2845 = vpop.f32.mrf.mxu0
    %2846 = vdwg.mxu0
    %v2847 = vadd.f32 %v1694, %v2834
    %v2848 = vadd.f32 %v1695, %v2836
    %v2849 = vadd.f32 %v1696, %v2839
    %v2850 = vadd.f32 %v1697, %v2841
    %v2851 = vadd.f32 %v1698, %v2844
    %s2852 = scalar_lea.vmem %s7, 2
    %v2853 = vld [vmem:[%s2852] sm:$0x3]
    %v2854 = vsel %vm166, %v2847, 0.0
    %2855 = vadd.xlane.f32.xlu0 %v2854
    %v2856 = vpop.xlane.xlu0 %2855
    %v2857 = vsel %vm166, %v2848, 0.0
    %2858 = vadd.xlane.f32.xlu0 %v2857
    %v2859 = vpop.xlane.xlu0 %2858
    %v2860 = vsel %vm166, %v2849, 0.0
    %2861 = vadd.xlane.f32.xlu0 %v2860
    %v2862 = vpop.xlane.xlu0 %2861
    %v2863 = vsel %vm166, %v2850, 0.0
    %2864 = vadd.xlane.f32.xlu0 %v2863
    %v2865 = vpop.xlane.xlu0 %2864
    %v2866 = vsel %vm1322, %v2851, 0.0
    %2867 = vadd.xlane.f32.xlu0 %v2866
    %v2868 = vpop.xlane.xlu0 %2867
    %v2869 = vmul.f32 %v2856, %v1332
    %v2870 = vmul.f32 %v2859, %v1332
    %v2871 = vmul.f32 %v2862, %v1332
    %v2872 = vmul.f32 %v2865, %v1332
    %v2873 = vmul.f32 %v2868, %v1332
    %v2874 = vsub.f32 %v2847, %v2869
    %v2875 = vsub.f32 %v2848, %v2870
    %v2876 = vsub.f32 %v2849, %v2871
    %v2877 = vsub.f32 %v2850, %v2872
    %v2878 = vsub.f32 %v2851, %v2873
    %v2879 = vmul.f32 %v2874, %v2874
    %v2880 = vmul.f32 %v2875, %v2875
    %v2881 = vmul.f32 %v2876, %v2876
    %v2882 = vmul.f32 %v2877, %v2877
    %v2883 = vmul.f32 %v2878, %v2878
    %v2884 = vsel %vm166, %v2879, 0.0
    %2885 = vadd.xlane.f32.xlu0 %v2884
    %v2886 = vpop.xlane.xlu0 %2885
    %v2887 = vsel %vm166, %v2880, 0.0
    %2888 = vadd.xlane.f32.xlu0 %v2887
    %v2889 = vpop.xlane.xlu0 %2888
    %v2890 = vsel %vm166, %v2881, 0.0
    %2891 = vadd.xlane.f32.xlu0 %v2890
    %v2892 = vpop.xlane.xlu0 %2891
    %v2893 = vsel %vm166, %v2882, 0.0
    %2894 = vadd.xlane.f32.xlu0 %v2893
    %v2895 = vpop.xlane.xlu0 %2894
    %v2896 = vsel %vm1322, %v2883, 0.0
    %2897 = vadd.xlane.f32.xlu0 %v2896
    %v2898 = vpop.xlane.xlu0 %2897
    %v2899 = vmul.f32 %v2886, %v1332
    %v2900 = vmul.f32 %v2889, %v1332
    %v2901 = vmul.f32 %v2892, %v1332
    %v2902 = vmul.f32 %v2895, %v1332
    %v2903 = vmul.f32 %v2898, %v1332
    %v2904 = vadd.f32 %v2899, 1e-05
    %v2905 = vadd.f32 %v2900, 1e-05
    %v2906 = vadd.f32 %v2901, 1e-05
    %v2907 = vadd.f32 %v2902, 1e-05
    %v2908 = vadd.f32 %v2903, 1e-05
    %v2909 = vrsqrt.pop %v2904
    %v2910 = vmul.f32 %v2909, %v2904
    %v2911 = vmul.f32 %v2910, %v2909
    %v2912 = vmul.f32 0.5, %v2911
    %v2913 = vsub.f32 1.5, %v2912
    %v2914 = vmul.f32 %v2909, %v2913
    %vm2915 = vweird.f32 %v2904
    %vm2916 = vweird.f32 %v2909
    %vm2917 = vmor %vm2915, %vm2916
    %v2918 = vsel %vm2917, %v2909, %v2914
    %v2919 = vrsqrt.pop %v2905
    %v2920 = vmul.f32 %v2919, %v2905
    %v2921 = vmul.f32 %v2920, %v2919
    %v2922 = vmul.f32 0.5, %v2921
    %v2923 = vsub.f32 1.5, %v2922
    %v2924 = vmul.f32 %v2919, %v2923
    %vm2925 = vweird.f32 %v2905
    %vm2926 = vweird.f32 %v2919
    %vm2927 = vmor %vm2925, %vm2926
    %v2928 = vsel %vm2927, %v2919, %v2924
    %v2929 = vrsqrt.pop %v2906
    %v2930 = vmul.f32 %v2929, %v2906
    %v2931 = vmul.f32 %v2930, %v2929
    %v2932 = vmul.f32 0.5, %v2931
    %v2933 = vsub.f32 1.5, %v2932
    %v2934 = vmul.f32 %v2929, %v2933
    %vm2935 = vweird.f32 %v2906
    %vm2936 = vweird.f32 %v2929
    %vm2937 = vmor %vm2935, %vm2936
    %v2938 = vsel %vm2937, %v2929, %v2934
    %v2939 = vrsqrt.pop %v2907
    %v2940 = vmul.f32 %v2939, %v2907
    %v2941 = vmul.f32 %v2940, %v2939
    %v2942 = vmul.f32 0.5, %v2941
    %v2943 = vsub.f32 1.5, %v2942
    %v2944 = vmul.f32 %v2939, %v2943
    %vm2945 = vweird.f32 %v2907
    %vm2946 = vweird.f32 %v2939
    %vm2947 = vmor %vm2945, %vm2946
    %v2948 = vsel %vm2947, %v2939, %v2944
    %v2949 = vrsqrt.pop %v2908
    %v2950 = vmul.f32 %v2949, %v2908
    %v2951 = vmul.f32 %v2950, %v2949
    %v2952 = vmul.f32 0.5, %v2951
    %v2953 = vsub.f32 1.5, %v2952
    %v2954 = vmul.f32 %v2949, %v2953
    %vm2955 = vweird.f32 %v2908
    %vm2956 = vweird.f32 %v2949
    %vm2957 = vmor %vm2955, %vm2956
    %v2958 = vsel %vm2957, %v2949, %v2954
    %v2959 = vmul.f32 %v2874, %v2918
    %v2960 = vmul.f32 %v2875, %v2928
    %v2961 = vmul.f32 %v2876, %v2938
    %v2962 = vmul.f32 %v2877, %v2948
    %v2963 = vmul.f32 %v2878, %v2958
    %v2964 = vperm.slane %v2853, 0
    %v2965 = vmul.f32 %v2959, %v2964
    %v2966 = vmul.f32 %v2960, %v2964
    %v2967 = vmul.f32 %v2961, %v2964
    %v2968 = vmul.f32 %v2962, %v2964
    %v2969 = vmul.f32 %v2963, %v2964
    %v2970 = vperm.slane %v2853, 1
    %v2971 = vadd.f32 %v2965, %v2970
    %v2972 = vadd.f32 %v2966, %v2970
    %v2973 = vadd.f32 %v2967, %v2970
    %v2974 = vadd.f32 %v2968, %v2970
    %v2975 = vadd.f32 %v2969, %v2970
    %v2976 = vpack.c.bf16 %v2972, %v2971
    %v2977 = vpack.c.bf16 %v2974, %v2973
    %v2978 = vpack.c.bf16 %v2975, %v2975
    %s2979 = scalar_lea.vmem %s8, 16
    %v2980 = vld [vmem:[%s2979] sm:$0xf]
    %v2981 = vld [vmem:[%s2979 + $0x4] sm:$0xf]
    %v2982 = vld [vmem:[%s2979 + $0x8] sm:$0xf]
    %v2983 = vld [vmem:[%s2979 + $0xc] sm:$0xf]
    %s2984 = scalar_lea.vmem %s9, 1
    %v2985 = vld [vmem:[%s2984] sm:$0x1]
    %v2987 = vperm.slane %v2985, 0
    %v2993 = vunpack.c.l.b16 %v2980
    %v2994 = vunpack.c.l.b16 %v2981
    %v2995 = vunpack.c.l.b16 %v2982
    %v2996 = vunpack.c.l.b16 %v2983
    %v2997 = vpack.c.b16 %v2994, %v2993
    %v2998 = vpack.c.b16 %v2996, %v2995
    %v3002 = vsel %vm166, %v2976, 0
    %v3005 = vsel %vm166, %v2977, 0
    %v3008 = vsel %vm166, %v2978, 0
    %3010 = vmatpush.bf16.msra.mxu0 0
    %3011 = vmatpush.bf16.msra.mxu0 0
    %3012 = vmatpush.bf16.msra.mxu0 0
    %3013 = vmatpush.bf16.msra.mxu0 0
    %3014 = vmatpush.bf16.msra.mxu0 0
    %3015 = vmatpush.bf16.msra.mxu0 0
    %3016 = vmatpush.bf16.msra.mxu0 %v2998
    %3017 = vmatpush.bf16.msra.mxu0 %v2997
    %3018 = vmatmul.bf16.gmra.mxu0 %v3002
    %v3019 = vpop.f32.mrf.mxu0
    %v3020 = vadd.f32 %v2987, %v3019
    %v3021 = vpop.f32.mrf.mxu0
    %v3022 = vadd.f32 %v2987, %v3021
    %3023 = vmatmul.bf16.gmra.mxu0 %v3005
    %v3024 = vpop.f32.mrf.mxu0
    %v3025 = vadd.f32 %v2987, %v3024
    %v3026 = vpop.f32.mrf.mxu0
    %v3027 = vadd.f32 %v2987, %v3026
    %3028 = vmatmul.bf16.gmra.mxu0 %v3008
    %v3029 = vpop.f32.mrf.mxu0
    %v3030 = vadd.f32 %v2987, %v3029
    %v3031 = vpop.f32.mrf.mxu0
    %3032 = vdwg.mxu0
    %v3033 = vmax.f32 %v3020, 0.0
    %v3034 = vmax.f32 %v3022, 0.0
    %v3035 = vmax.f32 %v3025, 0.0
    %v3036 = vmax.f32 %v3027, 0.0
    %v3037 = vmax.f32 %v3030, 0.0
    %v3038 = vpack.c.bf16 %v3034, %v3033
    %v3039 = vpack.c.bf16 %v3036, %v3035
    %v3040 = vpack.c.bf16 %v3037, %v3037
    %s3041 = scalar_lea.vmem %s10, 32
    %v3042 = vld [vmem:[%s3041] sm:$0xf]
    %v3043 = vld [vmem:[%s3041 + $0x4] sm:$0xf]
    %v3044 = vld [vmem:[%s3041 + $0x8] sm:$0xf]
    %v3045 = vld [vmem:[%s3041 + $0xc] sm:$0xf]
    %v3046 = vld [vmem:[%s3041 + $0x10] sm:$0xf]
    %v3047 = vld [vmem:[%s3041 + $0x14] sm:$0xf]
    %v3048 = vld [vmem:[%s3041 + $0x18] sm:$0xf]
    %v3049 = vld [vmem:[%s3041 + $0x1c] sm:$0xf]
    %s3050 = scalar_lea.vmem %s11, 1
    %v3051 = vld [vmem:[%s3050] sm:$0x1]
    %v3053 = vperm.slane %v3051, 0
    %v3063 = vunpack.c.l.b16 %v3042
    %v3064 = vunpack.c.l.b16 %v3043
    %v3065 = vunpack.c.l.b16 %v3044
    %v3066 = vunpack.c.l.b16 %v3045
    %v3067 = vunpack.c.l.b16 %v3046
    %v3068 = vunpack.c.l.b16 %v3047
    %v3069 = vunpack.c.l.b16 %v3048
    %v3070 = vunpack.c.l.b16 %v3049
    %v3071 = vpack.c.b16 %v3064, %v3063
    %v3072 = vpack.c.b16 %v3066, %v3065
    %v3073 = vpack.c.b16 %v3068, %v3067
    %v3074 = vpack.c.b16 %v3070, %v3069
    %v3080 = vsel %vm110, %v3038, 0
    %v3083 = vsel %vm110, %v3039, 0
    %v3086 = vsel %vm110, %v3040, 0
    %3088 = vmatpush.bf16.msra.mxu0 0
    %3089 = vmatpush.bf16.msra.mxu0 0
    %3090 = vmatpush.bf16.msra.mxu0 0
    %3091 = vmatpush.bf16.msra.mxu0 0
    %3092 = vmatpush.bf16.msra.mxu0 %v3074
    %3093 = vmatpush.bf16.msra.mxu0 %v3073
    %3094 = vmatpush.bf16.msra.mxu0 %v3072
    %3095 = vmatpush.bf16.msra.mxu0 %v3071
    %3096 = vmatmul.bf16.gmra.mxu0 %v3080
    %v3097 = vpop.f32.mrf.mxu0
    %v3098 = vadd.f32 %v3053, %v3097
    %v3099 = vpop.f32.mrf.mxu0
    %v3100 = vadd.f32 %v3053, %v3099
    %3101 = vmatmul.bf16.gmra.mxu0 %v3083
    %v3102 = vpop.f32.mrf.mxu0
    %v3103 = vadd.f32 %v3053, %v3102
    %v3104 = vpop.f32.mrf.mxu0
    %v3105 = vadd.f32 %v3053, %v3104
    %3106 = vmatmul.bf16.gmra.mxu0 %v3086
    %v3107 = vpop.f32.mrf.mxu0
    %v3108 = vadd.f32 %v3053, %v3107
    %v3109 = vpop.f32.mrf.mxu0
    %3110 = vdwg.mxu0
    %v3111 = vadd.f32 %v2971, %v3098
    %v3112 = vadd.f32 %v2972, %v3100
    %v3113 = vadd.f32 %v2973, %v3103
    %v3114 = vadd.f32 %v2974, %v3105
    %v3115 = vadd.f32 %v2975, %v3108
    %s3116 = scalar_lea.vmem %s12, 2
    %v3117 = vld [vmem:[%s3116] sm:$0x3]
    %v3118 = vsel %vm166, %v3111, 0.0
    %3119 = vadd.xlane.f32.xlu0 %v3118
    %v3120 = vpop.xlane.xlu0 %3119
    %v3121 = vsel %vm166, %v3112, 0.0
    %3122 = vadd.xlane.f32.xlu0 %v3121
    %v3123 = vpop.xlane.xlu0 %3122
    %v3124 = vsel %vm166, %v3113, 0.0
    %3125 = vadd.xlane.f32.xlu0 %v3124
    %v3126 = vpop.xlane.xlu0 %3125
    %v3127 = vsel %vm166, %v3114, 0.0
    %3128 = vadd.xlane.f32.xlu0 %v3127
    %v3129 = vpop.xlane.xlu0 %3128
    %v3130 = vsel %vm1322, %v3115, 0.0
    %3131 = vadd.xlane.f32.xlu0 %v3130
    %v3132 = vpop.xlane.xlu0 %3131
    %v3133 = vmul.f32 %v3120, %v1332
    %v3134 = vmul.f32 %v3123, %v1332
    %v3135 = vmul.f32 %v3126, %v1332
    %v3136 = vmul.f32 %v3129, %v1332
    %v3137 = vmul.f32 %v3132, %v1332
    %v3138 = vsub.f32 %v3111, %v3133
    %v3139 = vsub.f32 %v3112, %v3134
    %v3140 = vsub.f32 %v3113, %v3135
    %v3141 = vsub.f32 %v3114, %v3136
    %v3142 = vsub.f32 %v3115, %v3137
    %v3143 = vmul.f32 %v3138, %v3138
    %v3144 = vmul.f32 %v3139, %v3139
    %v3145 = vmul.f32 %v3140, %v3140
    %v3146 = vmul.f32 %v3141, %v3141
    %v3147 = vmul.f32 %v3142, %v3142
    %v3148 = vsel %vm166, %v3143, 0.0
    %3149 = vadd.xlane.f32.xlu0 %v3148
    %v3150 = vpop.xlane.xlu0 %3149
    %v3151 = vsel %vm166, %v3144, 0.0
    %3152 = vadd.xlane.f32.xlu0 %v3151
    %v3153 = vpop.xlane.xlu0 %3152
    %v3154 = vsel %vm166, %v3145, 0.0
    %3155 = vadd.xlane.f32.xlu0 %v3154
    %v3156 = vpop.xlane.xlu0 %3155
    %v3157 = vsel %vm166, %v3146, 0.0
    %3158 = vadd.xlane.f32.xlu0 %v3157
    %v3159 = vpop.xlane.xlu0 %3158
    %v3160 = vsel %vm1322, %v3147, 0.0
    %3161 = vadd.xlane.f32.xlu0 %v3160
    %v3162 = vpop.xlane.xlu0 %3161
    %v3163 = vmul.f32 %v3150, %v1332
    %v3164 = vmul.f32 %v3153, %v1332
    %v3165 = vmul.f32 %v3156, %v1332
    %v3166 = vmul.f32 %v3159, %v1332
    %v3167 = vmul.f32 %v3162, %v1332
    %v3168 = vadd.f32 %v3163, 1e-05
    %v3169 = vadd.f32 %v3164, 1e-05
    %v3170 = vadd.f32 %v3165, 1e-05
    %v3171 = vadd.f32 %v3166, 1e-05
    %v3172 = vadd.f32 %v3167, 1e-05
    %v3173 = vrsqrt.pop %v3168
    %v3174 = vmul.f32 %v3173, %v3168
    %v3175 = vmul.f32 %v3174, %v3173
    %v3176 = vmul.f32 0.5, %v3175
    %v3177 = vsub.f32 1.5, %v3176
    %v3178 = vmul.f32 %v3173, %v3177
    %vm3179 = vweird.f32 %v3168
    %vm3180 = vweird.f32 %v3173
    %vm3181 = vmor %vm3179, %vm3180
    %v3182 = vsel %vm3181, %v3173, %v3178
    %v3183 = vrsqrt.pop %v3169
    %v3184 = vmul.f32 %v3183, %v3169
    %v3185 = vmul.f32 %v3184, %v3183
    %v3186 = vmul.f32 0.5, %v3185
    %v3187 = vsub.f32 1.5, %v3186
    %v3188 = vmul.f32 %v3183, %v3187
    %vm3189 = vweird.f32 %v3169
    %vm3190 = vweird.f32 %v3183
    %vm3191 = vmor %vm3189, %vm3190
    %v3192 = vsel %vm3191, %v3183, %v3188
    %v3193 = vrsqrt.pop %v3170
    %v3194 = vmul.f32 %v3193, %v3170
    %v3195 = vmul.f32 %v3194, %v3193
    %v3196 = vmul.f32 0.5, %v3195
    %v3197 = vsub.f32 1.5, %v3196
    %v3198 = vmul.f32 %v3193, %v3197
    %vm3199 = vweird.f32 %v3170
    %vm3200 = vweird.f32 %v3193
    %vm3201 = vmor %vm3199, %vm3200
    %v3202 = vsel %vm3201, %v3193, %v3198
    %v3203 = vrsqrt.pop %v3171
    %v3204 = vmul.f32 %v3203, %v3171
    %v3205 = vmul.f32 %v3204, %v3203
    %v3206 = vmul.f32 0.5, %v3205
    %v3207 = vsub.f32 1.5, %v3206
    %v3208 = vmul.f32 %v3203, %v3207
    %vm3209 = vweird.f32 %v3171
    %vm3210 = vweird.f32 %v3203
    %vm3211 = vmor %vm3209, %vm3210
    %v3212 = vsel %vm3211, %v3203, %v3208
    %v3213 = vrsqrt.pop %v3172
    %v3214 = vmul.f32 %v3213, %v3172
    %v3215 = vmul.f32 %v3214, %v3213
    %v3216 = vmul.f32 0.5, %v3215
    %v3217 = vsub.f32 1.5, %v3216
    %v3218 = vmul.f32 %v3213, %v3217
    %vm3219 = vweird.f32 %v3172
    %vm3220 = vweird.f32 %v3213
    %vm3221 = vmor %vm3219, %vm3220
    %v3222 = vsel %vm3221, %v3213, %v3218
    %v3223 = vmul.f32 %v3138, %v3182
    %v3224 = vmul.f32 %v3139, %v3192
    %v3225 = vmul.f32 %v3140, %v3202
    %v3226 = vmul.f32 %v3141, %v3212
    %v3227 = vmul.f32 %v3142, %v3222
    %v3228 = vperm.slane %v3117, 0
    %v3229 = vmul.f32 %v3223, %v3228
    %v3230 = vmul.f32 %v3224, %v3228
    %v3231 = vmul.f32 %v3225, %v3228
    %v3232 = vmul.f32 %v3226, %v3228
    %v3233 = vmul.f32 %v3227, %v3228
    %v3234 = vperm.slane %v3117, 1
    %v3235 = vadd.f32 %v3229, %v3234
    %v3236 = vadd.f32 %v3230, %v3234
    %v3237 = vadd.f32 %v3231, %v3234
    %v3238 = vadd.f32 %v3232, %v3234
    %v3239 = vadd.f32 %v3233, %v3234
    %v3240 = vsel %vm166, %v3235, 0.0
    %v3241 = vsel %vm166, %v3236, 0.0
    %v3242 = vadd.f32 %v3240, %v3241
    %vm3243 = vcmask 253952
    %v3244 = vsel %vm3243, %v3237, 0.0
    %v3245 = vadd.f32 %v3242, %v3244
    %v3246 = vrot.slane %v3245, 4
    %v3247 = vadd.f32 %v3245, %v3246
    %v3248 = vrot.slane %v3247, 2
    %v3249 = vadd.f32 %v3247, %v3248
    %v3250 = vrot.slane %v3249, 1
    %v3251 = vadd.f32 %v3249, %v3250
    %v3252 = vrcp.pop 17.0
    %v3253 = vmul.f32 17.0, %v3252
    %v3254 = vsub.f32 1.0, %v3253
    %v3255 = vmul.f32 %v3252, %v3254
    %v3256 = vadd.f32 %v3252, %v3255
    %vm3257 = vweird.f32 %v3252
    %v3258 = vsel %vm3257, %v3252, %v3256
    %v3259 = vmul.f32 %v3251, %v3258
    %v3263 = vrot.slane %v3237, 1
    %v3264 = vrot.slane %v3238, 1
    %v3265 = vsel %vm724, %v3263, %v3264
    %v3266 = vrot.slane %v3239, 1
    %v3267 = vsel %vm724, %v3264, %v3266
    %v3271 = vsel %vm166, %v3265, 0.0
    %v3272 = vsel %vm166, %v3267, 0.0
    %v3273 = vadd.f32 %v3271, %v3272
    %v3274 = vsel %vm3243, %v3266, 0.0
    %v3275 = vadd.f32 %v3273, %v3274
    %v3276 = vrot.slane %v3275, 4
    %v3277 = vadd.f32 %v3275, %v3276
    %v3278 = vrot.slane %v3277, 2
    %v3279 = vadd.f32 %v3277, %v3278
    %v3280 = vrot.slane %v3279, 1
    %v3281 = vadd.f32 %v3279, %v3280
    %v3282 = vmul.f32 %v3281, %v3258
    %v3283 = vsel %vm338, %v3259, %v3282
    %v3284 = vld [vmem:[%s13] sm:$0x3]
    %v3285 = vsel %vm1322, %v3283, 0.0
    %3286 = vadd.xlane.f32.xlu0 %v3285
    %v3287 = vpop.xlane.xlu0 %3286
    %v3288 = vmul.f32 %v3287, %v1332
    %v3289 = vsub.f32 %v3283, %v3288
    %v3290 = vmul.f32 %v3289, %v3289
    %v3291 = vsel %vm1322, %v3290, 0.0
    %3292 = vadd.xlane.f32.xlu0 %v3291
    %v3293 = vpop.xlane.xlu0 %3292
    %v3294 = vmul.f32 %v3293, %v1332
    %v3295 = vadd.f32 %v3294, 1e-05
    %v3296 = vrsqrt.pop %v3295
    %v3297 = vmul.f32 %v3296, %v3295
    %v3298 = vmul.f32 %v3297, %v3296
    %v3299 = vmul.f32 0.5, %v3298
    %v3300 = vsub.f32 1.5, %v3299
    %v3301 = vmul.f32 %v3296, %v3300
    %vm3302 = vweird.f32 %v3295
    %vm3303 = vweird.f32 %v3296
    %vm3304 = vmor %vm3302, %vm3303
    %v3305 = vsel %vm3304, %v3296, %v3301
    %v3306 = vmul.f32 %v3289, %v3305
    %v3307 = vperm.slane %v3284, 0
    %v3308 = vmul.f32 %v3306, %v3307
    %v3309 = vperm.slane %v3284, 1
    %v3310 = vadd.f32 %v3308, %v3309
    %v3311 = vpack.c.bf16 %v3310, %v3310
    %v3312 = vld [vmem:[%s14] sm:$0xf]
    %v3313 = vld [vmem:[%s14 + $0x4] sm:$0xf]
    %v3314 = vld [vmem:[%s14 + $0x8] sm:$0xf]
    %v3315 = vld [vmem:[%s14 + $0xc] sm:$0xf]
    %v3316 = vld [vmem:[%s15] sm:$0x1]
    %v3318 = vperm.slane %v3316, 0
    %v3324 = vunpack.c.l.b16 %v3312
    %v3325 = vunpack.c.l.b16 %v3313
    %v3326 = vunpack.c.l.b16 %v3314
    %v3327 = vunpack.c.l.b16 %v3315
    %v3328 = vpack.c.b16 %v3325, %v3324
    %v3329 = vpack.c.b16 %v3327, %v3326
    %v3333 = vsel %vm166, %v3311, 0
    %3335 = vmatpush.bf16.msra.mxu0 0
    %3336 = vmatpush.bf16.msra.mxu0 0
    %3337 = vmatpush.bf16.msra.mxu0 0
    %3338 = vmatpush.bf16.msra.mxu0 0
    %3339 = vmatpush.bf16.msra.mxu0 0
    %3340 = vmatpush.bf16.msra.mxu0 0
    %3341 = vmatpush.bf16.msra.mxu0 %v3329
    %3342 = vmatpush.bf16.msra.mxu0 %v3328
    %3343 = vmatmul.bf16.gmra.mxu0 %v3333
    %v3344 = vpop.f32.mrf.mxu0
    %v3345 = vadd.f32 %v3318, %v3344
    %v3346 = vpop.f32.mrf.mxu0
    %3347 = vdwg.mxu0
    %vm3348 = vcmask 74752
    %3349 = vst.msk [vmem:[#allocation3] sm:$0x3] %vm3348, %v3345
    // Predicated region
    $region66: #{vit_forward.1} parent=1 // pred_check
      _
    $region67: #{vit_forward.1} parent=1 // pred_check_branch
      %3351 = sbr.rel (0) target = $region69
    $region68: #{vit_forward.1} parent=1 // pred_region
      %3353 = vsyncadd [#allocation4], 0
      %s3355 = sshll.u32 [#allocation3], 4
      %s3356 = int_to_ptr.vmem [resolvable:$true] %s3355
      %s3357 = sshll.u32 %s16, 4
      %s3358 = int_to_ptr.hbm [resolvable:$true] %s3357
      %3360 = dma.vmem_to_hbm [thread:$0]  %s3356, 32, %s3358, [#allocation4]
    $region69: #{vit_forward.1} parent=1 // pred_fallthru
      _
    // Predicated region
    $region70: #{vit_forward.1} parent=1 // pred_check
      _
    $region71: #{vit_forward.1} parent=1 // pred_check_branch
      %3362 = sbr.rel (0) target = $region73
    $region72: #{vit_forward.1} parent=1 // pred_region
      %3364 = dma.done [#allocation4], 32
    $region73: #{vit_forward.1} parent=1 // pred_fallthru
      _
    %3365 = vsyncpa [#allocation4], 1

</llo_original>
